<compile_context>
chip_gen: v6e
topology: v6e:2x2x1
jax: 0.10.0
libtpu: 0.0.40
codegen_flags: <defaults>
</compile_context>

<pallas_src>
import jax
import jax.numpy as jnp
import numpy as np
from jax.experimental import pallas as pl
from jax.experimental.pallas import tpu as pltpu

EPS = 1e-5  # nn.InstanceNorm2d default


def down_kernel(x_ref, w1_ref, w2_ref, m_ref, o_ref):
    """x_ref: (1, cin, S); w*_ref: (9, c_out, c_in); m_ref: (9, S, S) 0/1."""

    def conv3x3_in_relu(x, w_ref):
        # x: (c_in, S) f32, spatial flattened on the lane dim.
        c_out = w_ref.shape[1]
        s = x.shape[-1]
        acc = jnp.zeros((c_out, s), jnp.float32)
        for t in range(9):
            # Tap = shift + zero-pad, done as a matmul with a 0/1 matrix (MXU).
            x_tap = jnp.dot(x, m_ref[t], preferred_element_type=jnp.float32)
            # Channel contraction (c_out, c_in) @ (c_in, S) on the MXU.
            acc = acc + jnp.dot(w_ref[t], x_tap,
                                preferred_element_type=jnp.float32)
        # InstanceNorm2d (affine=False, biased var, centered two-pass) + ReLU.
        mean = jnp.mean(acc, axis=1, keepdims=True)
        cen = acc - mean
        var = jnp.mean(cen * cen, axis=1, keepdims=True)
        y = cen * jax.lax.rsqrt(var + EPS)
        return jnp.maximum(y, 0.0)

    x = x_ref[0]                       # (cin, S) f32
    y1 = conv3x3_in_relu(x, w1_ref)    # (cmid, S)
    y2 = conv3x3_in_relu(y1, w2_ref)   # (cout, S)
    o_ref[0] = y2.astype(o_ref.dtype)


def _shift_matrices(hp, wp):
    """(9, S, S) 0/1 matrices: (x @ M[t])[q] = x[tap t source of q], 0 if OOB."""
    s = hp * wp
    q = np.arange(s)
    qr, qc = q // wp, q % wp
    mats = np.zeros((9, s, s), np.float32)
    for kh in range(3):
        for kw in range(3):
            pr, pc = qr + kh - 1, qc + kw - 1
            ok = (pr >= 0) & (pr < hp) & (pc >= 0) & (pc < wp)
            mats[kh * 3 + kw, (pr * wp + pc)[ok], q[ok]] = 1.0
    return jnp.asarray(mats)


def down_forward(x_nchw, w1_hwio, w2_hwio):
    """x: (N, Cin, H, W); w1: (3,3,Cin,Cmid) HWIO; w2: (3,3,Cmid,Cout) HWIO."""
    n, cin, h, w = x_nchw.shape
    hp, wp = h // 2, w // 2
    s = hp * wp
    cmid, cout = w1_hwio.shape[-1], w2_hwio.shape[-1]

    x_f32 = x_nchw.astype(jnp.float32)
    # MaxPool2d(2) + spatial flatten in the wrapper (cheap XLA fusion; the
    # kernel then only DMAs the 4x-smaller pooled, lane-flattened tensor).
    pooled = (x_f32.reshape(n, cin, hp, 2, wp, 2).max(axis=(3, 5))
              .reshape(n, cin, s))

    # Stage weights tap-major, pre-transposed to (9, c_out, c_in) so each tap
    # is an MXU-ready LHS (no in-kernel transpose). HWIO row-major reshape
    # gives tap index t = kh*3 + kw, matching _shift_matrices.
    w1_t = jnp.transpose(
        w1_hwio.astype(jnp.float32).reshape(9, cin, cmid), (0, 2, 1))
    w2_t = jnp.transpose(
        w2_hwio.astype(jnp.float32).reshape(9, cmid, cout), (0, 2, 1))
    shift = _shift_matrices(hp, wp)            # shared by both convs

    out = pl.pallas_call(
        down_kernel,
        out_shape=jax.ShapeDtypeStruct((n, cout, s), jnp.float32),
        grid=(n,),
        in_specs=[
            pl.BlockSpec((1, cin, s), lambda b: (b, 0, 0)),
            pl.BlockSpec((9, cmid, cin), lambda b: (0, 0, 0)),
            pl.BlockSpec((9, cout, cmid), lambda b: (0, 0, 0)),
            pl.BlockSpec((9, s, s), lambda b: (0, 0, 0)),
        ],
        out_specs=pl.BlockSpec((1, cout, s), lambda b: (b, 0, 0)),
        compiler_params=pltpu.CompilerParams(
            dimension_semantics=("parallel",)),
    )(pooled, w1_t, w2_t, shift)

    return out.reshape(n, cout, hp, wp)        # already NCHW


def ref_down(x_nchw, w1, w2):
    """Pure-JAX reference matching the PyTorch module semantics."""
    n, c, h, w = x_nchw.shape
    xp = x_nchw.reshape(n, c, h // 2, 2, w // 2, 2).max(axis=(3, 5))

    def conv(x, wt):  # wt: (3,3,Cin,Cout) HWIO
        w_oihw = jnp.transpose(wt, (3, 2, 0, 1))
        return jax.lax.conv_general_dilated(
            x, w_oihw, (1, 1), ((1, 1), (1, 1)),
            dimension_numbers=("NCHW", "OIHW", "NCHW"),
            precision=jax.lax.Precision.HIGHEST)

    def inorm(y):
        m = y.mean(axis=(2, 3), keepdims=True)
        v = ((y - m) ** 2).mean(axis=(2, 3), keepdims=True)
        return (y - m) * jax.lax.rsqrt(v + EPS)

    y = jax.nn.relu(inorm(conv(xp, w1)))
    y = jax.nn.relu(inorm(conv(y, w2)))
    return y


if __name__ == "__main__":
    key = jax.random.PRNGKey(0)
    kx, k1, k2 = jax.random.split(key, 3)

    N, CIN, H, W = 2, 4, 16, 16
    COUT = 8  # Down(in_ch=4, out_ch=8): mid_ch == out_ch == 8

    x = jax.random.normal(kx, (N, CIN, H, W), jnp.float32)
    w1 = jax.random.normal(k1, (3, 3, CIN, COUT), jnp.float32) * 0.3
    w2 = jax.random.normal(k2, (3, 3, COUT, COUT), jnp.float32) * 0.3

    fwd = jax.jit(down_forward)
    out = jax.block_until_ready(fwd(x, w1, w2))
    ref = jax.block_until_ready(ref_down(x, w1, w2))

    assert out.shape == ref.shape == (N, COUT, H // 2, W // 2)
    np.testing.assert_allclose(np.asarray(out), np.asarray(ref),
                               rtol=2e-3, atol=2e-3)

    print("KERNEL_OK")
</pallas_src>

<mosaic_0001>
module attributes {stable_mosaic.version = 11 : i64} {
  func.func @down_kernel(%arg0: i32, %arg1: memref<1x4x64xf32, #tpu.memory_space<vmem>>, %arg2: memref<9x8x4xf32, #tpu.memory_space<vmem>>, %arg3: memref<9x8x8xf32, #tpu.memory_space<vmem>>, %arg4: memref<9x64x64xf32, #tpu.memory_space<vmem>>, %arg5: memref<1x8x64xf32, #tpu.memory_space<vmem>>) attributes {dimension_semantics = [#tpu.dimension_semantics<parallel>], iteration_bounds = array<i64: 2>, scalar_prefetch = 0 : i64, scratch_operands = 0 : i64, tpu.core_type = #tpu.core_type<tc>, window_params = [{transform_indices = @transform_0, window_bounds = array<i64: 1, 4, 64>}, {pipeline_mode = #tpu.pipeline_mode<synchronous>, transform_indices = @transform_1, window_bounds = array<i64: 9, 8, 4>}, {pipeline_mode = #tpu.pipeline_mode<synchronous>, transform_indices = @transform_2, window_bounds = array<i64: 9, 8, 8>}, {pipeline_mode = #tpu.pipeline_mode<synchronous>, transform_indices = @transform_3, window_bounds = array<i64: 9, 64, 64>}, {transform_indices = @transform_4, window_bounds = array<i64: 1, 8, 64>}]} {
    %c0 = arith.constant 0 : index
    %c0_0 = arith.constant 0 : index
    %c0_1 = arith.constant 0 : index
    %0 = vector.load %arg1[%c0, %c0_0, %c0_1] : memref<1x4x64xf32, #tpu.memory_space<vmem>>, vector<1x4x64xf32>
    %1 = vector.shape_cast %0 : vector<1x4x64xf32> to vector<4x64xf32>
    %cst = arith.constant 0.000000e+00 : f32
    %2 = vector.broadcast %cst : f32 to vector<8x64xf32>
    %c0_2 = arith.constant 0 : index
    %c0_3 = arith.constant 0 : index
    %c0_4 = arith.constant 0 : index
    %3 = vector.load %arg4[%c0_2, %c0_3, %c0_4] : memref<9x64x64xf32, #tpu.memory_space<vmem>>, vector<1x64x64xf32>
    %4 = vector.shape_cast %3 : vector<1x64x64xf32> to vector<64x64xf32>
    %cst_5 = arith.constant dense<0.000000e+00> : vector<4x64xf32>
    %5 = tpu.matmul %1, %4, %cst_5 {dimension_numbers = #tpu.dot_dimension_numbers<[1], [0], [0], [1], [0, 0, 1, 1], [], []>} : vector<4x64xf32>, vector<64x64xf32>, vector<4x64xf32> -> vector<4x64xf32>
    %c0_6 = arith.constant 0 : index
    %c0_7 = arith.constant 0 : index
    %c0_8 = arith.constant 0 : index
    %6 = vector.load %arg2[%c0_6, %c0_7, %c0_8] : memref<9x8x4xf32, #tpu.memory_space<vmem>>, vector<1x8x4xf32>
    %7 = vector.shape_cast %6 : vector<1x8x4xf32> to vector<8x4xf32>
    %cst_9 = arith.constant dense<0.000000e+00> : vector<8x64xf32>
    %8 = tpu.matmul %7, %5, %cst_9 {dimension_numbers = #tpu.dot_dimension_numbers<[1], [0], [0], [1], [0, 0, 1, 1], [], []>} : vector<8x4xf32>, vector<4x64xf32>, vector<8x64xf32> -> vector<8x64xf32>
    %9 = arith.addf %2, %8 : vector<8x64xf32>
    %c1 = arith.constant 1 : index
    %c0_10 = arith.constant 0 : index
    %c0_11 = arith.constant 0 : index
    %10 = vector.load %arg4[%c1, %c0_10, %c0_11] : memref<9x64x64xf32, #tpu.memory_space<vmem>>, vector<1x64x64xf32>
    %11 = vector.shape_cast %10 : vector<1x64x64xf32> to vector<64x64xf32>
    %cst_12 = arith.constant dense<0.000000e+00> : vector<4x64xf32>
    %12 = tpu.matmul %1, %11, %cst_12 {dimension_numbers = #tpu.dot_dimension_numbers<[1], [0], [0], [1], [0, 0, 1, 1], [], []>} : vector<4x64xf32>, vector<64x64xf32>, vector<4x64xf32> -> vector<4x64xf32>
    %c1_13 = arith.constant 1 : index
    %c0_14 = arith.constant 0 : index
    %c0_15 = arith.constant 0 : index
    %13 = vector.load %arg2[%c1_13, %c0_14, %c0_15] : memref<9x8x4xf32, #tpu.memory_space<vmem>>, vector<1x8x4xf32>
    %14 = vector.shape_cast %13 : vector<1x8x4xf32> to vector<8x4xf32>
    %cst_16 = arith.constant dense<0.000000e+00> : vector<8x64xf32>
    %15 = tpu.matmul %14, %12, %cst_16 {dimension_numbers = #tpu.dot_dimension_numbers<[1], [0], [0], [1], [0, 0, 1, 1], [], []>} : vector<8x4xf32>, vector<4x64xf32>, vector<8x64xf32> -> vector<8x64xf32>
    %16 = arith.addf %9, %15 : vector<8x64xf32>
    %c2 = arith.constant 2 : index
    %c0_17 = arith.constant 0 : index
    %c0_18 = arith.constant 0 : index
    %17 = vector.load %arg4[%c2, %c0_17, %c0_18] : memref<9x64x64xf32, #tpu.memory_space<vmem>>, vector<1x64x64xf32>
    %18 = vector.shape_cast %17 : vector<1x64x64xf32> to vector<64x64xf32>
    %cst_19 = arith.constant dense<0.000000e+00> : vector<4x64xf32>
    %19 = tpu.matmul %1, %18, %cst_19 {dimension_numbers = #tpu.dot_dimension_numbers<[1], [0], [0], [1], [0, 0, 1, 1], [], []>} : vector<4x64xf32>, vector<64x64xf32>, vector<4x64xf32> -> vector<4x64xf32>
    %c2_20 = arith.constant 2 : index
    %c0_21 = arith.constant 0 : index
    %c0_22 = arith.constant 0 : index
    %20 = vector.load %arg2[%c2_20, %c0_21, %c0_22] : memref<9x8x4xf32, #tpu.memory_space<vmem>>, vector<1x8x4xf32>
    %21 = vector.shape_cast %20 : vector<1x8x4xf32> to vector<8x4xf32>
    %cst_23 = arith.constant dense<0.000000e+00> : vector<8x64xf32>
    %22 = tpu.matmul %21, %19, %cst_23 {dimension_numbers = #tpu.dot_dimension_numbers<[1], [0], [0], [1], [0, 0, 1, 1], [], []>} : vector<8x4xf32>, vector<4x64xf32>, vector<8x64xf32> -> vector<8x64xf32>
    %23 = arith.addf %16, %22 : vector<8x64xf32>
    %c3 = arith.constant 3 : index
    %c0_24 = arith.constant 0 : index
    %c0_25 = arith.constant 0 : index
    %24 = vector.load %arg4[%c3, %c0_24, %c0_25] : memref<9x64x64xf32, #tpu.memory_space<vmem>>, vector<1x64x64xf32>
    %25 = vector.shape_cast %24 : vector<1x64x64xf32> to vector<64x64xf32>
    %cst_26 = arith.constant dense<0.000000e+00> : vector<4x64xf32>
    %26 = tpu.matmul %1, %25, %cst_26 {dimension_numbers = #tpu.dot_dimension_numbers<[1], [0], [0], [1], [0, 0, 1, 1], [], []>} : vector<4x64xf32>, vector<64x64xf32>, vector<4x64xf32> -> vector<4x64xf32>
    %c3_27 = arith.constant 3 : index
    %c0_28 = arith.constant 0 : index
    %c0_29 = arith.constant 0 : index
    %27 = vector.load %arg2[%c3_27, %c0_28, %c0_29] : memref<9x8x4xf32, #tpu.memory_space<vmem>>, vector<1x8x4xf32>
    %28 = vector.shape_cast %27 : vector<1x8x4xf32> to vector<8x4xf32>
    %cst_30 = arith.constant dense<0.000000e+00> : vector<8x64xf32>
    %29 = tpu.matmul %28, %26, %cst_30 {dimension_numbers = #tpu.dot_dimension_numbers<[1], [0], [0], [1], [0, 0, 1, 1], [], []>} : vector<8x4xf32>, vector<4x64xf32>, vector<8x64xf32> -> vector<8x64xf32>
    %30 = arith.addf %23, %29 : vector<8x64xf32>
    %c4 = arith.constant 4 : index
    %c0_31 = arith.constant 0 : index
    %c0_32 = arith.constant 0 : index
    %31 = vector.load %arg4[%c4, %c0_31, %c0_32] : memref<9x64x64xf32, #tpu.memory_space<vmem>>, vector<1x64x64xf32>
    %32 = vector.shape_cast %31 : vector<1x64x64xf32> to vector<64x64xf32>
    %cst_33 = arith.constant dense<0.000000e+00> : vector<4x64xf32>
    %33 = tpu.matmul %1, %32, %cst_33 {dimension_numbers = #tpu.dot_dimension_numbers<[1], [0], [0], [1], [0, 0, 1, 1], [], []>} : vector<4x64xf32>, vector<64x64xf32>, vector<4x64xf32> -> vector<4x64xf32>
    %c4_34 = arith.constant 4 : index
    %c0_35 = arith.constant 0 : index
    %c0_36 = arith.constant 0 : index
    %34 = vector.load %arg2[%c4_34, %c0_35, %c0_36] : memref<9x8x4xf32, #tpu.memory_space<vmem>>, vector<1x8x4xf32>
    %35 = vector.shape_cast %34 : vector<1x8x4xf32> to vector<8x4xf32>
    %cst_37 = arith.constant dense<0.000000e+00> : vector<8x64xf32>
    %36 = tpu.matmul %35, %33, %cst_37 {dimension_numbers = #tpu.dot_dimension_numbers<[1], [0], [0], [1], [0, 0, 1, 1], [], []>} : vector<8x4xf32>, vector<4x64xf32>, vector<8x64xf32> -> vector<8x64xf32>
    %37 = arith.addf %30, %36 : vector<8x64xf32>
    %c5 = arith.constant 5 : index
    %c0_38 = arith.constant 0 : index
    %c0_39 = arith.constant 0 : index
    %38 = vector.load %arg4[%c5, %c0_38, %c0_39] : memref<9x64x64xf32, #tpu.memory_space<vmem>>, vector<1x64x64xf32>
    %39 = vector.shape_cast %38 : vector<1x64x64xf32> to vector<64x64xf32>
    %cst_40 = arith.constant dense<0.000000e+00> : vector<4x64xf32>
    %40 = tpu.matmul %1, %39, %cst_40 {dimension_numbers = #tpu.dot_dimension_numbers<[1], [0], [0], [1], [0, 0, 1, 1], [], []>} : vector<4x64xf32>, vector<64x64xf32>, vector<4x64xf32> -> vector<4x64xf32>
    %c5_41 = arith.constant 5 : index
    %c0_42 = arith.constant 0 : index
    %c0_43 = arith.constant 0 : index
    %41 = vector.load %arg2[%c5_41, %c0_42, %c0_43] : memref<9x8x4xf32, #tpu.memory_space<vmem>>, vector<1x8x4xf32>
    %42 = vector.shape_cast %41 : vector<1x8x4xf32> to vector<8x4xf32>
    %cst_44 = arith.constant dense<0.000000e+00> : vector<8x64xf32>
    %43 = tpu.matmul %42, %40, %cst_44 {dimension_numbers = #tpu.dot_dimension_numbers<[1], [0], [0], [1], [0, 0, 1, 1], [], []>} : vector<8x4xf32>, vector<4x64xf32>, vector<8x64xf32> -> vector<8x64xf32>
    %44 = arith.addf %37, %43 : vector<8x64xf32>
    %c6 = arith.constant 6 : index
    %c0_45 = arith.constant 0 : index
    %c0_46 = arith.constant 0 : index
    %45 = vector.load %arg4[%c6, %c0_45, %c0_46] : memref<9x64x64xf32, #tpu.memory_space<vmem>>, vector<1x64x64xf32>
    %46 = vector.shape_cast %45 : vector<1x64x64xf32> to vector<64x64xf32>
    %cst_47 = arith.constant dense<0.000000e+00> : vector<4x64xf32>
    %47 = tpu.matmul %1, %46, %cst_47 {dimension_numbers = #tpu.dot_dimension_numbers<[1], [0], [0], [1], [0, 0, 1, 1], [], []>} : vector<4x64xf32>, vector<64x64xf32>, vector<4x64xf32> -> vector<4x64xf32>
    %c6_48 = arith.constant 6 : index
    %c0_49 = arith.constant 0 : index
    %c0_50 = arith.constant 0 : index
    %48 = vector.load %arg2[%c6_48, %c0_49, %c0_50] : memref<9x8x4xf32, #tpu.memory_space<vmem>>, vector<1x8x4xf32>
    %49 = vector.shape_cast %48 : vector<1x8x4xf32> to vector<8x4xf32>
    %cst_51 = arith.constant dense<0.000000e+00> : vector<8x64xf32>
    %50 = tpu.matmul %49, %47, %cst_51 {dimension_numbers = #tpu.dot_dimension_numbers<[1], [0], [0], [1], [0, 0, 1, 1], [], []>} : vector<8x4xf32>, vector<4x64xf32>, vector<8x64xf32> -> vector<8x64xf32>
    %51 = arith.addf %44, %50 : vector<8x64xf32>
    %c7 = arith.constant 7 : index
    %c0_52 = arith.constant 0 : index
    %c0_53 = arith.constant 0 : index
    %52 = vector.load %arg4[%c7, %c0_52, %c0_53] : memref<9x64x64xf32, #tpu.memory_space<vmem>>, vector<1x64x64xf32>
    %53 = vector.shape_cast %52 : vector<1x64x64xf32> to vector<64x64xf32>
    %cst_54 = arith.constant dense<0.000000e+00> : vector<4x64xf32>
    %54 = tpu.matmul %1, %53, %cst_54 {dimension_numbers = #tpu.dot_dimension_numbers<[1], [0], [0], [1], [0, 0, 1, 1], [], []>} : vector<4x64xf32>, vector<64x64xf32>, vector<4x64xf32> -> vector<4x64xf32>
    %c7_55 = arith.constant 7 : index
    %c0_56 = arith.constant 0 : index
    %c0_57 = arith.constant 0 : index
    %55 = vector.load %arg2[%c7_55, %c0_56, %c0_57] : memref<9x8x4xf32, #tpu.memory_space<vmem>>, vector<1x8x4xf32>
    %56 = vector.shape_cast %55 : vector<1x8x4xf32> to vector<8x4xf32>
    %cst_58 = arith.constant dense<0.000000e+00> : vector<8x64xf32>
    %57 = tpu.matmul %56, %54, %cst_58 {dimension_numbers = #tpu.dot_dimension_numbers<[1], [0], [0], [1], [0, 0, 1, 1], [], []>} : vector<8x4xf32>, vector<4x64xf32>, vector<8x64xf32> -> vector<8x64xf32>
    %58 = arith.addf %51, %57 : vector<8x64xf32>
    %c8 = arith.constant 8 : index
    %c0_59 = arith.constant 0 : index
    %c0_60 = arith.constant 0 : index
    %59 = vector.load %arg4[%c8, %c0_59, %c0_60] : memref<9x64x64xf32, #tpu.memory_space<vmem>>, vector<1x64x64xf32>
    %60 = vector.shape_cast %59 : vector<1x64x64xf32> to vector<64x64xf32>
    %cst_61 = arith.constant dense<0.000000e+00> : vector<4x64xf32>
    %61 = tpu.matmul %1, %60, %cst_61 {dimension_numbers = #tpu.dot_dimension_numbers<[1], [0], [0], [1], [0, 0, 1, 1], [], []>} : vector<4x64xf32>, vector<64x64xf32>, vector<4x64xf32> -> vector<4x64xf32>
    %c8_62 = arith.constant 8 : index
    %c0_63 = arith.constant 0 : index
    %c0_64 = arith.constant 0 : index
    %62 = vector.load %arg2[%c8_62, %c0_63, %c0_64] : memref<9x8x4xf32, #tpu.memory_space<vmem>>, vector<1x8x4xf32>
    %63 = vector.shape_cast %62 : vector<1x8x4xf32> to vector<8x4xf32>
    %cst_65 = arith.constant dense<0.000000e+00> : vector<8x64xf32>
    %64 = tpu.matmul %63, %61, %cst_65 {dimension_numbers = #tpu.dot_dimension_numbers<[1], [0], [0], [1], [0, 0, 1, 1], [], []>} : vector<8x4xf32>, vector<4x64xf32>, vector<8x64xf32> -> vector<8x64xf32>
    %65 = arith.addf %58, %64 : vector<8x64xf32>
    %cst_66 = arith.constant dense<0.000000e+00> : vector<8xf32>
    %66 = vector.multi_reduction <add>, %65, %cst_66 [1] : vector<8x64xf32> to vector<8xf32>
    %67 = vector.shape_cast %66 : vector<8xf32> to vector<8x1xf32>
    %cst_67 = arith.constant 6.400000e+01 : f32
    %68 = vector.broadcast %cst_67 : f32 to vector<8x1xf32>
    %69 = arith.divf %67, %68 : vector<8x1xf32>
    %70 = vector.broadcast %69 : vector<8x1xf32> to vector<8x64xf32>
    %71 = arith.subf %65, %70 : vector<8x64xf32>
    %72 = arith.mulf %71, %71 : vector<8x64xf32>
    %cst_68 = arith.constant dense<0.000000e+00> : vector<8xf32>
    %73 = vector.multi_reduction <add>, %72, %cst_68 [1] : vector<8x64xf32> to vector<8xf32>
    %74 = vector.shape_cast %73 : vector<8xf32> to vector<8x1xf32>
    %cst_69 = arith.constant 6.400000e+01 : f32
    %75 = vector.broadcast %cst_69 : f32 to vector<8x1xf32>
    %76 = arith.divf %74, %75 : vector<8x1xf32>
    %cst_70 = arith.constant 9.99999974E-6 : f32
    %77 = vector.broadcast %cst_70 : f32 to vector<8x1xf32>
    %78 = arith.addf %76, %77 : vector<8x1xf32>
    %79 = math.rsqrt %78 : vector<8x1xf32>
    %80 = vector.broadcast %79 : vector<8x1xf32> to vector<8x64xf32>
    %81 = arith.mulf %71, %80 : vector<8x64xf32>
    %cst_71 = arith.constant 0.000000e+00 : f32
    %82 = vector.broadcast %cst_71 : f32 to vector<8x64xf32>
    %83 = arith.maximumf %81, %82 : vector<8x64xf32>
    %cst_72 = arith.constant 0.000000e+00 : f32
    %84 = vector.broadcast %cst_72 : f32 to vector<8x64xf32>
    %c0_73 = arith.constant 0 : index
    %c0_74 = arith.constant 0 : index
    %c0_75 = arith.constant 0 : index
    %85 = vector.load %arg4[%c0_73, %c0_74, %c0_75] : memref<9x64x64xf32, #tpu.memory_space<vmem>>, vector<1x64x64xf32>
    %86 = vector.shape_cast %85 : vector<1x64x64xf32> to vector<64x64xf32>
    %cst_76 = arith.constant dense<0.000000e+00> : vector<8x64xf32>
    %87 = tpu.matmul %83, %86, %cst_76 {dimension_numbers = #tpu.dot_dimension_numbers<[1], [0], [0], [1], [0, 0, 1, 1], [], []>} : vector<8x64xf32>, vector<64x64xf32>, vector<8x64xf32> -> vector<8x64xf32>
    %c0_77 = arith.constant 0 : index
    %c0_78 = arith.constant 0 : index
    %c0_79 = arith.constant 0 : index
    %88 = vector.load %arg3[%c0_77, %c0_78, %c0_79] : memref<9x8x8xf32, #tpu.memory_space<vmem>>, vector<1x8x8xf32>
    %89 = vector.shape_cast %88 : vector<1x8x8xf32> to vector<8x8xf32>
    %cst_80 = arith.constant dense<0.000000e+00> : vector<8x64xf32>
    %90 = tpu.matmul %89, %87, %cst_80 {dimension_numbers = #tpu.dot_dimension_numbers<[1], [0], [0], [1], [0, 0, 1, 1], [], []>} : vector<8x8xf32>, vector<8x64xf32>, vector<8x64xf32> -> vector<8x64xf32>
    %91 = arith.addf %84, %90 : vector<8x64xf32>
    %c1_81 = arith.constant 1 : index
    %c0_82 = arith.constant 0 : index
    %c0_83 = arith.constant 0 : index
    %92 = vector.load %arg4[%c1_81, %c0_82, %c0_83] : memref<9x64x64xf32, #tpu.memory_space<vmem>>, vector<1x64x64xf32>
    %93 = vector.shape_cast %92 : vector<1x64x64xf32> to vector<64x64xf32>
    %cst_84 = arith.constant dense<0.000000e+00> : vector<8x64xf32>
    %94 = tpu.matmul %83, %93, %cst_84 {dimension_numbers = #tpu.dot_dimension_numbers<[1], [0], [0], [1], [0, 0, 1, 1], [], []>} : vector<8x64xf32>, vector<64x64xf32>, vector<8x64xf32> -> vector<8x64xf32>
    %c1_85 = arith.constant 1 : index
    %c0_86 = arith.constant 0 : index
    %c0_87 = arith.constant 0 : index
    %95 = vector.load %arg3[%c1_85, %c0_86, %c0_87] : memref<9x8x8xf32, #tpu.memory_space<vmem>>, vector<1x8x8xf32>
    %96 = vector.shape_cast %95 : vector<1x8x8xf32> to vector<8x8xf32>
    %cst_88 = arith.constant dense<0.000000e+00> : vector<8x64xf32>
    %97 = tpu.matmul %96, %94, %cst_88 {dimension_numbers = #tpu.dot_dimension_numbers<[1], [0], [0], [1], [0, 0, 1, 1], [], []>} : vector<8x8xf32>, vector<8x64xf32>, vector<8x64xf32> -> vector<8x64xf32>
    %98 = arith.addf %91, %97 : vector<8x64xf32>
    %c2_89 = arith.constant 2 : index
    %c0_90 = arith.constant 0 : index
    %c0_91 = arith.constant 0 : index
    %99 = vector.load %arg4[%c2_89, %c0_90, %c0_91] : memref<9x64x64xf32, #tpu.memory_space<vmem>>, vector<1x64x64xf32>
    %100 = vector.shape_cast %99 : vector<1x64x64xf32> to vector<64x64xf32>
    %cst_92 = arith.constant dense<0.000000e+00> : vector<8x64xf32>
    %101 = tpu.matmul %83, %100, %cst_92 {dimension_numbers = #tpu.dot_dimension_numbers<[1], [0], [0], [1], [0, 0, 1, 1], [], []>} : vector<8x64xf32>, vector<64x64xf32>, vector<8x64xf32> -> vector<8x64xf32>
    %c2_93 = arith.constant 2 : index
    %c0_94 = arith.constant 0 : index
    %c0_95 = arith.constant 0 : index
    %102 = vector.load %arg3[%c2_93, %c0_94, %c0_95] : memref<9x8x8xf32, #tpu.memory_space<vmem>>, vector<1x8x8xf32>
    %103 = vector.shape_cast %102 : vector<1x8x8xf32> to vector<8x8xf32>
    %cst_96 = arith.constant dense<0.000000e+00> : vector<8x64xf32>
    %104 = tpu.matmul %103, %101, %cst_96 {dimension_numbers = #tpu.dot_dimension_numbers<[1], [0], [0], [1], [0, 0, 1, 1], [], []>} : vector<8x8xf32>, vector<8x64xf32>, vector<8x64xf32> -> vector<8x64xf32>
    %105 = arith.addf %98, %104 : vector<8x64xf32>
    %c3_97 = arith.constant 3 : index
    %c0_98 = arith.constant 0 : index
    %c0_99 = arith.constant 0 : index
    %106 = vector.load %arg4[%c3_97, %c0_98, %c0_99] : memref<9x64x64xf32, #tpu.memory_space<vmem>>, vector<1x64x64xf32>
    %107 = vector.shape_cast %106 : vector<1x64x64xf32> to vector<64x64xf32>
    %cst_100 = arith.constant dense<0.000000e+00> : vector<8x64xf32>
    %108 = tpu.matmul %83, %107, %cst_100 {dimension_numbers = #tpu.dot_dimension_numbers<[1], [0], [0], [1], [0, 0, 1, 1], [], []>} : vector<8x64xf32>, vector<64x64xf32>, vector<8x64xf32> -> vector<8x64xf32>
    %c3_101 = arith.constant 3 : index
    %c0_102 = arith.constant 0 : index
    %c0_103 = arith.constant 0 : index
    %109 = vector.load %arg3[%c3_101, %c0_102, %c0_103] : memref<9x8x8xf32, #tpu.memory_space<vmem>>, vector<1x8x8xf32>
    %110 = vector.shape_cast %109 : vector<1x8x8xf32> to vector<8x8xf32>
    %cst_104 = arith.constant dense<0.000000e+00> : vector<8x64xf32>
    %111 = tpu.matmul %110, %108, %cst_104 {dimension_numbers = #tpu.dot_dimension_numbers<[1], [0], [0], [1], [0, 0, 1, 1], [], []>} : vector<8x8xf32>, vector<8x64xf32>, vector<8x64xf32> -> vector<8x64xf32>
    %112 = arith.addf %105, %111 : vector<8x64xf32>
    %c4_105 = arith.constant 4 : index
    %c0_106 = arith.constant 0 : index
    %c0_107 = arith.constant 0 : index
    %113 = vector.load %arg4[%c4_105, %c0_106, %c0_107] : memref<9x64x64xf32, #tpu.memory_space<vmem>>, vector<1x64x64xf32>
    %114 = vector.shape_cast %113 : vector<1x64x64xf32> to vector<64x64xf32>
    %cst_108 = arith.constant dense<0.000000e+00> : vector<8x64xf32>
    %115 = tpu.matmul %83, %114, %cst_108 {dimension_numbers = #tpu.dot_dimension_numbers<[1], [0], [0], [1], [0, 0, 1, 1], [], []>} : vector<8x64xf32>, vector<64x64xf32>, vector<8x64xf32> -> vector<8x64xf32>
    %c4_109 = arith.constant 4 : index
    %c0_110 = arith.constant 0 : index
    %c0_111 = arith.constant 0 : index
    %116 = vector.load %arg3[%c4_109, %c0_110, %c0_111] : memref<9x8x8xf32, #tpu.memory_space<vmem>>, vector<1x8x8xf32>
    %117 = vector.shape_cast %116 : vector<1x8x8xf32> to vector<8x8xf32>
    %cst_112 = arith.constant dense<0.000000e+00> : vector<8x64xf32>
    %118 = tpu.matmul %117, %115, %cst_112 {dimension_numbers = #tpu.dot_dimension_numbers<[1], [0], [0], [1], [0, 0, 1, 1], [], []>} : vector<8x8xf32>, vector<8x64xf32>, vector<8x64xf32> -> vector<8x64xf32>
    %119 = arith.addf %112, %118 : vector<8x64xf32>
    %c5_113 = arith.constant 5 : index
    %c0_114 = arith.constant 0 : index
    %c0_115 = arith.constant 0 : index
    %120 = vector.load %arg4[%c5_113, %c0_114, %c0_115] : memref<9x64x64xf32, #tpu.memory_space<vmem>>, vector<1x64x64xf32>
    %121 = vector.shape_cast %120 : vector<1x64x64xf32> to vector<64x64xf32>
    %cst_116 = arith.constant dense<0.000000e+00> : vector<8x64xf32>
    %122 = tpu.matmul %83, %121, %cst_116 {dimension_numbers = #tpu.dot_dimension_numbers<[1], [0], [0], [1], [0, 0, 1, 1], [], []>} : vector<8x64xf32>, vector<64x64xf32>, vector<8x64xf32> -> vector<8x64xf32>
    %c5_117 = arith.constant 5 : index
    %c0_118 = arith.constant 0 : index
    %c0_119 = arith.constant 0 : index
    %123 = vector.load %arg3[%c5_117, %c0_118, %c0_119] : memref<9x8x8xf32, #tpu.memory_space<vmem>>, vector<1x8x8xf32>
    %124 = vector.shape_cast %123 : vector<1x8x8xf32> to vector<8x8xf32>
    %cst_120 = arith.constant dense<0.000000e+00> : vector<8x64xf32>
    %125 = tpu.matmul %124, %122, %cst_120 {dimension_numbers = #tpu.dot_dimension_numbers<[1], [0], [0], [1], [0, 0, 1, 1], [], []>} : vector<8x8xf32>, vector<8x64xf32>, vector<8x64xf32> -> vector<8x64xf32>
    %126 = arith.addf %119, %125 : vector<8x64xf32>
    %c6_121 = arith.constant 6 : index
    %c0_122 = arith.constant 0 : index
    %c0_123 = arith.constant 0 : index
    %127 = vector.load %arg4[%c6_121, %c0_122, %c0_123] : memref<9x64x64xf32, #tpu.memory_space<vmem>>, vector<1x64x64xf32>
    %128 = vector.shape_cast %127 : vector<1x64x64xf32> to vector<64x64xf32>
    %cst_124 = arith.constant dense<0.000000e+00> : vector<8x64xf32>
    %129 = tpu.matmul %83, %128, %cst_124 {dimension_numbers = #tpu.dot_dimension_numbers<[1], [0], [0], [1], [0, 0, 1, 1], [], []>} : vector<8x64xf32>, vector<64x64xf32>, vector<8x64xf32> -> vector<8x64xf32>
    %c6_125 = arith.constant 6 : index
    %c0_126 = arith.constant 0 : index
    %c0_127 = arith.constant 0 : index
    %130 = vector.load %arg3[%c6_125, %c0_126, %c0_127] : memref<9x8x8xf32, #tpu.memory_space<vmem>>, vector<1x8x8xf32>
    %131 = vector.shape_cast %130 : vector<1x8x8xf32> to vector<8x8xf32>
    %cst_128 = arith.constant dense<0.000000e+00> : vector<8x64xf32>
    %132 = tpu.matmul %131, %129, %cst_128 {dimension_numbers = #tpu.dot_dimension_numbers<[1], [0], [0], [1], [0, 0, 1, 1], [], []>} : vector<8x8xf32>, vector<8x64xf32>, vector<8x64xf32> -> vector<8x64xf32>
    %133 = arith.addf %126, %132 : vector<8x64xf32>
    %c7_129 = arith.constant 7 : index
    %c0_130 = arith.constant 0 : index
    %c0_131 = arith.constant 0 : index
    %134 = vector.load %arg4[%c7_129, %c0_130, %c0_131] : memref<9x64x64xf32, #tpu.memory_space<vmem>>, vector<1x64x64xf32>
    %135 = vector.shape_cast %134 : vector<1x64x64xf32> to vector<64x64xf32>
    %cst_132 = arith.constant dense<0.000000e+00> : vector<8x64xf32>
    %136 = tpu.matmul %83, %135, %cst_132 {dimension_numbers = #tpu.dot_dimension_numbers<[1], [0], [0], [1], [0, 0, 1, 1], [], []>} : vector<8x64xf32>, vector<64x64xf32>, vector<8x64xf32> -> vector<8x64xf32>
    %c7_133 = arith.constant 7 : index
    %c0_134 = arith.constant 0 : index
    %c0_135 = arith.constant 0 : index
    %137 = vector.load %arg3[%c7_133, %c0_134, %c0_135] : memref<9x8x8xf32, #tpu.memory_space<vmem>>, vector<1x8x8xf32>
    %138 = vector.shape_cast %137 : vector<1x8x8xf32> to vector<8x8xf32>
    %cst_136 = arith.constant dense<0.000000e+00> : vector<8x64xf32>
    %139 = tpu.matmul %138, %136, %cst_136 {dimension_numbers = #tpu.dot_dimension_numbers<[1], [0], [0], [1], [0, 0, 1, 1], [], []>} : vector<8x8xf32>, vector<8x64xf32>, vector<8x64xf32> -> vector<8x64xf32>
    %140 = arith.addf %133, %139 : vector<8x64xf32>
    %c8_137 = arith.constant 8 : index
    %c0_138 = arith.constant 0 : index
    %c0_139 = arith.constant 0 : index
    %141 = vector.load %arg4[%c8_137, %c0_138, %c0_139] : memref<9x64x64xf32, #tpu.memory_space<vmem>>, vector<1x64x64xf32>
    %142 = vector.shape_cast %141 : vector<1x64x64xf32> to vector<64x64xf32>
    %cst_140 = arith.constant dense<0.000000e+00> : vector<8x64xf32>
    %143 = tpu.matmul %83, %142, %cst_140 {dimension_numbers = #tpu.dot_dimension_numbers<[1], [0], [0], [1], [0, 0, 1, 1], [], []>} : vector<8x64xf32>, vector<64x64xf32>, vector<8x64xf32> -> vector<8x64xf32>
    %c8_141 = arith.constant 8 : index
    %c0_142 = arith.constant 0 : index
    %c0_143 = arith.constant 0 : index
    %144 = vector.load %arg3[%c8_141, %c0_142, %c0_143] : memref<9x8x8xf32, #tpu.memory_space<vmem>>, vector<1x8x8xf32>
    %145 = vector.shape_cast %144 : vector<1x8x8xf32> to vector<8x8xf32>
    %cst_144 = arith.constant dense<0.000000e+00> : vector<8x64xf32>
    %146 = tpu.matmul %145, %143, %cst_144 {dimension_numbers = #tpu.dot_dimension_numbers<[1], [0], [0], [1], [0, 0, 1, 1], [], []>} : vector<8x8xf32>, vector<8x64xf32>, vector<8x64xf32> -> vector<8x64xf32>
    %147 = arith.addf %140, %146 : vector<8x64xf32>
    %cst_145 = arith.constant dense<0.000000e+00> : vector<8xf32>
    %148 = vector.multi_reduction <add>, %147, %cst_145 [1] : vector<8x64xf32> to vector<8xf32>
    %149 = vector.shape_cast %148 : vector<8xf32> to vector<8x1xf32>
    %cst_146 = arith.constant 6.400000e+01 : f32
    %150 = vector.broadcast %cst_146 : f32 to vector<8x1xf32>
    %151 = arith.divf %149, %150 : vector<8x1xf32>
    %152 = vector.broadcast %151 : vector<8x1xf32> to vector<8x64xf32>
    %153 = arith.subf %147, %152 : vector<8x64xf32>
    %154 = arith.mulf %153, %153 : vector<8x64xf32>
    %cst_147 = arith.constant dense<0.000000e+00> : vector<8xf32>
    %155 = vector.multi_reduction <add>, %154, %cst_147 [1] : vector<8x64xf32> to vector<8xf32>
    %156 = vector.shape_cast %155 : vector<8xf32> to vector<8x1xf32>
    %cst_148 = arith.constant 6.400000e+01 : f32
    %157 = vector.broadcast %cst_148 : f32 to vector<8x1xf32>
    %158 = arith.divf %156, %157 : vector<8x1xf32>
    %cst_149 = arith.constant 9.99999974E-6 : f32
    %159 = vector.broadcast %cst_149 : f32 to vector<8x1xf32>
    %160 = arith.addf %158, %159 : vector<8x1xf32>
    %161 = math.rsqrt %160 : vector<8x1xf32>
    %162 = vector.broadcast %161 : vector<8x1xf32> to vector<8x64xf32>
    %163 = arith.mulf %153, %162 : vector<8x64xf32>
    %cst_150 = arith.constant 0.000000e+00 : f32
    %164 = vector.broadcast %cst_150 : f32 to vector<8x64xf32>
    %165 = arith.maximumf %163, %164 : vector<8x64xf32>
    %c0_151 = arith.constant 0 : index
    %c0_152 = arith.constant 0 : index
    %c0_153 = arith.constant 0 : index
    %166 = vector.load %arg5[%c0_151, %c0_152, %c0_153] : memref<1x8x64xf32, #tpu.memory_space<vmem>>, vector<1x8x64xf32>
    %167 = vector.shape_cast %166 : vector<1x8x64xf32> to vector<8x64xf32>
    %168 = vector.shape_cast %165 : vector<8x64xf32> to vector<1x8x64xf32>
    tpu.vector_store %arg5[%c0_151, %c0_152, %c0_153], %168 {strides = array<i32>} : memref<1x8x64xf32, #tpu.memory_space<vmem>>, vector<1x8x64xf32>,
    return
  }
  func.func @transform_0(%arg0: i32) -> (i32, i32, i32) {
    %c0_i32 = arith.constant 0 : i32
    %c0_i32_0 = arith.constant 0 : i32
    %c0_i32_1 = arith.constant 0 : i32
    return %arg0, %c0_i32, %c0_i32_0 : i32, i32, i32
  }
  func.func @transform_1(%arg0: i32) -> (i32, i32, i32) {
    %c0_i32 = arith.constant 0 : i32
    %c0_i32_0 = arith.constant 0 : i32
    %c0_i32_1 = arith.constant 0 : i32
    %c0_i32_2 = arith.constant 0 : i32
    return %c0_i32, %c0_i32_0, %c0_i32_1 : i32, i32, i32
  }
  func.func @transform_2(%arg0: i32) -> (i32, i32, i32) {
    %c0_i32 = arith.constant 0 : i32
    %c0_i32_0 = arith.constant 0 : i32
    %c0_i32_1 = arith.constant 0 : i32
    %c0_i32_2 = arith.constant 0 : i32
    return %c0_i32, %c0_i32_0, %c0_i32_1 : i32, i32, i32
  }
  func.func @transform_3(%arg0: i32) -> (i32, i32, i32) {
    %c0_i32 = arith.constant 0 : i32
    %c0_i32_0 = arith.constant 0 : i32
    %c0_i32_1 = arith.constant 0 : i32
    %c0_i32_2 = arith.constant 0 : i32
    return %c0_i32, %c0_i32_0, %c0_i32_1 : i32, i32, i32
  }
  func.func @transform_4(%arg0: i32) -> (i32, i32, i32) {
    %c0_i32 = arith.constant 0 : i32
    %c0_i32_0 = arith.constant 0 : i32
    %c0_i32_1 = arith.constant 0 : i32
    return %arg0, %c0_i32, %c0_i32_0 : i32, i32, i32
  }
}

</mosaic_0001>

<llo_original>
// kernel: down_forward.1
$region0: #{down_forward.1}
  #allocation0 [shape = 'u32[]', space=smem, size = 0x4, offset = 0x4, fixed_abs, tag = 'smem constant byte address 0x4 - core index']
  #allocation1 [shape = 'u32[144,128]{1,0:T(1,128)}', space=vmem, size = 0x12000, scoped, tag = 'internal scratch']
  %s0 = inlined_call_operand.vmem [shape: f32[2,4,64], index: 0, kind: input, shape index: {}]
  %s1 = inlined_call_operand.vmem [shape: f32[9,8,4], index: 1, kind: input, shape index: {}]
  %s2 = inlined_call_operand.vmem [shape: f32[9,8,8], index: 2, kind: input, shape index: {}]
  %s3 = inlined_call_operand.vmem [shape: f32[9,64,64], index: 3, kind: input, shape index: {}]
  %s4 = inlined_call_operand.vmem [shape: f32[2,8,64], index: 4, kind: output, shape index: {}]
  %s5 = sld [smem:[#allocation0]]
  $region49: #{down_forward.1} parent=0
    _
  %s7 = ssub.s32 1, %s5
  %s8 = scalar_select 0, %s7, %s5
  loop: start=0, step=1, limit=4
  $region2: #{down_forward.1} parent=0 // loop_pre_header
    _
  $region3: #{down_forward.1} parent=0 // loop_header
    %s10 = sphi 0, %s14
    %p11 = scmp.ge.s32.totalorder %s10, 4
    %s20 = sphi 0, %s22
    %s23 = sphi 0, %s20
    %s24 = sphi 0, %s23
    %s40 = sphi 0, %s24
    %s44 = sphi 0, %s44
    %s46 = sphi 0, %s44
    %s47 = sphi 0, %s46
    %s61 = sphi 0, %s47
    %s65 = sphi 0, %s65
    %s67 = sphi 0, %s65
    %s68 = sphi 0, %s67
    %s82 = sphi 0, %s68
    %s86 = sphi 0, %s86
    %s88 = sphi 0, %s86
    %s89 = sphi 0, %s88
    %s103 = sphi 0, %s89
    %s109 = sphi 0, %s111
    %s112 = sphi 0, %s109
    %s113 = sphi 0, %s112
    %s129 = sphi 0, %s113
  $region4: #{down_forward.1} parent=0 // loop_header_branch
    %13 = sbr.rel (%p11) target = $region8
  $region5: #{down_forward.1} parent=0 // loop_body
    %s15 = ssub.s32 %s10, 1
    %s16 = ssub.s32 %s10, 2
    %s17 = sadd.s32 %s10, 1
    %s18 = ssub.s32 %s10, %s17
    %p19 = scmp.eq.s32.totalorder %s18, 0
    %s21 = sadd.s32 %s20, 1
    %s22 = scalar_select %p19, %s20, %s21
    %p25 = pneg %p19
    %p26 = scmp.eq.s32.totalorder %s10, 1
    %p27 = por %p25, %p26
    %p28 = scmp.ne.s32.totalorder %s20, %s23
    %p29 = scmp.eq.s32.totalorder %s10, 0
    %p30 = por %p28, %p29
    %p31 = scmp.ne.s32.totalorder %s20, %s23
    %p32 = scmp.eq.s32.totalorder %s15, 1
    %p33 = por %p31, %p32
    %p34 = scmp.ne.s32.totalorder %s23, %s24
    %p35 = scmp.eq.s32.totalorder %s15, 0
    %p36 = por %p34, %p35
    %p37 = scmp.ne.s32.totalorder %s23, %s24
    %p38 = scmp.eq.s32.totalorder %s16, 1
    %p39 = por %p37, %p38
    %p41 = scmp.ne.s32.totalorder %s24, %s40
    %p42 = scmp.eq.s32.totalorder %s16, 0
    %p43 = por %p41, %p42
    %s45 = sadd.s32 %s44, 1
    %p48 = scmp.eq.s32.totalorder %s10, 1
    %p49 = scmp.ne.s32.totalorder %s44, %s46
    %p50 = scmp.eq.s32.totalorder %s10, 0
    %p51 = por %p49, %p50
    %p52 = scmp.ne.s32.totalorder %s44, %s46
    %p53 = scmp.eq.s32.totalorder %s15, 1
    %p54 = por %p52, %p53
    %p55 = scmp.ne.s32.totalorder %s46, %s47
    %p56 = scmp.eq.s32.totalorder %s15, 0
    %p57 = por %p55, %p56
    %p58 = scmp.ne.s32.totalorder %s46, %s47
    %p59 = scmp.eq.s32.totalorder %s16, 1
    %p60 = por %p58, %p59
    %p62 = scmp.ne.s32.totalorder %s47, %s61
    %p63 = scmp.eq.s32.totalorder %s16, 0
    %p64 = por %p62, %p63
    %s66 = sadd.s32 %s65, 1
    %p69 = scmp.eq.s32.totalorder %s10, 1
    %p70 = scmp.ne.s32.totalorder %s65, %s67
    %p71 = scmp.eq.s32.totalorder %s10, 0
    %p72 = por %p70, %p71
    %p73 = scmp.ne.s32.totalorder %s65, %s67
    %p74 = scmp.eq.s32.totalorder %s15, 1
    %p75 = por %p73, %p74
    %p76 = scmp.ne.s32.totalorder %s67, %s68
    %p77 = scmp.eq.s32.totalorder %s15, 0
    %p78 = por %p76, %p77
    %p79 = scmp.ne.s32.totalorder %s67, %s68
    %p80 = scmp.eq.s32.totalorder %s16, 1
    %p81 = por %p79, %p80
    %p83 = scmp.ne.s32.totalorder %s68, %s82
    %p84 = scmp.eq.s32.totalorder %s16, 0
    %p85 = por %p83, %p84
    %s87 = sadd.s32 %s86, 1
    %p90 = scmp.eq.s32.totalorder %s10, 1
    %p91 = scmp.ne.s32.totalorder %s86, %s88
    %p92 = scmp.eq.s32.totalorder %s10, 0
    %p93 = por %p91, %p92
    %p94 = scmp.ne.s32.totalorder %s86, %s88
    %p95 = scmp.eq.s32.totalorder %s15, 1
    %p96 = por %p94, %p95
    %p97 = scmp.ne.s32.totalorder %s88, %s89
    %p98 = scmp.eq.s32.totalorder %s15, 0
    %p99 = por %p97, %p98
    %p100 = scmp.ne.s32.totalorder %s88, %s89
    %p101 = scmp.eq.s32.totalorder %s16, 1
    %p102 = por %p100, %p101
    %p104 = scmp.ne.s32.totalorder %s89, %s103
    %p105 = scmp.eq.s32.totalorder %s16, 0
    %p106 = por %p104, %p105
    %s107 = ssub.s32 %s10, %s17
    %p108 = scmp.eq.s32.totalorder %s107, 0
    %s110 = sadd.s32 %s109, 1
    %s111 = scalar_select %p108, %s109, %s110
    %p114 = pneg %p108
    %p115 = scmp.eq.s32.totalorder %s10, 1
    %p116 = por %p114, %p115
    %p117 = scmp.ne.s32.totalorder %s109, %s112
    %p118 = scmp.eq.s32.totalorder %s10, 0
    %p119 = por %p117, %p118
    %p120 = scmp.ne.s32.totalorder %s109, %s112
    %p121 = scmp.eq.s32.totalorder %s15, 1
    %p122 = por %p120, %p121
    %p123 = scmp.ne.s32.totalorder %s112, %s113
    %p124 = scmp.eq.s32.totalorder %s15, 0
    %p125 = por %p123, %p124
    %p126 = scmp.ne.s32.totalorder %s112, %s113
    %p127 = scmp.eq.s32.totalorder %s16, 1
    %p128 = por %p126, %p127
    %p130 = scmp.ne.s32.totalorder %s113, %s129
    %p131 = scmp.eq.s32.totalorder %s16, 0
    %p132 = por %p130, %p131
    %p133 = scmp.le.s32.totalorder 1, %s10
    %p134 = scmp.lt.s32.totalorder %s10, 3
    %p135 = pnand %p133, %p134
    %p136 = pneg %p135
    // Predicated region
    $region9: #{down_forward.1} parent=5 // pred_check
      _
    $region10: #{down_forward.1} parent=5 // pred_check_branch
      %138 = sbr.rel (%p135) target = $region12
    $region11: #{down_forward.1} parent=5 // pred_region
      %s139 = ssub.s32 %s10, 1
      // Predicated region
      $region13: #{down_forward.1} parent=11 // pred_check
        %p140 = pneg %p57
      $region14: #{down_forward.1} parent=11 // pred_check_branch
        %142 = sbr.rel (%p140) target = $region16
      $region15: #{down_forward.1} parent=11 // pred_region
        _
      $region16: #{down_forward.1} parent=11 // pred_fallthru
        _
      // Predicated region
      $region17: #{down_forward.1} parent=11 // pred_check
        %p143 = pneg %p78
      $region18: #{down_forward.1} parent=11 // pred_check_branch
        %145 = sbr.rel (%p143) target = $region20
      $region19: #{down_forward.1} parent=11 // pred_region
        _
      $region20: #{down_forward.1} parent=11 // pred_fallthru
        _
      // Predicated region
      $region21: #{down_forward.1} parent=11 // pred_check
        %p146 = pneg %p99
      $region22: #{down_forward.1} parent=11 // pred_check_branch
        %148 = sbr.rel (%p146) target = $region24
      $region23: #{down_forward.1} parent=11 // pred_region
        _
      $region24: #{down_forward.1} parent=11 // pred_fallthru
        _
    $region12: #{down_forward.1} parent=5 // pred_fallthru
      _
    %p149 = scmp.lt.s32.totalorder %s10, 2
    // Predicated region
    $region25: #{down_forward.1} parent=5 // pred_check
      %p150 = pneg %p149
    $region26: #{down_forward.1} parent=5 // pred_check_branch
      %152 = sbr.rel (%p150) target = $region28
    $region27: #{down_forward.1} parent=5 // pred_region
      // Predicated region
      $region29: #{down_forward.1} parent=27 // pred_check
        %p153 = pneg %p30
      $region30: #{down_forward.1} parent=27 // pred_check_branch
        %155 = sbr.rel (%p153) target = $region32
      $region31: #{down_forward.1} parent=27 // pred_region
        %p156 = scmp.lt.s32.totalorder %s10, 1
        %s157 = scalar_select %p156, %s10, 1
        %s158 = smul.addr %s157, 4
        %s159 = scalar_lea.vmem %s0, %s158
      $region32: #{down_forward.1} parent=27 // pred_fallthru
        _
    $region28: #{down_forward.1} parent=5 // pred_fallthru
      _
    %p160 = scmp.le.s32.totalorder 1, %s10
    %p161 = scmp.lt.s32.totalorder %s10, 3
    %p162 = pnand %p160, %p161
    %p163 = pneg %p162
    // Predicated region
    $region33: #{down_forward.1} parent=5 // pred_check
      _
    $region34: #{down_forward.1} parent=5 // pred_check_branch
      %165 = sbr.rel (%p162) target = $region36
    $region35: #{down_forward.1} parent=5 // pred_region
      %s166 = ssub.s32 %s10, 1
      %p167 = scmp.lt.s32.totalorder %s15, 1
      %s168 = scalar_select %p167, %s15, 1
      %s169 = smul.addr %s168, 4
      %s170 = scalar_lea.vmem %s0, %s169
      %p171 = pneg %p36
      %p172 = pneg %p33
      %p173 = pneg %p57
      %p174 = pneg %p54
      %p175 = pneg %p78
      %p176 = pneg %p75
      %p177 = pneg %p99
      %p178 = pneg %p96
      %p179 = pneg %p125
      %p180 = pneg %p122
      %p181 = scmp.lt.s32.totalorder %s15, 1
      %s182 = scalar_select %p181, %s15, 1
      %s183 = smul.addr %s182, 8
      %s184 = scalar_lea.vmem %s4, %s183
      %p185 = scmp.lt.s32.totalorder %s15, 1
      %s186 = scalar_select %p185, %s15, 1
      %s187 = smul.addr %s186, 4
      %s188 = scalar_lea.vmem %s0, %s187
      %p189 = scmp.lt.s32.totalorder %s15, 1
      %s190 = scalar_select %p189, %s15, 1
      %s191 = smul.addr %s190, 8
      %s192 = scalar_lea.vmem %s4, %s191
      %v193 = vld [vmem:[%s188] sm:$0xf]
      %v194 = vld [vmem:[%s3] sm:$0xff]
      %v195 = vld [vmem:[%s3 + $0x8] sm:$0xff]
      %v196 = vld [vmem:[%s3 + $0x10] sm:$0xff]
      %v197 = vld [vmem:[%s3 + $0x18] sm:$0xff]
      %v198 = vld [vmem:[%s3 + $0x20] sm:$0xff]
      %v199 = vld [vmem:[%s3 + $0x28] sm:$0xff]
      %v200 = vld [vmem:[%s3 + $0x30] sm:$0xff]
      %v201 = vld [vmem:[%s3 + $0x38] sm:$0xff]
      %vm202 = vcmask 523264
      %v204 = vsel %vm202, %v193, 0
      %206 = vmatprep.subr.mxu0 0.0
      %207 = vmatpush1.msra.mxu0 0.0
      %208 = vmatprep.subr.mxu0 0.0
      %209 = vmatpush1.msra.mxu0 0.0
      %210 = vmatprep.subr.mxu0 0.0
      %211 = vmatpush1.msra.mxu0 0.0
      %212 = vmatprep.subr.mxu0 0.0
      %213 = vmatpush1.msra.mxu0 0.0
      %214 = vmatprep.subr.mxu0 0.0
      %215 = vmatpush1.msra.mxu0 0.0
      %216 = vmatprep.subr.mxu0 0.0
      %217 = vmatpush1.msra.mxu0 0.0
      %218 = vmatprep.subr.mxu0 0.0
      %219 = vmatpush1.msra.mxu0 0.0
      %220 = vmatprep.subr.mxu0 0.0
      %221 = vmatpush1.msra.mxu0 0.0
      %222 = vmatprep.subr.mxu0 0.0
      %223 = vmatpush1.msra.mxu0 %v201
      %224 = vmatprep.subr.mxu0 0.0
      %225 = vmatpush1.msra.mxu0 %v200
      %226 = vmatprep.subr.mxu0 0.0
      %227 = vmatpush1.msra.mxu0 %v199
      %228 = vmatprep.subr.mxu0 0.0
      %229 = vmatpush1.msra.mxu0 %v198
      %230 = vmatprep.subr.mxu0 0.0
      %231 = vmatpush1.msra.mxu0 %v197
      %232 = vmatprep.subr.mxu0 0.0
      %233 = vmatpush1.msra.mxu0 %v196
      %234 = vmatprep.subr.mxu0 0.0
      %235 = vmatpush1.msra.mxu0 %v195
      %236 = vmatprep.subr.mxu0 0.0
      %237 = vmatpush1.msra.mxu0 %v194
      %238 = vmatprep.subr.mxu0 0.0
      %239 = vmatpush2.msra.mxu0 0.0
      %240 = vmatprep.subr.mxu0 0.0
      %241 = vmatpush2.msra.mxu0 0.0
      %242 = vmatprep.subr.mxu0 0.0
      %243 = vmatpush2.msra.mxu0 0.0
      %244 = vmatprep.subr.mxu0 0.0
      %245 = vmatpush2.msra.mxu0 0.0
      %246 = vmatprep.subr.mxu0 0.0
      %247 = vmatpush2.msra.mxu0 0.0
      %248 = vmatprep.subr.mxu0 0.0
      %249 = vmatpush2.msra.mxu0 0.0
      %250 = vmatprep.subr.mxu0 0.0
      %251 = vmatpush2.msra.mxu0 0.0
      %252 = vmatprep.subr.mxu0 0.0
      %253 = vmatpush2.msra.mxu0 0.0
      %254 = vmatprep.subr.mxu0 0.0
      %255 = vmatpush2.msra.mxu0 0.0
      %256 = vmatprep.subr.mxu0 0.0
      %257 = vmatpush2.msra.mxu0 0.0
      %258 = vmatprep.subr.mxu0 0.0
      %259 = vmatpush2.msra.mxu0 0.0
      %260 = vmatprep.subr.mxu0 0.0
      %261 = vmatpush2.msra.mxu0 0.0
      %262 = vmatprep.subr.mxu0 0.0
      %263 = vmatpush2.msra.mxu0 0.0
      %264 = vmatprep.subr.mxu0 0.0
      %265 = vmatpush2.msra.mxu0 0.0
      %266 = vmatprep.subr.mxu0 0.0
      %267 = vmatpush2.msra.mxu0 0.0
      %268 = vmatprep.subr.mxu0 0.0
      %269 = vmatpush2.msra.mxu0 0.0
      %270 = vmatprep.mubr.f32.mxu0 0.0
      %271 = vmatmul.mubr.f32.gmra.mxu0 %v204
      %v272 = vpop.f32.mrf.mxu0
      %v273 = vadd.f32 0.0, %v272
      %v274 = vpop.f32.mrf.mxu0
      %275 = vdwg.mxu0
      %v276 = vld [vmem:[%s1] sm:$0xff]
      %s277 = scalar_lea.vmem %s3, 64
      %v278 = vld [vmem:[%s277] sm:$0xff]
      %v279 = vld [vmem:[%s277 + $0x8] sm:$0xff]
      %v280 = vld [vmem:[%s277 + $0x10] sm:$0xff]
      %v281 = vld [vmem:[%s277 + $0x18] sm:$0xff]
      %v282 = vld [vmem:[%s277 + $0x20] sm:$0xff]
      %v283 = vld [vmem:[%s277 + $0x28] sm:$0xff]
      %v284 = vld [vmem:[%s277 + $0x30] sm:$0xff]
      %v285 = vld [vmem:[%s277 + $0x38] sm:$0xff]
      %286 = vmatprep.subr.mxu0 0.0
      %287 = vmatpush1.msra.mxu0 0.0
      %288 = vmatprep.subr.mxu0 0.0
      %289 = vmatpush1.msra.mxu0 0.0
      %290 = vmatprep.subr.mxu0 0.0
      %291 = vmatpush1.msra.mxu0 0.0
      %292 = vmatprep.subr.mxu0 0.0
      %293 = vmatpush1.msra.mxu0 0.0
      %294 = vmatprep.subr.mxu0 0.0
      %295 = vmatpush1.msra.mxu0 0.0
      %296 = vmatprep.subr.mxu0 0.0
      %297 = vmatpush1.msra.mxu0 0.0
      %298 = vmatprep.subr.mxu0 0.0
      %299 = vmatpush1.msra.mxu0 0.0
      %300 = vmatprep.subr.mxu0 0.0
      %301 = vmatpush1.msra.mxu0 0.0
      %302 = vmatprep.subr.mxu0 0.0
      %303 = vmatpush1.msra.mxu0 %v285
      %304 = vmatprep.subr.mxu0 0.0
      %305 = vmatpush1.msra.mxu0 %v284
      %306 = vmatprep.subr.mxu0 0.0
      %307 = vmatpush1.msra.mxu0 %v283
      %308 = vmatprep.subr.mxu0 0.0
      %309 = vmatpush1.msra.mxu0 %v282
      %310 = vmatprep.subr.mxu0 0.0
      %311 = vmatpush1.msra.mxu0 %v281
      %312 = vmatprep.subr.mxu0 0.0
      %313 = vmatpush1.msra.mxu0 %v280
      %314 = vmatprep.subr.mxu0 0.0
      %315 = vmatpush1.msra.mxu0 %v279
      %316 = vmatprep.subr.mxu0 0.0
      %317 = vmatpush1.msra.mxu0 %v278
      %318 = vmatprep.subr.mxu0 0.0
      %319 = vmatpush2.msra.mxu0 0.0
      %320 = vmatprep.subr.mxu0 0.0
      %321 = vmatpush2.msra.mxu0 0.0
      %322 = vmatprep.subr.mxu0 0.0
      %323 = vmatpush2.msra.mxu0 0.0
      %324 = vmatprep.subr.mxu0 0.0
      %325 = vmatpush2.msra.mxu0 0.0
      %326 = vmatprep.subr.mxu0 0.0
      %327 = vmatpush2.msra.mxu0 0.0
      %328 = vmatprep.subr.mxu0 0.0
      %329 = vmatpush2.msra.mxu0 0.0
      %330 = vmatprep.subr.mxu0 0.0
      %331 = vmatpush2.msra.mxu0 0.0
      %332 = vmatprep.subr.mxu0 0.0
      %333 = vmatpush2.msra.mxu0 0.0
      %334 = vmatprep.subr.mxu0 0.0
      %335 = vmatpush2.msra.mxu0 0.0
      %336 = vmatprep.subr.mxu0 0.0
      %337 = vmatpush2.msra.mxu0 0.0
      %338 = vmatprep.subr.mxu0 0.0
      %339 = vmatpush2.msra.mxu0 0.0
      %340 = vmatprep.subr.mxu0 0.0
      %341 = vmatpush2.msra.mxu0 0.0
      %342 = vmatprep.subr.mxu0 0.0
      %343 = vmatpush2.msra.mxu0 0.0
      %344 = vmatprep.subr.mxu0 0.0
      %345 = vmatpush2.msra.mxu0 0.0
      %346 = vmatprep.subr.mxu0 0.0
      %347 = vmatpush2.msra.mxu0 0.0
      %348 = vmatprep.subr.mxu0 0.0
      %349 = vmatpush2.msra.mxu0 0.0
      %350 = vmatprep.mubr.f32.mxu0 0.0
      %351 = vmatmul.mubr.f32.gmra.mxu0 %v204
      %v352 = vpop.f32.mrf.mxu0
      %v353 = vadd.f32 0.0, %v352
      %v354 = vpop.f32.mrf.mxu0
      %355 = vdwg.mxu0
      %s356 = scalar_lea.vmem %s1, 8
      %v357 = vld [vmem:[%s356] sm:$0xff]
      %vm358 = vcmask 31744
      %v360 = vsel %vm358, %v357, 0
      %vm362 = vcmask 1043456
      %v364 = vsel %vm362, %v353, 0
      %366 = vmatprep.subr.mxu0 0.0
      %367 = vmatpush1.msra.mxu0 0.0
      %368 = vmatprep.subr.mxu0 0.0
      %369 = vmatpush1.msra.mxu0 0.0
      %370 = vmatprep.subr.mxu0 0.0
      %371 = vmatpush1.msra.mxu0 0.0
      %372 = vmatprep.subr.mxu0 0.0
      %373 = vmatpush1.msra.mxu0 0.0
      %374 = vmatprep.subr.mxu0 0.0
      %375 = vmatpush1.msra.mxu0 0.0
      %376 = vmatprep.subr.mxu0 0.0
      %377 = vmatpush1.msra.mxu0 0.0
      %378 = vmatprep.subr.mxu0 0.0
      %379 = vmatpush1.msra.mxu0 0.0
      %380 = vmatprep.subr.mxu0 0.0
      %381 = vmatpush1.msra.mxu0 0.0
      %382 = vmatprep.subr.mxu0 0.0
      %383 = vmatpush1.msra.mxu0 0.0
      %384 = vmatprep.subr.mxu0 0.0
      %385 = vmatpush1.msra.mxu0 0.0
      %386 = vmatprep.subr.mxu0 0.0
      %387 = vmatpush1.msra.mxu0 0.0
      %388 = vmatprep.subr.mxu0 0.0
      %389 = vmatpush1.msra.mxu0 0.0
      %390 = vmatprep.subr.mxu0 0.0
      %391 = vmatpush1.msra.mxu0 0.0
      %392 = vmatprep.subr.mxu0 0.0
      %393 = vmatpush1.msra.mxu0 0.0
      %394 = vmatprep.subr.mxu0 0.0
      %395 = vmatpush1.msra.mxu0 0.0
      %396 = vmatprep.subr.mxu0 0.0
      %397 = vmatpush1.msra.mxu0 %v364
      %398 = vmatprep.subr.mxu0 0.0
      %399 = vmatpush2.msra.mxu0 0.0
      %400 = vmatprep.subr.mxu0 0.0
      %401 = vmatpush2.msra.mxu0 0.0
      %402 = vmatprep.subr.mxu0 0.0
      %403 = vmatpush2.msra.mxu0 0.0
      %404 = vmatprep.subr.mxu0 0.0
      %405 = vmatpush2.msra.mxu0 0.0
      %406 = vmatprep.subr.mxu0 0.0
      %407 = vmatpush2.msra.mxu0 0.0
      %408 = vmatprep.subr.mxu0 0.0
      %409 = vmatpush2.msra.mxu0 0.0
      %410 = vmatprep.subr.mxu0 0.0
      %411 = vmatpush2.msra.mxu0 0.0
      %412 = vmatprep.subr.mxu0 0.0
      %413 = vmatpush2.msra.mxu0 0.0
      %414 = vmatprep.subr.mxu0 0.0
      %415 = vmatpush2.msra.mxu0 0.0
      %416 = vmatprep.subr.mxu0 0.0
      %417 = vmatpush2.msra.mxu0 0.0
      %418 = vmatprep.subr.mxu0 0.0
      %419 = vmatpush2.msra.mxu0 0.0
      %420 = vmatprep.subr.mxu0 0.0
      %421 = vmatpush2.msra.mxu0 0.0
      %422 = vmatprep.subr.mxu0 0.0
      %423 = vmatpush2.msra.mxu0 0.0
      %424 = vmatprep.subr.mxu0 0.0
      %425 = vmatpush2.msra.mxu0 0.0
      %426 = vmatprep.subr.mxu0 0.0
      %427 = vmatpush2.msra.mxu0 0.0
      %428 = vmatprep.subr.mxu0 0.0
      %429 = vmatpush2.msra.mxu0 0.0
      %430 = vmatprep.mubr.f32.mxu0 0.0
      %431 = vmatmul.mubr.f32.gmra.mxu0 %v360
      %v432 = vpop.f32.mrf.mxu0
      %v433 = vadd.f32 0.0, %v432
      %v434 = vpop.f32.mrf.mxu0
      %435 = vdwg.mxu0
      %v437 = vsel %vm358, %v276, 0
      %v440 = vsel %vm362, %v273, 0
      %442 = vmatprep.subr.mxu0 0.0
      %443 = vmatpush1.msra.mxu0 0.0
      %444 = vmatprep.subr.mxu0 0.0
      %445 = vmatpush1.msra.mxu0 0.0
      %446 = vmatprep.subr.mxu0 0.0
      %447 = vmatpush1.msra.mxu0 0.0
      %448 = vmatprep.subr.mxu0 0.0
      %449 = vmatpush1.msra.mxu0 0.0
      %450 = vmatprep.subr.mxu0 0.0
      %451 = vmatpush1.msra.mxu0 0.0
      %452 = vmatprep.subr.mxu0 0.0
      %453 = vmatpush1.msra.mxu0 0.0
      %454 = vmatprep.subr.mxu0 0.0
      %455 = vmatpush1.msra.mxu0 0.0
      %456 = vmatprep.subr.mxu0 0.0
      %457 = vmatpush1.msra.mxu0 0.0
      %458 = vmatprep.subr.mxu0 0.0
      %459 = vmatpush1.msra.mxu0 0.0
      %460 = vmatprep.subr.mxu0 0.0
      %461 = vmatpush1.msra.mxu0 0.0
      %462 = vmatprep.subr.mxu0 0.0
      %463 = vmatpush1.msra.mxu0 0.0
      %464 = vmatprep.subr.mxu0 0.0
      %465 = vmatpush1.msra.mxu0 0.0
      %466 = vmatprep.subr.mxu0 0.0
      %467 = vmatpush1.msra.mxu0 0.0
      %468 = vmatprep.subr.mxu0 0.0
      %469 = vmatpush1.msra.mxu0 0.0
      %470 = vmatprep.subr.mxu0 0.0
      %471 = vmatpush1.msra.mxu0 0.0
      %472 = vmatprep.subr.mxu0 0.0
      %473 = vmatpush1.msra.mxu0 %v440
      %474 = vmatprep.subr.mxu0 0.0
      %475 = vmatpush2.msra.mxu0 0.0
      %476 = vmatprep.subr.mxu0 0.0
      %477 = vmatpush2.msra.mxu0 0.0
      %478 = vmatprep.subr.mxu0 0.0
      %479 = vmatpush2.msra.mxu0 0.0
      %480 = vmatprep.subr.mxu0 0.0
      %481 = vmatpush2.msra.mxu0 0.0
      %482 = vmatprep.subr.mxu0 0.0
      %483 = vmatpush2.msra.mxu0 0.0
      %484 = vmatprep.subr.mxu0 0.0
      %485 = vmatpush2.msra.mxu0 0.0
      %486 = vmatprep.subr.mxu0 0.0
      %487 = vmatpush2.msra.mxu0 0.0
      %488 = vmatprep.subr.mxu0 0.0
      %489 = vmatpush2.msra.mxu0 0.0
      %490 = vmatprep.subr.mxu0 0.0
      %491 = vmatpush2.msra.mxu0 0.0
      %492 = vmatprep.subr.mxu0 0.0
      %493 = vmatpush2.msra.mxu0 0.0
      %494 = vmatprep.subr.mxu0 0.0
      %495 = vmatpush2.msra.mxu0 0.0
      %496 = vmatprep.subr.mxu0 0.0
      %497 = vmatpush2.msra.mxu0 0.0
      %498 = vmatprep.subr.mxu0 0.0
      %499 = vmatpush2.msra.mxu0 0.0
      %500 = vmatprep.subr.mxu0 0.0
      %501 = vmatpush2.msra.mxu0 0.0
      %502 = vmatprep.subr.mxu0 0.0
      %503 = vmatpush2.msra.mxu0 0.0
      %504 = vmatprep.subr.mxu0 0.0
      %505 = vmatpush2.msra.mxu0 0.0
      %506 = vmatprep.mubr.f32.mxu0 0.0
      %507 = vmatmul.mubr.f32.gmra.mxu0 %v437
      %v508 = vpop.f32.mrf.mxu0
      %v509 = vadd.f32 %v433, %v508
      %v510 = vpop.f32.mrf.mxu0
      %511 = vdwg.mxu0
      %s512 = scalar_lea.vmem %s3, 128
      %v513 = vld [vmem:[%s512] sm:$0xff]
      %v514 = vld [vmem:[%s512 + $0x8] sm:$0xff]
      %v515 = vld [vmem:[%s512 + $0x10] sm:$0xff]
      %v516 = vld [vmem:[%s512 + $0x18] sm:$0xff]
      %v517 = vld [vmem:[%s512 + $0x20] sm:$0xff]
      %v518 = vld [vmem:[%s512 + $0x28] sm:$0xff]
      %v519 = vld [vmem:[%s512 + $0x30] sm:$0xff]
      %v520 = vld [vmem:[%s512 + $0x38] sm:$0xff]
      %521 = vmatprep.subr.mxu0 0.0
      %522 = vmatpush1.msra.mxu0 0.0
      %523 = vmatprep.subr.mxu0 0.0
      %524 = vmatpush1.msra.mxu0 0.0
      %525 = vmatprep.subr.mxu0 0.0
      %526 = vmatpush1.msra.mxu0 0.0
      %527 = vmatprep.subr.mxu0 0.0
      %528 = vmatpush1.msra.mxu0 0.0
      %529 = vmatprep.subr.mxu0 0.0
      %530 = vmatpush1.msra.mxu0 0.0
      %531 = vmatprep.subr.mxu0 0.0
      %532 = vmatpush1.msra.mxu0 0.0
      %533 = vmatprep.subr.mxu0 0.0
      %534 = vmatpush1.msra.mxu0 0.0
      %535 = vmatprep.subr.mxu0 0.0
      %536 = vmatpush1.msra.mxu0 0.0
      %537 = vmatprep.subr.mxu0 0.0
      %538 = vmatpush1.msra.mxu0 %v520
      %539 = vmatprep.subr.mxu0 0.0
      %540 = vmatpush1.msra.mxu0 %v519
      %541 = vmatprep.subr.mxu0 0.0
      %542 = vmatpush1.msra.mxu0 %v518
      %543 = vmatprep.subr.mxu0 0.0
      %544 = vmatpush1.msra.mxu0 %v517
      %545 = vmatprep.subr.mxu0 0.0
      %546 = vmatpush1.msra.mxu0 %v516
      %547 = vmatprep.subr.mxu0 0.0
      %548 = vmatpush1.msra.mxu0 %v515
      %549 = vmatprep.subr.mxu0 0.0
      %550 = vmatpush1.msra.mxu0 %v514
      %551 = vmatprep.subr.mxu0 0.0
      %552 = vmatpush1.msra.mxu0 %v513
      %553 = vmatprep.subr.mxu0 0.0
      %554 = vmatpush2.msra.mxu0 0.0
      %555 = vmatprep.subr.mxu0 0.0
      %556 = vmatpush2.msra.mxu0 0.0
      %557 = vmatprep.subr.mxu0 0.0
      %558 = vmatpush2.msra.mxu0 0.0
      %559 = vmatprep.subr.mxu0 0.0
      %560 = vmatpush2.msra.mxu0 0.0
      %561 = vmatprep.subr.mxu0 0.0
      %562 = vmatpush2.msra.mxu0 0.0
      %563 = vmatprep.subr.mxu0 0.0
      %564 = vmatpush2.msra.mxu0 0.0
      %565 = vmatprep.subr.mxu0 0.0
      %566 = vmatpush2.msra.mxu0 0.0
      %567 = vmatprep.subr.mxu0 0.0
      %568 = vmatpush2.msra.mxu0 0.0
      %569 = vmatprep.subr.mxu0 0.0
      %570 = vmatpush2.msra.mxu0 0.0
      %571 = vmatprep.subr.mxu0 0.0
      %572 = vmatpush2.msra.mxu0 0.0
      %573 = vmatprep.subr.mxu0 0.0
      %574 = vmatpush2.msra.mxu0 0.0
      %575 = vmatprep.subr.mxu0 0.0
      %576 = vmatpush2.msra.mxu0 0.0
      %577 = vmatprep.subr.mxu0 0.0
      %578 = vmatpush2.msra.mxu0 0.0
      %579 = vmatprep.subr.mxu0 0.0
      %580 = vmatpush2.msra.mxu0 0.0
      %581 = vmatprep.subr.mxu0 0.0
      %582 = vmatpush2.msra.mxu0 0.0
      %583 = vmatprep.subr.mxu0 0.0
      %584 = vmatpush2.msra.mxu0 0.0
      %585 = vmatprep.mubr.f32.mxu0 0.0
      %586 = vmatmul.mubr.f32.gmra.mxu0 %v204
      %v587 = vpop.f32.mrf.mxu0
      %v588 = vadd.f32 0.0, %v587
      %v589 = vpop.f32.mrf.mxu0
      %590 = vdwg.mxu0
      %s591 = scalar_lea.vmem %s1, 16
      %v592 = vld [vmem:[%s591] sm:$0xff]
      %v594 = vsel %vm358, %v592, 0
      %v597 = vsel %vm362, %v588, 0
      %599 = vmatprep.subr.mxu0 0.0
      %600 = vmatpush1.msra.mxu0 0.0
      %601 = vmatprep.subr.mxu0 0.0
      %602 = vmatpush1.msra.mxu0 0.0
      %603 = vmatprep.subr.mxu0 0.0
      %604 = vmatpush1.msra.mxu0 0.0
      %605 = vmatprep.subr.mxu0 0.0
      %606 = vmatpush1.msra.mxu0 0.0
      %607 = vmatprep.subr.mxu0 0.0
      %608 = vmatpush1.msra.mxu0 0.0
      %609 = vmatprep.subr.mxu0 0.0
      %610 = vmatpush1.msra.mxu0 0.0
      %611 = vmatprep.subr.mxu0 0.0
      %612 = vmatpush1.msra.mxu0 0.0
      %613 = vmatprep.subr.mxu0 0.0
      %614 = vmatpush1.msra.mxu0 0.0
      %615 = vmatprep.subr.mxu0 0.0
      %616 = vmatpush1.msra.mxu0 0.0
      %617 = vmatprep.subr.mxu0 0.0
      %618 = vmatpush1.msra.mxu0 0.0
      %619 = vmatprep.subr.mxu0 0.0
      %620 = vmatpush1.msra.mxu0 0.0
      %621 = vmatprep.subr.mxu0 0.0
      %622 = vmatpush1.msra.mxu0 0.0
      %623 = vmatprep.subr.mxu0 0.0
      %624 = vmatpush1.msra.mxu0 0.0
      %625 = vmatprep.subr.mxu0 0.0
      %626 = vmatpush1.msra.mxu0 0.0
      %627 = vmatprep.subr.mxu0 0.0
      %628 = vmatpush1.msra.mxu0 0.0
      %629 = vmatprep.subr.mxu0 0.0
      %630 = vmatpush1.msra.mxu0 %v597
      %631 = vmatprep.subr.mxu0 0.0
      %632 = vmatpush2.msra.mxu0 0.0
      %633 = vmatprep.subr.mxu0 0.0
      %634 = vmatpush2.msra.mxu0 0.0
      %635 = vmatprep.subr.mxu0 0.0
      %636 = vmatpush2.msra.mxu0 0.0
      %637 = vmatprep.subr.mxu0 0.0
      %638 = vmatpush2.msra.mxu0 0.0
      %639 = vmatprep.subr.mxu0 0.0
      %640 = vmatpush2.msra.mxu0 0.0
      %641 = vmatprep.subr.mxu0 0.0
      %642 = vmatpush2.msra.mxu0 0.0
      %643 = vmatprep.subr.mxu0 0.0
      %644 = vmatpush2.msra.mxu0 0.0
      %645 = vmatprep.subr.mxu0 0.0
      %646 = vmatpush2.msra.mxu0 0.0
      %647 = vmatprep.subr.mxu0 0.0
      %648 = vmatpush2.msra.mxu0 0.0
      %649 = vmatprep.subr.mxu0 0.0
      %650 = vmatpush2.msra.mxu0 0.0
      %651 = vmatprep.subr.mxu0 0.0
      %652 = vmatpush2.msra.mxu0 0.0
      %653 = vmatprep.subr.mxu0 0.0
      %654 = vmatpush2.msra.mxu0 0.0
      %655 = vmatprep.subr.mxu0 0.0
      %656 = vmatpush2.msra.mxu0 0.0
      %657 = vmatprep.subr.mxu0 0.0
      %658 = vmatpush2.msra.mxu0 0.0
      %659 = vmatprep.subr.mxu0 0.0
      %660 = vmatpush2.msra.mxu0 0.0
      %661 = vmatprep.subr.mxu0 0.0
      %662 = vmatpush2.msra.mxu0 0.0
      %663 = vmatprep.mubr.f32.mxu0 0.0
      %664 = vmatmul.mubr.f32.gmra.mxu0 %v594
      %v665 = vpop.f32.mrf.mxu0
      %v666 = vadd.f32 0.0, %v665
      %v667 = vpop.f32.mrf.mxu0
      %668 = vdwg.mxu0
      %v669 = vadd.f32 %v509, %v666
      %s670 = scalar_lea.vmem %s3, 192
      %v671 = vld [vmem:[%s670] sm:$0xff]
      %v672 = vld [vmem:[%s670 + $0x8] sm:$0xff]
      %v673 = vld [vmem:[%s670 + $0x10] sm:$0xff]
      %v674 = vld [vmem:[%s670 + $0x18] sm:$0xff]
      %v675 = vld [vmem:[%s670 + $0x20] sm:$0xff]
      %v676 = vld [vmem:[%s670 + $0x28] sm:$0xff]
      %v677 = vld [vmem:[%s670 + $0x30] sm:$0xff]
      %v678 = vld [vmem:[%s670 + $0x38] sm:$0xff]
      %679 = vmatprep.subr.mxu0 0.0
      %680 = vmatpush1.msra.mxu0 0.0
      %681 = vmatprep.subr.mxu0 0.0
      %682 = vmatpush1.msra.mxu0 0.0
      %683 = vmatprep.subr.mxu0 0.0
      %684 = vmatpush1.msra.mxu0 0.0
      %685 = vmatprep.subr.mxu0 0.0
      %686 = vmatpush1.msra.mxu0 0.0
      %687 = vmatprep.subr.mxu0 0.0
      %688 = vmatpush1.msra.mxu0 0.0
      %689 = vmatprep.subr.mxu0 0.0
      %690 = vmatpush1.msra.mxu0 0.0
      %691 = vmatprep.subr.mxu0 0.0
      %692 = vmatpush1.msra.mxu0 0.0
      %693 = vmatprep.subr.mxu0 0.0
      %694 = vmatpush1.msra.mxu0 0.0
      %695 = vmatprep.subr.mxu0 0.0
      %696 = vmatpush1.msra.mxu0 %v678
      %697 = vmatprep.subr.mxu0 0.0
      %698 = vmatpush1.msra.mxu0 %v677
      %699 = vmatprep.subr.mxu0 0.0
      %700 = vmatpush1.msra.mxu0 %v676
      %701 = vmatprep.subr.mxu0 0.0
      %702 = vmatpush1.msra.mxu0 %v675
      %703 = vmatprep.subr.mxu0 0.0
      %704 = vmatpush1.msra.mxu0 %v674
      %705 = vmatprep.subr.mxu0 0.0
      %706 = vmatpush1.msra.mxu0 %v673
      %707 = vmatprep.subr.mxu0 0.0
      %708 = vmatpush1.msra.mxu0 %v672
      %709 = vmatprep.subr.mxu0 0.0
      %710 = vmatpush1.msra.mxu0 %v671
      %711 = vmatprep.subr.mxu0 0.0
      %712 = vmatpush2.msra.mxu0 0.0
      %713 = vmatprep.subr.mxu0 0.0
      %714 = vmatpush2.msra.mxu0 0.0
      %715 = vmatprep.subr.mxu0 0.0
      %716 = vmatpush2.msra.mxu0 0.0
      %717 = vmatprep.subr.mxu0 0.0
      %718 = vmatpush2.msra.mxu0 0.0
      %719 = vmatprep.subr.mxu0 0.0
      %720 = vmatpush2.msra.mxu0 0.0
      %721 = vmatprep.subr.mxu0 0.0
      %722 = vmatpush2.msra.mxu0 0.0
      %723 = vmatprep.subr.mxu0 0.0
      %724 = vmatpush2.msra.mxu0 0.0
      %725 = vmatprep.subr.mxu0 0.0
      %726 = vmatpush2.msra.mxu0 0.0
      %727 = vmatprep.subr.mxu0 0.0
      %728 = vmatpush2.msra.mxu0 0.0
      %729 = vmatprep.subr.mxu0 0.0
      %730 = vmatpush2.msra.mxu0 0.0
      %731 = vmatprep.subr.mxu0 0.0
      %732 = vmatpush2.msra.mxu0 0.0
      %733 = vmatprep.subr.mxu0 0.0
      %734 = vmatpush2.msra.mxu0 0.0
      %735 = vmatprep.subr.mxu0 0.0
      %736 = vmatpush2.msra.mxu0 0.0
      %737 = vmatprep.subr.mxu0 0.0
      %738 = vmatpush2.msra.mxu0 0.0
      %739 = vmatprep.subr.mxu0 0.0
      %740 = vmatpush2.msra.mxu0 0.0
      %741 = vmatprep.subr.mxu0 0.0
      %742 = vmatpush2.msra.mxu0 0.0
      %743 = vmatprep.mubr.f32.mxu0 0.0
      %744 = vmatmul.mubr.f32.gmra.mxu0 %v204
      %v745 = vpop.f32.mrf.mxu0
      %v746 = vadd.f32 0.0, %v745
      %v747 = vpop.f32.mrf.mxu0
      %748 = vdwg.mxu0
      %s749 = scalar_lea.vmem %s1, 24
      %v750 = vld [vmem:[%s749] sm:$0xff]
      %v752 = vsel %vm358, %v750, 0
      %v755 = vsel %vm362, %v746, 0
      %757 = vmatprep.subr.mxu0 0.0
      %758 = vmatpush1.msra.mxu0 0.0
      %759 = vmatprep.subr.mxu0 0.0
      %760 = vmatpush1.msra.mxu0 0.0
      %761 = vmatprep.subr.mxu0 0.0
      %762 = vmatpush1.msra.mxu0 0.0
      %763 = vmatprep.subr.mxu0 0.0
      %764 = vmatpush1.msra.mxu0 0.0
      %765 = vmatprep.subr.mxu0 0.0
      %766 = vmatpush1.msra.mxu0 0.0
      %767 = vmatprep.subr.mxu0 0.0
      %768 = vmatpush1.msra.mxu0 0.0
      %769 = vmatprep.subr.mxu0 0.0
      %770 = vmatpush1.msra.mxu0 0.0
      %771 = vmatprep.subr.mxu0 0.0
      %772 = vmatpush1.msra.mxu0 0.0
      %773 = vmatprep.subr.mxu0 0.0
      %774 = vmatpush1.msra.mxu0 0.0
      %775 = vmatprep.subr.mxu0 0.0
      %776 = vmatpush1.msra.mxu0 0.0
      %777 = vmatprep.subr.mxu0 0.0
      %778 = vmatpush1.msra.mxu0 0.0
      %779 = vmatprep.subr.mxu0 0.0
      %780 = vmatpush1.msra.mxu0 0.0
      %781 = vmatprep.subr.mxu0 0.0
      %782 = vmatpush1.msra.mxu0 0.0
      %783 = vmatprep.subr.mxu0 0.0
      %784 = vmatpush1.msra.mxu0 0.0
      %785 = vmatprep.subr.mxu0 0.0
      %786 = vmatpush1.msra.mxu0 0.0
      %787 = vmatprep.subr.mxu0 0.0
      %788 = vmatpush1.msra.mxu0 %v755
      %789 = vmatprep.subr.mxu0 0.0
      %790 = vmatpush2.msra.mxu0 0.0
      %791 = vmatprep.subr.mxu0 0.0
      %792 = vmatpush2.msra.mxu0 0.0
      %793 = vmatprep.subr.mxu0 0.0
      %794 = vmatpush2.msra.mxu0 0.0
      %795 = vmatprep.subr.mxu0 0.0
      %796 = vmatpush2.msra.mxu0 0.0
      %797 = vmatprep.subr.mxu0 0.0
      %798 = vmatpush2.msra.mxu0 0.0
      %799 = vmatprep.subr.mxu0 0.0
      %800 = vmatpush2.msra.mxu0 0.0
      %801 = vmatprep.subr.mxu0 0.0
      %802 = vmatpush2.msra.mxu0 0.0
      %803 = vmatprep.subr.mxu0 0.0
      %804 = vmatpush2.msra.mxu0 0.0
      %805 = vmatprep.subr.mxu0 0.0
      %806 = vmatpush2.msra.mxu0 0.0
      %807 = vmatprep.subr.mxu0 0.0
      %808 = vmatpush2.msra.mxu0 0.0
      %809 = vmatprep.subr.mxu0 0.0
      %810 = vmatpush2.msra.mxu0 0.0
      %811 = vmatprep.subr.mxu0 0.0
      %812 = vmatpush2.msra.mxu0 0.0
      %813 = vmatprep.subr.mxu0 0.0
      %814 = vmatpush2.msra.mxu0 0.0
      %815 = vmatprep.subr.mxu0 0.0
      %816 = vmatpush2.msra.mxu0 0.0
      %817 = vmatprep.subr.mxu0 0.0
      %818 = vmatpush2.msra.mxu0 0.0
      %819 = vmatprep.subr.mxu0 0.0
      %820 = vmatpush2.msra.mxu0 0.0
      %821 = vmatprep.mubr.f32.mxu0 0.0
      %822 = vmatmul.mubr.f32.gmra.mxu0 %v752
      %v823 = vpop.f32.mrf.mxu0
      %v824 = vadd.f32 0.0, %v823
      %v825 = vpop.f32.mrf.mxu0
      %826 = vdwg.mxu0
      %v827 = vadd.f32 %v669, %v824
      %s828 = scalar_lea.vmem %s3, 256
      %v829 = vld [vmem:[%s828] sm:$0xff]
      %v830 = vld [vmem:[%s828 + $0x8] sm:$0xff]
      %v831 = vld [vmem:[%s828 + $0x10] sm:$0xff]
      %v832 = vld [vmem:[%s828 + $0x18] sm:$0xff]
      %v833 = vld [vmem:[%s828 + $0x20] sm:$0xff]
      %v834 = vld [vmem:[%s828 + $0x28] sm:$0xff]
      %v835 = vld [vmem:[%s828 + $0x30] sm:$0xff]
      %v836 = vld [vmem:[%s828 + $0x38] sm:$0xff]
      %837 = vmatprep.subr.mxu0 0.0
      %838 = vmatpush1.msra.mxu0 0.0
      %839 = vmatprep.subr.mxu0 0.0
      %840 = vmatpush1.msra.mxu0 0.0
      %841 = vmatprep.subr.mxu0 0.0
      %842 = vmatpush1.msra.mxu0 0.0
      %843 = vmatprep.subr.mxu0 0.0
      %844 = vmatpush1.msra.mxu0 0.0
      %845 = vmatprep.subr.mxu0 0.0
      %846 = vmatpush1.msra.mxu0 0.0
      %847 = vmatprep.subr.mxu0 0.0
      %848 = vmatpush1.msra.mxu0 0.0
      %849 = vmatprep.subr.mxu0 0.0
      %850 = vmatpush1.msra.mxu0 0.0
      %851 = vmatprep.subr.mxu0 0.0
      %852 = vmatpush1.msra.mxu0 0.0
      %853 = vmatprep.subr.mxu0 0.0
      %854 = vmatpush1.msra.mxu0 %v836
      %855 = vmatprep.subr.mxu0 0.0
      %856 = vmatpush1.msra.mxu0 %v835
      %857 = vmatprep.subr.mxu0 0.0
      %858 = vmatpush1.msra.mxu0 %v834
      %859 = vmatprep.subr.mxu0 0.0
      %860 = vmatpush1.msra.mxu0 %v833
      %861 = vmatprep.subr.mxu0 0.0
      %862 = vmatpush1.msra.mxu0 %v832
      %863 = vmatprep.subr.mxu0 0.0
      %864 = vmatpush1.msra.mxu0 %v831
      %865 = vmatprep.subr.mxu0 0.0
      %866 = vmatpush1.msra.mxu0 %v830
      %867 = vmatprep.subr.mxu0 0.0
      %868 = vmatpush1.msra.mxu0 %v829
      %869 = vmatprep.subr.mxu0 0.0
      %870 = vmatpush2.msra.mxu0 0.0
      %871 = vmatprep.subr.mxu0 0.0
      %872 = vmatpush2.msra.mxu0 0.0
      %873 = vmatprep.subr.mxu0 0.0
      %874 = vmatpush2.msra.mxu0 0.0
      %875 = vmatprep.subr.mxu0 0.0
      %876 = vmatpush2.msra.mxu0 0.0
      %877 = vmatprep.subr.mxu0 0.0
      %878 = vmatpush2.msra.mxu0 0.0
      %879 = vmatprep.subr.mxu0 0.0
      %880 = vmatpush2.msra.mxu0 0.0
      %881 = vmatprep.subr.mxu0 0.0
      %882 = vmatpush2.msra.mxu0 0.0
      %883 = vmatprep.subr.mxu0 0.0
      %884 = vmatpush2.msra.mxu0 0.0
      %885 = vmatprep.subr.mxu0 0.0
      %886 = vmatpush2.msra.mxu0 0.0
      %887 = vmatprep.subr.mxu0 0.0
      %888 = vmatpush2.msra.mxu0 0.0
      %889 = vmatprep.subr.mxu0 0.0
      %890 = vmatpush2.msra.mxu0 0.0
      %891 = vmatprep.subr.mxu0 0.0
      %892 = vmatpush2.msra.mxu0 0.0
      %893 = vmatprep.subr.mxu0 0.0
      %894 = vmatpush2.msra.mxu0 0.0
      %895 = vmatprep.subr.mxu0 0.0
      %896 = vmatpush2.msra.mxu0 0.0
      %897 = vmatprep.subr.mxu0 0.0
      %898 = vmatpush2.msra.mxu0 0.0
      %899 = vmatprep.subr.mxu0 0.0
      %900 = vmatpush2.msra.mxu0 0.0
      %901 = vmatprep.mubr.f32.mxu0 0.0
      %902 = vmatmul.mubr.f32.gmra.mxu0 %v204
      %v903 = vpop.f32.mrf.mxu0
      %v904 = vadd.f32 0.0, %v903
      %v905 = vpop.f32.mrf.mxu0
      %906 = vdwg.mxu0
      %s907 = scalar_lea.vmem %s1, 32
      %v908 = vld [vmem:[%s907] sm:$0xff]
      %v910 = vsel %vm358, %v908, 0
      %v913 = vsel %vm362, %v904, 0
      %915 = vmatprep.subr.mxu0 0.0
      %916 = vmatpush1.msra.mxu0 0.0
      %917 = vmatprep.subr.mxu0 0.0
      %918 = vmatpush1.msra.mxu0 0.0
      %919 = vmatprep.subr.mxu0 0.0
      %920 = vmatpush1.msra.mxu0 0.0
      %921 = vmatprep.subr.mxu0 0.0
      %922 = vmatpush1.msra.mxu0 0.0
      %923 = vmatprep.subr.mxu0 0.0
      %924 = vmatpush1.msra.mxu0 0.0
      %925 = vmatprep.subr.mxu0 0.0
      %926 = vmatpush1.msra.mxu0 0.0
      %927 = vmatprep.subr.mxu0 0.0
      %928 = vmatpush1.msra.mxu0 0.0
      %929 = vmatprep.subr.mxu0 0.0
      %930 = vmatpush1.msra.mxu0 0.0
      %931 = vmatprep.subr.mxu0 0.0
      %932 = vmatpush1.msra.mxu0 0.0
      %933 = vmatprep.subr.mxu0 0.0
      %934 = vmatpush1.msra.mxu0 0.0
      %935 = vmatprep.subr.mxu0 0.0
      %936 = vmatpush1.msra.mxu0 0.0
      %937 = vmatprep.subr.mxu0 0.0
      %938 = vmatpush1.msra.mxu0 0.0
      %939 = vmatprep.subr.mxu0 0.0
      %940 = vmatpush1.msra.mxu0 0.0
      %941 = vmatprep.subr.mxu0 0.0
      %942 = vmatpush1.msra.mxu0 0.0
      %943 = vmatprep.subr.mxu0 0.0
      %944 = vmatpush1.msra.mxu0 0.0
      %945 = vmatprep.subr.mxu0 0.0
      %946 = vmatpush1.msra.mxu0 %v913
      %947 = vmatprep.subr.mxu0 0.0
      %948 = vmatpush2.msra.mxu0 0.0
      %949 = vmatprep.subr.mxu0 0.0
      %950 = vmatpush2.msra.mxu0 0.0
      %951 = vmatprep.subr.mxu0 0.0
      %952 = vmatpush2.msra.mxu0 0.0
      %953 = vmatprep.subr.mxu0 0.0
      %954 = vmatpush2.msra.mxu0 0.0
      %955 = vmatprep.subr.mxu0 0.0
      %956 = vmatpush2.msra.mxu0 0.0
      %957 = vmatprep.subr.mxu0 0.0
      %958 = vmatpush2.msra.mxu0 0.0
      %959 = vmatprep.subr.mxu0 0.0
      %960 = vmatpush2.msra.mxu0 0.0
      %961 = vmatprep.subr.mxu0 0.0
      %962 = vmatpush2.msra.mxu0 0.0
      %963 = vmatprep.subr.mxu0 0.0
      %964 = vmatpush2.msra.mxu0 0.0
      %965 = vmatprep.subr.mxu0 0.0
      %966 = vmatpush2.msra.mxu0 0.0
      %967 = vmatprep.subr.mxu0 0.0
      %968 = vmatpush2.msra.mxu0 0.0
      %969 = vmatprep.subr.mxu0 0.0
      %970 = vmatpush2.msra.mxu0 0.0
      %971 = vmatprep.subr.mxu0 0.0
      %972 = vmatpush2.msra.mxu0 0.0
      %973 = vmatprep.subr.mxu0 0.0
      %974 = vmatpush2.msra.mxu0 0.0
      %975 = vmatprep.subr.mxu0 0.0
      %976 = vmatpush2.msra.mxu0 0.0
      %977 = vmatprep.subr.mxu0 0.0
      %978 = vmatpush2.msra.mxu0 0.0
      %979 = vmatprep.mubr.f32.mxu0 0.0
      %980 = vmatmul.mubr.f32.gmra.mxu0 %v910
      %v981 = vpop.f32.mrf.mxu0
      %v982 = vadd.f32 0.0, %v981
      %v983 = vpop.f32.mrf.mxu0
      %984 = vdwg.mxu0
      %v985 = vadd.f32 %v827, %v982
      %s986 = scalar_lea.vmem %s3, 320
      %v987 = vld [vmem:[%s986] sm:$0xff]
      %v988 = vld [vmem:[%s986 + $0x8] sm:$0xff]
      %v989 = vld [vmem:[%s986 + $0x10] sm:$0xff]
      %v990 = vld [vmem:[%s986 + $0x18] sm:$0xff]
      %v991 = vld [vmem:[%s986 + $0x20] sm:$0xff]
      %v992 = vld [vmem:[%s986 + $0x28] sm:$0xff]
      %v993 = vld [vmem:[%s986 + $0x30] sm:$0xff]
      %v994 = vld [vmem:[%s986 + $0x38] sm:$0xff]
      %995 = vmatprep.subr.mxu0 0.0
      %996 = vmatpush1.msra.mxu0 0.0
      %997 = vmatprep.subr.mxu0 0.0
      %998 = vmatpush1.msra.mxu0 0.0
      %999 = vmatprep.subr.mxu0 0.0
      %1000 = vmatpush1.msra.mxu0 0.0
      %1001 = vmatprep.subr.mxu0 0.0
      %1002 = vmatpush1.msra.mxu0 0.0
      %1003 = vmatprep.subr.mxu0 0.0
      %1004 = vmatpush1.msra.mxu0 0.0
      %1005 = vmatprep.subr.mxu0 0.0
      %1006 = vmatpush1.msra.mxu0 0.0
      %1007 = vmatprep.subr.mxu0 0.0
      %1008 = vmatpush1.msra.mxu0 0.0
      %1009 = vmatprep.subr.mxu0 0.0
      %1010 = vmatpush1.msra.mxu0 0.0
      %1011 = vmatprep.subr.mxu0 0.0
      %1012 = vmatpush1.msra.mxu0 %v994
      %1013 = vmatprep.subr.mxu0 0.0
      %1014 = vmatpush1.msra.mxu0 %v993
      %1015 = vmatprep.subr.mxu0 0.0
      %1016 = vmatpush1.msra.mxu0 %v992
      %1017 = vmatprep.subr.mxu0 0.0
      %1018 = vmatpush1.msra.mxu0 %v991
      %1019 = vmatprep.subr.mxu0 0.0
      %1020 = vmatpush1.msra.mxu0 %v990
      %1021 = vmatprep.subr.mxu0 0.0
      %1022 = vmatpush1.msra.mxu0 %v989
      %1023 = vmatprep.subr.mxu0 0.0
      %1024 = vmatpush1.msra.mxu0 %v988
      %1025 = vmatprep.subr.mxu0 0.0
      %1026 = vmatpush1.msra.mxu0 %v987
      %1027 = vmatprep.subr.mxu0 0.0
      %1028 = vmatpush2.msra.mxu0 0.0
      %1029 = vmatprep.subr.mxu0 0.0
      %1030 = vmatpush2.msra.mxu0 0.0
      %1031 = vmatprep.subr.mxu0 0.0
      %1032 = vmatpush2.msra.mxu0 0.0
      %1033 = vmatprep.subr.mxu0 0.0
      %1034 = vmatpush2.msra.mxu0 0.0
      %1035 = vmatprep.subr.mxu0 0.0
      %1036 = vmatpush2.msra.mxu0 0.0
      %1037 = vmatprep.subr.mxu0 0.0
      %1038 = vmatpush2.msra.mxu0 0.0
      %1039 = vmatprep.subr.mxu0 0.0
      %1040 = vmatpush2.msra.mxu0 0.0
      %1041 = vmatprep.subr.mxu0 0.0
      %1042 = vmatpush2.msra.mxu0 0.0
      %1043 = vmatprep.subr.mxu0 0.0
      %1044 = vmatpush2.msra.mxu0 0.0
      %1045 = vmatprep.subr.mxu0 0.0
      %1046 = vmatpush2.msra.mxu0 0.0
      %1047 = vmatprep.subr.mxu0 0.0
      %1048 = vmatpush2.msra.mxu0 0.0
      %1049 = vmatprep.subr.mxu0 0.0
      %1050 = vmatpush2.msra.mxu0 0.0
      %1051 = vmatprep.subr.mxu0 0.0
      %1052 = vmatpush2.msra.mxu0 0.0
      %1053 = vmatprep.subr.mxu0 0.0
      %1054 = vmatpush2.msra.mxu0 0.0
      %1055 = vmatprep.subr.mxu0 0.0
      %1056 = vmatpush2.msra.mxu0 0.0
      %1057 = vmatprep.subr.mxu0 0.0
      %1058 = vmatpush2.msra.mxu0 0.0
      %1059 = vmatprep.mubr.f32.mxu0 0.0
      %1060 = vmatmul.mubr.f32.gmra.mxu0 %v204
      %v1061 = vpop.f32.mrf.mxu0
      %v1062 = vadd.f32 0.0, %v1061
      %v1063 = vpop.f32.mrf.mxu0
      %1064 = vdwg.mxu0
      %s1065 = scalar_lea.vmem %s1, 40
      %v1066 = vld [vmem:[%s1065] sm:$0xff]
      %v1068 = vsel %vm358, %v1066, 0
      %v1071 = vsel %vm362, %v1062, 0
      %1073 = vmatprep.subr.mxu0 0.0
      %1074 = vmatpush1.msra.mxu0 0.0
      %1075 = vmatprep.subr.mxu0 0.0
      %1076 = vmatpush1.msra.mxu0 0.0
      %1077 = vmatprep.subr.mxu0 0.0
      %1078 = vmatpush1.msra.mxu0 0.0
      %1079 = vmatprep.subr.mxu0 0.0
      %1080 = vmatpush1.msra.mxu0 0.0
      %1081 = vmatprep.subr.mxu0 0.0
      %1082 = vmatpush1.msra.mxu0 0.0
      %1083 = vmatprep.subr.mxu0 0.0
      %1084 = vmatpush1.msra.mxu0 0.0
      %1085 = vmatprep.subr.mxu0 0.0
      %1086 = vmatpush1.msra.mxu0 0.0
      %1087 = vmatprep.subr.mxu0 0.0
      %1088 = vmatpush1.msra.mxu0 0.0
      %1089 = vmatprep.subr.mxu0 0.0
      %1090 = vmatpush1.msra.mxu0 0.0
      %1091 = vmatprep.subr.mxu0 0.0
      %1092 = vmatpush1.msra.mxu0 0.0
      %1093 = vmatprep.subr.mxu0 0.0
      %1094 = vmatpush1.msra.mxu0 0.0
      %1095 = vmatprep.subr.mxu0 0.0
      %1096 = vmatpush1.msra.mxu0 0.0
      %1097 = vmatprep.subr.mxu0 0.0
      %1098 = vmatpush1.msra.mxu0 0.0
      %1099 = vmatprep.subr.mxu0 0.0
      %1100 = vmatpush1.msra.mxu0 0.0
      %1101 = vmatprep.subr.mxu0 0.0
      %1102 = vmatpush1.msra.mxu0 0.0
      %1103 = vmatprep.subr.mxu0 0.0
      %1104 = vmatpush1.msra.mxu0 %v1071
      %1105 = vmatprep.subr.mxu0 0.0
      %1106 = vmatpush2.msra.mxu0 0.0
      %1107 = vmatprep.subr.mxu0 0.0
      %1108 = vmatpush2.msra.mxu0 0.0
      %1109 = vmatprep.subr.mxu0 0.0
      %1110 = vmatpush2.msra.mxu0 0.0
      %1111 = vmatprep.subr.mxu0 0.0
      %1112 = vmatpush2.msra.mxu0 0.0
      %1113 = vmatprep.subr.mxu0 0.0
      %1114 = vmatpush2.msra.mxu0 0.0
      %1115 = vmatprep.subr.mxu0 0.0
      %1116 = vmatpush2.msra.mxu0 0.0
      %1117 = vmatprep.subr.mxu0 0.0
      %1118 = vmatpush2.msra.mxu0 0.0
      %1119 = vmatprep.subr.mxu0 0.0
      %1120 = vmatpush2.msra.mxu0 0.0
      %1121 = vmatprep.subr.mxu0 0.0
      %1122 = vmatpush2.msra.mxu0 0.0
      %1123 = vmatprep.subr.mxu0 0.0
      %1124 = vmatpush2.msra.mxu0 0.0
      %1125 = vmatprep.subr.mxu0 0.0
      %1126 = vmatpush2.msra.mxu0 0.0
      %1127 = vmatprep.subr.mxu0 0.0
      %1128 = vmatpush2.msra.mxu0 0.0
      %1129 = vmatprep.subr.mxu0 0.0
      %1130 = vmatpush2.msra.mxu0 0.0
      %1131 = vmatprep.subr.mxu0 0.0
      %1132 = vmatpush2.msra.mxu0 0.0
      %1133 = vmatprep.subr.mxu0 0.0
      %1134 = vmatpush2.msra.mxu0 0.0
      %1135 = vmatprep.subr.mxu0 0.0
      %1136 = vmatpush2.msra.mxu0 0.0
      %1137 = vmatprep.mubr.f32.mxu0 0.0
      %1138 = vmatmul.mubr.f32.gmra.mxu0 %v1068
      %v1139 = vpop.f32.mrf.mxu0
      %v1140 = vadd.f32 0.0, %v1139
      %v1141 = vpop.f32.mrf.mxu0
      %1142 = vdwg.mxu0
      %v1143 = vadd.f32 %v985, %v1140
      %s1144 = scalar_lea.vmem %s3, 384
      %v1145 = vld [vmem:[%s1144] sm:$0xff]
      %v1146 = vld [vmem:[%s1144 + $0x8] sm:$0xff]
      %v1147 = vld [vmem:[%s1144 + $0x10] sm:$0xff]
      %v1148 = vld [vmem:[%s1144 + $0x18] sm:$0xff]
      %v1149 = vld [vmem:[%s1144 + $0x20] sm:$0xff]
      %v1150 = vld [vmem:[%s1144 + $0x28] sm:$0xff]
      %v1151 = vld [vmem:[%s1144 + $0x30] sm:$0xff]
      %v1152 = vld [vmem:[%s1144 + $0x38] sm:$0xff]
      %1153 = vmatprep.subr.mxu0 0.0
      %1154 = vmatpush1.msra.mxu0 0.0
      %1155 = vmatprep.subr.mxu0 0.0
      %1156 = vmatpush1.msra.mxu0 0.0
      %1157 = vmatprep.subr.mxu0 0.0
      %1158 = vmatpush1.msra.mxu0 0.0
      %1159 = vmatprep.subr.mxu0 0.0
      %1160 = vmatpush1.msra.mxu0 0.0
      %1161 = vmatprep.subr.mxu0 0.0
      %1162 = vmatpush1.msra.mxu0 0.0
      %1163 = vmatprep.subr.mxu0 0.0
      %1164 = vmatpush1.msra.mxu0 0.0
      %1165 = vmatprep.subr.mxu0 0.0
      %1166 = vmatpush1.msra.mxu0 0.0
      %1167 = vmatprep.subr.mxu0 0.0
      %1168 = vmatpush1.msra.mxu0 0.0
      %1169 = vmatprep.subr.mxu0 0.0
      %1170 = vmatpush1.msra.mxu0 %v1152
      %1171 = vmatprep.subr.mxu0 0.0
      %1172 = vmatpush1.msra.mxu0 %v1151
      %1173 = vmatprep.subr.mxu0 0.0
      %1174 = vmatpush1.msra.mxu0 %v1150
      %1175 = vmatprep.subr.mxu0 0.0
      %1176 = vmatpush1.msra.mxu0 %v1149
      %1177 = vmatprep.subr.mxu0 0.0
      %1178 = vmatpush1.msra.mxu0 %v1148
      %1179 = vmatprep.subr.mxu0 0.0
      %1180 = vmatpush1.msra.mxu0 %v1147
      %1181 = vmatprep.subr.mxu0 0.0
      %1182 = vmatpush1.msra.mxu0 %v1146
      %1183 = vmatprep.subr.mxu0 0.0
      %1184 = vmatpush1.msra.mxu0 %v1145
      %1185 = vmatprep.subr.mxu0 0.0
      %1186 = vmatpush2.msra.mxu0 0.0
      %1187 = vmatprep.subr.mxu0 0.0
      %1188 = vmatpush2.msra.mxu0 0.0
      %1189 = vmatprep.subr.mxu0 0.0
      %1190 = vmatpush2.msra.mxu0 0.0
      %1191 = vmatprep.subr.mxu0 0.0
      %1192 = vmatpush2.msra.mxu0 0.0
      %1193 = vmatprep.subr.mxu0 0.0
      %1194 = vmatpush2.msra.mxu0 0.0
      %1195 = vmatprep.subr.mxu0 0.0
      %1196 = vmatpush2.msra.mxu0 0.0
      %1197 = vmatprep.subr.mxu0 0.0
      %1198 = vmatpush2.msra.mxu0 0.0
      %1199 = vmatprep.subr.mxu0 0.0
      %1200 = vmatpush2.msra.mxu0 0.0
      %1201 = vmatprep.subr.mxu0 0.0
      %1202 = vmatpush2.msra.mxu0 0.0
      %1203 = vmatprep.subr.mxu0 0.0
      %1204 = vmatpush2.msra.mxu0 0.0
      %1205 = vmatprep.subr.mxu0 0.0
      %1206 = vmatpush2.msra.mxu0 0.0
      %1207 = vmatprep.subr.mxu0 0.0
      %1208 = vmatpush2.msra.mxu0 0.0
      %1209 = vmatprep.subr.mxu0 0.0
      %1210 = vmatpush2.msra.mxu0 0.0
      %1211 = vmatprep.subr.mxu0 0.0
      %1212 = vmatpush2.msra.mxu0 0.0
      %1213 = vmatprep.subr.mxu0 0.0
      %1214 = vmatpush2.msra.mxu0 0.0
      %1215 = vmatprep.subr.mxu0 0.0
      %1216 = vmatpush2.msra.mxu0 0.0
      %1217 = vmatprep.mubr.f32.mxu0 0.0
      %1218 = vmatmul.mubr.f32.gmra.mxu0 %v204
      %v1219 = vpop.f32.mrf.mxu0
      %v1220 = vadd.f32 0.0, %v1219
      %v1221 = vpop.f32.mrf.mxu0
      %1222 = vdwg.mxu0
      %s1223 = scalar_lea.vmem %s1, 48
      %v1224 = vld [vmem:[%s1223] sm:$0xff]
      %v1226 = vsel %vm358, %v1224, 0
      %v1229 = vsel %vm362, %v1220, 0
      %1231 = vmatprep.subr.mxu0 0.0
      %1232 = vmatpush1.msra.mxu0 0.0
      %1233 = vmatprep.subr.mxu0 0.0
      %1234 = vmatpush1.msra.mxu0 0.0
      %1235 = vmatprep.subr.mxu0 0.0
      %1236 = vmatpush1.msra.mxu0 0.0
      %1237 = vmatprep.subr.mxu0 0.0
      %1238 = vmatpush1.msra.mxu0 0.0
      %1239 = vmatprep.subr.mxu0 0.0
      %1240 = vmatpush1.msra.mxu0 0.0
      %1241 = vmatprep.subr.mxu0 0.0
      %1242 = vmatpush1.msra.mxu0 0.0
      %1243 = vmatprep.subr.mxu0 0.0
      %1244 = vmatpush1.msra.mxu0 0.0
      %1245 = vmatprep.subr.mxu0 0.0
      %1246 = vmatpush1.msra.mxu0 0.0
      %1247 = vmatprep.subr.mxu0 0.0
      %1248 = vmatpush1.msra.mxu0 0.0
      %1249 = vmatprep.subr.mxu0 0.0
      %1250 = vmatpush1.msra.mxu0 0.0
      %1251 = vmatprep.subr.mxu0 0.0
      %1252 = vmatpush1.msra.mxu0 0.0
      %1253 = vmatprep.subr.mxu0 0.0
      %1254 = vmatpush1.msra.mxu0 0.0
      %1255 = vmatprep.subr.mxu0 0.0
      %1256 = vmatpush1.msra.mxu0 0.0
      %1257 = vmatprep.subr.mxu0 0.0
      %1258 = vmatpush1.msra.mxu0 0.0
      %1259 = vmatprep.subr.mxu0 0.0
      %1260 = vmatpush1.msra.mxu0 0.0
      %1261 = vmatprep.subr.mxu0 0.0
      %1262 = vmatpush1.msra.mxu0 %v1229
      %1263 = vmatprep.subr.mxu0 0.0
      %1264 = vmatpush2.msra.mxu0 0.0
      %1265 = vmatprep.subr.mxu0 0.0
      %1266 = vmatpush2.msra.mxu0 0.0
      %1267 = vmatprep.subr.mxu0 0.0
      %1268 = vmatpush2.msra.mxu0 0.0
      %1269 = vmatprep.subr.mxu0 0.0
      %1270 = vmatpush2.msra.mxu0 0.0
      %1271 = vmatprep.subr.mxu0 0.0
      %1272 = vmatpush2.msra.mxu0 0.0
      %1273 = vmatprep.subr.mxu0 0.0
      %1274 = vmatpush2.msra.mxu0 0.0
      %1275 = vmatprep.subr.mxu0 0.0
      %1276 = vmatpush2.msra.mxu0 0.0
      %1277 = vmatprep.subr.mxu0 0.0
      %1278 = vmatpush2.msra.mxu0 0.0
      %1279 = vmatprep.subr.mxu0 0.0
      %1280 = vmatpush2.msra.mxu0 0.0
      %1281 = vmatprep.subr.mxu0 0.0
      %1282 = vmatpush2.msra.mxu0 0.0
      %1283 = vmatprep.subr.mxu0 0.0
      %1284 = vmatpush2.msra.mxu0 0.0
      %1285 = vmatprep.subr.mxu0 0.0
      %1286 = vmatpush2.msra.mxu0 0.0
      %1287 = vmatprep.subr.mxu0 0.0
      %1288 = vmatpush2.msra.mxu0 0.0
      %1289 = vmatprep.subr.mxu0 0.0
      %1290 = vmatpush2.msra.mxu0 0.0
      %1291 = vmatprep.subr.mxu0 0.0
      %1292 = vmatpush2.msra.mxu0 0.0
      %1293 = vmatprep.subr.mxu0 0.0
      %1294 = vmatpush2.msra.mxu0 0.0
      %1295 = vmatprep.mubr.f32.mxu0 0.0
      %1296 = vmatmul.mubr.f32.gmra.mxu0 %v1226
      %v1297 = vpop.f32.mrf.mxu0
      %v1298 = vadd.f32 0.0, %v1297
      %v1299 = vpop.f32.mrf.mxu0
      %1300 = vdwg.mxu0
      %v1301 = vadd.f32 %v1143, %v1298
      %s1302 = scalar_lea.vmem %s3, 448
      %v1303 = vld [vmem:[%s1302] sm:$0xff]
      %v1304 = vld [vmem:[%s1302 + $0x8] sm:$0xff]
      %v1305 = vld [vmem:[%s1302 + $0x10] sm:$0xff]
      %v1306 = vld [vmem:[%s1302 + $0x18] sm:$0xff]
      %v1307 = vld [vmem:[%s1302 + $0x20] sm:$0xff]
      %v1308 = vld [vmem:[%s1302 + $0x28] sm:$0xff]
      %v1309 = vld [vmem:[%s1302 + $0x30] sm:$0xff]
      %v1310 = vld [vmem:[%s1302 + $0x38] sm:$0xff]
      %1311 = vmatprep.subr.mxu0 0.0
      %1312 = vmatpush1.msra.mxu0 0.0
      %1313 = vmatprep.subr.mxu0 0.0
      %1314 = vmatpush1.msra.mxu0 0.0
      %1315 = vmatprep.subr.mxu0 0.0
      %1316 = vmatpush1.msra.mxu0 0.0
      %1317 = vmatprep.subr.mxu0 0.0
      %1318 = vmatpush1.msra.mxu0 0.0
      %1319 = vmatprep.subr.mxu0 0.0
      %1320 = vmatpush1.msra.mxu0 0.0
      %1321 = vmatprep.subr.mxu0 0.0
      %1322 = vmatpush1.msra.mxu0 0.0
      %1323 = vmatprep.subr.mxu0 0.0
      %1324 = vmatpush1.msra.mxu0 0.0
      %1325 = vmatprep.subr.mxu0 0.0
      %1326 = vmatpush1.msra.mxu0 0.0
      %1327 = vmatprep.subr.mxu0 0.0
      %1328 = vmatpush1.msra.mxu0 %v1310
      %1329 = vmatprep.subr.mxu0 0.0
      %1330 = vmatpush1.msra.mxu0 %v1309
      %1331 = vmatprep.subr.mxu0 0.0
      %1332 = vmatpush1.msra.mxu0 %v1308
      %1333 = vmatprep.subr.mxu0 0.0
      %1334 = vmatpush1.msra.mxu0 %v1307
      %1335 = vmatprep.subr.mxu0 0.0
      %1336 = vmatpush1.msra.mxu0 %v1306
      %1337 = vmatprep.subr.mxu0 0.0
      %1338 = vmatpush1.msra.mxu0 %v1305
      %1339 = vmatprep.subr.mxu0 0.0
      %1340 = vmatpush1.msra.mxu0 %v1304
      %1341 = vmatprep.subr.mxu0 0.0
      %1342 = vmatpush1.msra.mxu0 %v1303
      %1343 = vmatprep.subr.mxu0 0.0
      %1344 = vmatpush2.msra.mxu0 0.0
      %1345 = vmatprep.subr.mxu0 0.0
      %1346 = vmatpush2.msra.mxu0 0.0
      %1347 = vmatprep.subr.mxu0 0.0
      %1348 = vmatpush2.msra.mxu0 0.0
      %1349 = vmatprep.subr.mxu0 0.0
      %1350 = vmatpush2.msra.mxu0 0.0
      %1351 = vmatprep.subr.mxu0 0.0
      %1352 = vmatpush2.msra.mxu0 0.0
      %1353 = vmatprep.subr.mxu0 0.0
      %1354 = vmatpush2.msra.mxu0 0.0
      %1355 = vmatprep.subr.mxu0 0.0
      %1356 = vmatpush2.msra.mxu0 0.0
      %1357 = vmatprep.subr.mxu0 0.0
      %1358 = vmatpush2.msra.mxu0 0.0
      %1359 = vmatprep.subr.mxu0 0.0
      %1360 = vmatpush2.msra.mxu0 0.0
      %1361 = vmatprep.subr.mxu0 0.0
      %1362 = vmatpush2.msra.mxu0 0.0
      %1363 = vmatprep.subr.mxu0 0.0
      %1364 = vmatpush2.msra.mxu0 0.0
      %1365 = vmatprep.subr.mxu0 0.0
      %1366 = vmatpush2.msra.mxu0 0.0
      %1367 = vmatprep.subr.mxu0 0.0
      %1368 = vmatpush2.msra.mxu0 0.0
      %1369 = vmatprep.subr.mxu0 0.0
      %1370 = vmatpush2.msra.mxu0 0.0
      %1371 = vmatprep.subr.mxu0 0.0
      %1372 = vmatpush2.msra.mxu0 0.0
      %1373 = vmatprep.subr.mxu0 0.0
      %1374 = vmatpush2.msra.mxu0 0.0
      %1375 = vmatprep.mubr.f32.mxu0 0.0
      %1376 = vmatmul.mubr.f32.gmra.mxu0 %v204
      %v1377 = vpop.f32.mrf.mxu0
      %v1378 = vadd.f32 0.0, %v1377
      %v1379 = vpop.f32.mrf.mxu0
      %1380 = vdwg.mxu0
      %s1381 = scalar_lea.vmem %s1, 56
      %v1382 = vld [vmem:[%s1381] sm:$0xff]
      %v1384 = vsel %vm358, %v1382, 0
      %v1387 = vsel %vm362, %v1378, 0
      %1389 = vmatprep.subr.mxu0 0.0
      %1390 = vmatpush1.msra.mxu0 0.0
      %1391 = vmatprep.subr.mxu0 0.0
      %1392 = vmatpush1.msra.mxu0 0.0
      %1393 = vmatprep.subr.mxu0 0.0
      %1394 = vmatpush1.msra.mxu0 0.0
      %1395 = vmatprep.subr.mxu0 0.0
      %1396 = vmatpush1.msra.mxu0 0.0
      %1397 = vmatprep.subr.mxu0 0.0
      %1398 = vmatpush1.msra.mxu0 0.0
      %1399 = vmatprep.subr.mxu0 0.0
      %1400 = vmatpush1.msra.mxu0 0.0
      %1401 = vmatprep.subr.mxu0 0.0
      %1402 = vmatpush1.msra.mxu0 0.0
      %1403 = vmatprep.subr.mxu0 0.0
      %1404 = vmatpush1.msra.mxu0 0.0
      %1405 = vmatprep.subr.mxu0 0.0
      %1406 = vmatpush1.msra.mxu0 0.0
      %1407 = vmatprep.subr.mxu0 0.0
      %1408 = vmatpush1.msra.mxu0 0.0
      %1409 = vmatprep.subr.mxu0 0.0
      %1410 = vmatpush1.msra.mxu0 0.0
      %1411 = vmatprep.subr.mxu0 0.0
      %1412 = vmatpush1.msra.mxu0 0.0
      %1413 = vmatprep.subr.mxu0 0.0
      %1414 = vmatpush1.msra.mxu0 0.0
      %1415 = vmatprep.subr.mxu0 0.0
      %1416 = vmatpush1.msra.mxu0 0.0
      %1417 = vmatprep.subr.mxu0 0.0
      %1418 = vmatpush1.msra.mxu0 0.0
      %1419 = vmatprep.subr.mxu0 0.0
      %1420 = vmatpush1.msra.mxu0 %v1387
      %1421 = vmatprep.subr.mxu0 0.0
      %1422 = vmatpush2.msra.mxu0 0.0
      %1423 = vmatprep.subr.mxu0 0.0
      %1424 = vmatpush2.msra.mxu0 0.0
      %1425 = vmatprep.subr.mxu0 0.0
      %1426 = vmatpush2.msra.mxu0 0.0
      %1427 = vmatprep.subr.mxu0 0.0
      %1428 = vmatpush2.msra.mxu0 0.0
      %1429 = vmatprep.subr.mxu0 0.0
      %1430 = vmatpush2.msra.mxu0 0.0
      %1431 = vmatprep.subr.mxu0 0.0
      %1432 = vmatpush2.msra.mxu0 0.0
      %1433 = vmatprep.subr.mxu0 0.0
      %1434 = vmatpush2.msra.mxu0 0.0
      %1435 = vmatprep.subr.mxu0 0.0
      %1436 = vmatpush2.msra.mxu0 0.0
      %1437 = vmatprep.subr.mxu0 0.0
      %1438 = vmatpush2.msra.mxu0 0.0
      %1439 = vmatprep.subr.mxu0 0.0
      %1440 = vmatpush2.msra.mxu0 0.0
      %1441 = vmatprep.subr.mxu0 0.0
      %1442 = vmatpush2.msra.mxu0 0.0
      %1443 = vmatprep.subr.mxu0 0.0
      %1444 = vmatpush2.msra.mxu0 0.0
      %1445 = vmatprep.subr.mxu0 0.0
      %1446 = vmatpush2.msra.mxu0 0.0
      %1447 = vmatprep.subr.mxu0 0.0
      %1448 = vmatpush2.msra.mxu0 0.0
      %1449 = vmatprep.subr.mxu0 0.0
      %1450 = vmatpush2.msra.mxu0 0.0
      %1451 = vmatprep.subr.mxu0 0.0
      %1452 = vmatpush2.msra.mxu0 0.0
      %1453 = vmatprep.mubr.f32.mxu0 0.0
      %1454 = vmatmul.mubr.f32.gmra.mxu0 %v1384
      %v1455 = vpop.f32.mrf.mxu0
      %v1456 = vadd.f32 0.0, %v1455
      %v1457 = vpop.f32.mrf.mxu0
      %1458 = vdwg.mxu0
      %v1459 = vadd.f32 %v1301, %v1456
      %s1460 = scalar_lea.vmem %s3, 512
      %v1461 = vld [vmem:[%s1460] sm:$0xff]
      %v1462 = vld [vmem:[%s1460 + $0x8] sm:$0xff]
      %v1463 = vld [vmem:[%s1460 + $0x10] sm:$0xff]
      %v1464 = vld [vmem:[%s1460 + $0x18] sm:$0xff]
      %v1465 = vld [vmem:[%s1460 + $0x20] sm:$0xff]
      %v1466 = vld [vmem:[%s1460 + $0x28] sm:$0xff]
      %v1467 = vld [vmem:[%s1460 + $0x30] sm:$0xff]
      %v1468 = vld [vmem:[%s1460 + $0x38] sm:$0xff]
      %1469 = vmatprep.subr.mxu0 0.0
      %1470 = vmatpush1.msra.mxu0 0.0
      %1471 = vmatprep.subr.mxu0 0.0
      %1472 = vmatpush1.msra.mxu0 0.0
      %1473 = vmatprep.subr.mxu0 0.0
      %1474 = vmatpush1.msra.mxu0 0.0
      %1475 = vmatprep.subr.mxu0 0.0
      %1476 = vmatpush1.msra.mxu0 0.0
      %1477 = vmatprep.subr.mxu0 0.0
      %1478 = vmatpush1.msra.mxu0 0.0
      %1479 = vmatprep.subr.mxu0 0.0
      %1480 = vmatpush1.msra.mxu0 0.0
      %1481 = vmatprep.subr.mxu0 0.0
      %1482 = vmatpush1.msra.mxu0 0.0
      %1483 = vmatprep.subr.mxu0 0.0
      %1484 = vmatpush1.msra.mxu0 0.0
      %1485 = vmatprep.subr.mxu0 0.0
      %1486 = vmatpush1.msra.mxu0 %v1468
      %1487 = vmatprep.subr.mxu0 0.0
      %1488 = vmatpush1.msra.mxu0 %v1467
      %1489 = vmatprep.subr.mxu0 0.0
      %1490 = vmatpush1.msra.mxu0 %v1466
      %1491 = vmatprep.subr.mxu0 0.0
      %1492 = vmatpush1.msra.mxu0 %v1465
      %1493 = vmatprep.subr.mxu0 0.0
      %1494 = vmatpush1.msra.mxu0 %v1464
      %1495 = vmatprep.subr.mxu0 0.0
      %1496 = vmatpush1.msra.mxu0 %v1463
      %1497 = vmatprep.subr.mxu0 0.0
      %1498 = vmatpush1.msra.mxu0 %v1462
      %1499 = vmatprep.subr.mxu0 0.0
      %1500 = vmatpush1.msra.mxu0 %v1461
      %1501 = vmatprep.subr.mxu0 0.0
      %1502 = vmatpush2.msra.mxu0 0.0
      %1503 = vmatprep.subr.mxu0 0.0
      %1504 = vmatpush2.msra.mxu0 0.0
      %1505 = vmatprep.subr.mxu0 0.0
      %1506 = vmatpush2.msra.mxu0 0.0
      %1507 = vmatprep.subr.mxu0 0.0
      %1508 = vmatpush2.msra.mxu0 0.0
      %1509 = vmatprep.subr.mxu0 0.0
      %1510 = vmatpush2.msra.mxu0 0.0
      %1511 = vmatprep.subr.mxu0 0.0
      %1512 = vmatpush2.msra.mxu0 0.0
      %1513 = vmatprep.subr.mxu0 0.0
      %1514 = vmatpush2.msra.mxu0 0.0
      %1515 = vmatprep.subr.mxu0 0.0
      %1516 = vmatpush2.msra.mxu0 0.0
      %1517 = vmatprep.subr.mxu0 0.0
      %1518 = vmatpush2.msra.mxu0 0.0
      %1519 = vmatprep.subr.mxu0 0.0
      %1520 = vmatpush2.msra.mxu0 0.0
      %1521 = vmatprep.subr.mxu0 0.0
      %1522 = vmatpush2.msra.mxu0 0.0
      %1523 = vmatprep.subr.mxu0 0.0
      %1524 = vmatpush2.msra.mxu0 0.0
      %1525 = vmatprep.subr.mxu0 0.0
      %1526 = vmatpush2.msra.mxu0 0.0
      %1527 = vmatprep.subr.mxu0 0.0
      %1528 = vmatpush2.msra.mxu0 0.0
      %1529 = vmatprep.subr.mxu0 0.0
      %1530 = vmatpush2.msra.mxu0 0.0
      %1531 = vmatprep.subr.mxu0 0.0
      %1532 = vmatpush2.msra.mxu0 0.0
      %1533 = vmatprep.mubr.f32.mxu0 0.0
      %1534 = vmatmul.mubr.f32.gmra.mxu0 %v204
      %v1535 = vpop.f32.mrf.mxu0
      %v1536 = vadd.f32 0.0, %v1535
      %v1537 = vpop.f32.mrf.mxu0
      %1538 = vdwg.mxu0
      %s1539 = scalar_lea.vmem %s1, 64
      %v1540 = vld [vmem:[%s1539] sm:$0xff]
      %v1542 = vsel %vm358, %v1540, 0
      %v1545 = vsel %vm362, %v1536, 0
      %1547 = vmatprep.subr.mxu0 0.0
      %1548 = vmatpush1.msra.mxu0 0.0
      %1549 = vmatprep.subr.mxu0 0.0
      %1550 = vmatpush1.msra.mxu0 0.0
      %1551 = vmatprep.subr.mxu0 0.0
      %1552 = vmatpush1.msra.mxu0 0.0
      %1553 = vmatprep.subr.mxu0 0.0
      %1554 = vmatpush1.msra.mxu0 0.0
      %1555 = vmatprep.subr.mxu0 0.0
      %1556 = vmatpush1.msra.mxu0 0.0
      %1557 = vmatprep.subr.mxu0 0.0
      %1558 = vmatpush1.msra.mxu0 0.0
      %1559 = vmatprep.subr.mxu0 0.0
      %1560 = vmatpush1.msra.mxu0 0.0
      %1561 = vmatprep.subr.mxu0 0.0
      %1562 = vmatpush1.msra.mxu0 0.0
      %1563 = vmatprep.subr.mxu0 0.0
      %1564 = vmatpush1.msra.mxu0 0.0
      %1565 = vmatprep.subr.mxu0 0.0
      %1566 = vmatpush1.msra.mxu0 0.0
      %1567 = vmatprep.subr.mxu0 0.0
      %1568 = vmatpush1.msra.mxu0 0.0
      %1569 = vmatprep.subr.mxu0 0.0
      %1570 = vmatpush1.msra.mxu0 0.0
      %1571 = vmatprep.subr.mxu0 0.0
      %1572 = vmatpush1.msra.mxu0 0.0
      %1573 = vmatprep.subr.mxu0 0.0
      %1574 = vmatpush1.msra.mxu0 0.0
      %1575 = vmatprep.subr.mxu0 0.0
      %1576 = vmatpush1.msra.mxu0 0.0
      %1577 = vmatprep.subr.mxu0 0.0
      %1578 = vmatpush1.msra.mxu0 %v1545
      %1579 = vmatprep.subr.mxu0 0.0
      %1580 = vmatpush2.msra.mxu0 0.0
      %1581 = vmatprep.subr.mxu0 0.0
      %1582 = vmatpush2.msra.mxu0 0.0
      %1583 = vmatprep.subr.mxu0 0.0
      %1584 = vmatpush2.msra.mxu0 0.0
      %1585 = vmatprep.subr.mxu0 0.0
      %1586 = vmatpush2.msra.mxu0 0.0
      %1587 = vmatprep.subr.mxu0 0.0
      %1588 = vmatpush2.msra.mxu0 0.0
      %1589 = vmatprep.subr.mxu0 0.0
      %1590 = vmatpush2.msra.mxu0 0.0
      %1591 = vmatprep.subr.mxu0 0.0
      %1592 = vmatpush2.msra.mxu0 0.0
      %1593 = vmatprep.subr.mxu0 0.0
      %1594 = vmatpush2.msra.mxu0 0.0
      %1595 = vmatprep.subr.mxu0 0.0
      %1596 = vmatpush2.msra.mxu0 0.0
      %1597 = vmatprep.subr.mxu0 0.0
      %1598 = vmatpush2.msra.mxu0 0.0
      %1599 = vmatprep.subr.mxu0 0.0
      %1600 = vmatpush2.msra.mxu0 0.0
      %1601 = vmatprep.subr.mxu0 0.0
      %1602 = vmatpush2.msra.mxu0 0.0
      %1603 = vmatprep.subr.mxu0 0.0
      %1604 = vmatpush2.msra.mxu0 0.0
      %1605 = vmatprep.subr.mxu0 0.0
      %1606 = vmatpush2.msra.mxu0 0.0
      %1607 = vmatprep.subr.mxu0 0.0
      %1608 = vmatpush2.msra.mxu0 0.0
      %1609 = vmatprep.subr.mxu0 0.0
      %1610 = vmatpush2.msra.mxu0 0.0
      %1611 = vmatprep.mubr.f32.mxu0 0.0
      %1612 = vmatmul.mubr.f32.gmra.mxu0 %v1542
      %v1613 = vpop.f32.mrf.mxu0
      %v1614 = vadd.f32 0.0, %v1613
      %v1615 = vpop.f32.mrf.mxu0
      %1616 = vdwg.mxu0
      %v1617 = vadd.f32 %v1459, %v1614
      %v1618 = vsel %vm202, %v1617, 0.0
      %1619 = vadd.xlane.f32.xlu0 %v1618
      %v1620 = vpop.xlane.xlu0 %1619
      %v1621 = vrcp.pop 64.0
      %v1622 = vmul.f32 %v1620, %v1621
      %v1623 = vsub.f32 %v1617, %v1622
      %v1624 = vmul.f32 %v1623, %v1623
      %v1625 = vsel %vm202, %v1624, 0.0
      %1626 = vadd.xlane.f32.xlu0 %v1625
      %v1627 = vpop.xlane.xlu0 %1626
      %v1628 = vmul.f32 %v1627, %v1621
      %v1629 = vadd.f32 %v1628, 1e-05
      %v1630 = vrsqrt.pop %v1629
      %v1631 = vmul.f32 %v1623, %v1630
      %v1632 = vmax.f32 %v1631, 0.0
      %v1634 = vsel %vm202, %v1632, 0
      %1636 = vmatprep.subr.mxu0 0.0
      %1637 = vmatpush1.msra.mxu0 0.0
      %1638 = vmatprep.subr.mxu0 0.0
      %1639 = vmatpush1.msra.mxu0 0.0
      %1640 = vmatprep.subr.mxu0 0.0
      %1641 = vmatpush1.msra.mxu0 0.0
      %1642 = vmatprep.subr.mxu0 0.0
      %1643 = vmatpush1.msra.mxu0 0.0
      %1644 = vmatprep.subr.mxu0 0.0
      %1645 = vmatpush1.msra.mxu0 0.0
      %1646 = vmatprep.subr.mxu0 0.0
      %1647 = vmatpush1.msra.mxu0 0.0
      %1648 = vmatprep.subr.mxu0 0.0
      %1649 = vmatpush1.msra.mxu0 0.0
      %1650 = vmatprep.subr.mxu0 0.0
      %1651 = vmatpush1.msra.mxu0 0.0
      %1652 = vmatprep.subr.mxu0 0.0
      %1653 = vmatpush1.msra.mxu0 %v201
      %1654 = vmatprep.subr.mxu0 0.0
      %1655 = vmatpush1.msra.mxu0 %v200
      %1656 = vmatprep.subr.mxu0 0.0
      %1657 = vmatpush1.msra.mxu0 %v199
      %1658 = vmatprep.subr.mxu0 0.0
      %1659 = vmatpush1.msra.mxu0 %v198
      %1660 = vmatprep.subr.mxu0 0.0
      %1661 = vmatpush1.msra.mxu0 %v197
      %1662 = vmatprep.subr.mxu0 0.0
      %1663 = vmatpush1.msra.mxu0 %v196
      %1664 = vmatprep.subr.mxu0 0.0
      %1665 = vmatpush1.msra.mxu0 %v195
      %1666 = vmatprep.subr.mxu0 0.0
      %1667 = vmatpush1.msra.mxu0 %v194
      %1668 = vmatprep.subr.mxu0 0.0
      %1669 = vmatpush2.msra.mxu0 0.0
      %1670 = vmatprep.subr.mxu0 0.0
      %1671 = vmatpush2.msra.mxu0 0.0
      %1672 = vmatprep.subr.mxu0 0.0
      %1673 = vmatpush2.msra.mxu0 0.0
      %1674 = vmatprep.subr.mxu0 0.0
      %1675 = vmatpush2.msra.mxu0 0.0
      %1676 = vmatprep.subr.mxu0 0.0
      %1677 = vmatpush2.msra.mxu0 0.0
      %1678 = vmatprep.subr.mxu0 0.0
      %1679 = vmatpush2.msra.mxu0 0.0
      %1680 = vmatprep.subr.mxu0 0.0
      %1681 = vmatpush2.msra.mxu0 0.0
      %1682 = vmatprep.subr.mxu0 0.0
      %1683 = vmatpush2.msra.mxu0 0.0
      %1684 = vmatprep.subr.mxu0 0.0
      %1685 = vmatpush2.msra.mxu0 0.0
      %1686 = vmatprep.subr.mxu0 0.0
      %1687 = vmatpush2.msra.mxu0 0.0
      %1688 = vmatprep.subr.mxu0 0.0
      %1689 = vmatpush2.msra.mxu0 0.0
      %1690 = vmatprep.subr.mxu0 0.0
      %1691 = vmatpush2.msra.mxu0 0.0
      %1692 = vmatprep.subr.mxu0 0.0
      %1693 = vmatpush2.msra.mxu0 0.0
      %1694 = vmatprep.subr.mxu0 0.0
      %1695 = vmatpush2.msra.mxu0 0.0
      %1696 = vmatprep.subr.mxu0 0.0
      %1697 = vmatpush2.msra.mxu0 0.0
      %1698 = vmatprep.subr.mxu0 0.0
      %1699 = vmatpush2.msra.mxu0 0.0
      %1700 = vmatprep.mubr.f32.mxu0 0.0
      %1701 = vmatmul.mubr.f32.gmra.mxu0 %v1634
      %v1702 = vpop.f32.mrf.mxu0
      %v1703 = vadd.f32 0.0, %v1702
      %v1704 = vpop.f32.mrf.mxu0
      %1705 = vdwg.mxu0
      %v1706 = vld [vmem:[%s2] sm:$0xff]
      %1707 = vmatprep.subr.mxu0 0.0
      %1708 = vmatpush1.msra.mxu0 0.0
      %1709 = vmatprep.subr.mxu0 0.0
      %1710 = vmatpush1.msra.mxu0 0.0
      %1711 = vmatprep.subr.mxu0 0.0
      %1712 = vmatpush1.msra.mxu0 0.0
      %1713 = vmatprep.subr.mxu0 0.0
      %1714 = vmatpush1.msra.mxu0 0.0
      %1715 = vmatprep.subr.mxu0 0.0
      %1716 = vmatpush1.msra.mxu0 0.0
      %1717 = vmatprep.subr.mxu0 0.0
      %1718 = vmatpush1.msra.mxu0 0.0
      %1719 = vmatprep.subr.mxu0 0.0
      %1720 = vmatpush1.msra.mxu0 0.0
      %1721 = vmatprep.subr.mxu0 0.0
      %1722 = vmatpush1.msra.mxu0 0.0
      %1723 = vmatprep.subr.mxu0 0.0
      %1724 = vmatpush1.msra.mxu0 %v285
      %1725 = vmatprep.subr.mxu0 0.0
      %1726 = vmatpush1.msra.mxu0 %v284
      %1727 = vmatprep.subr.mxu0 0.0
      %1728 = vmatpush1.msra.mxu0 %v283
      %1729 = vmatprep.subr.mxu0 0.0
      %1730 = vmatpush1.msra.mxu0 %v282
      %1731 = vmatprep.subr.mxu0 0.0
      %1732 = vmatpush1.msra.mxu0 %v281
      %1733 = vmatprep.subr.mxu0 0.0
      %1734 = vmatpush1.msra.mxu0 %v280
      %1735 = vmatprep.subr.mxu0 0.0
      %1736 = vmatpush1.msra.mxu0 %v279
      %1737 = vmatprep.subr.mxu0 0.0
      %1738 = vmatpush1.msra.mxu0 %v278
      %1739 = vmatprep.subr.mxu0 0.0
      %1740 = vmatpush2.msra.mxu0 0.0
      %1741 = vmatprep.subr.mxu0 0.0
      %1742 = vmatpush2.msra.mxu0 0.0
      %1743 = vmatprep.subr.mxu0 0.0
      %1744 = vmatpush2.msra.mxu0 0.0
      %1745 = vmatprep.subr.mxu0 0.0
      %1746 = vmatpush2.msra.mxu0 0.0
      %1747 = vmatprep.subr.mxu0 0.0
      %1748 = vmatpush2.msra.mxu0 0.0
      %1749 = vmatprep.subr.mxu0 0.0
      %1750 = vmatpush2.msra.mxu0 0.0
      %1751 = vmatprep.subr.mxu0 0.0
      %1752 = vmatpush2.msra.mxu0 0.0
      %1753 = vmatprep.subr.mxu0 0.0
      %1754 = vmatpush2.msra.mxu0 0.0
      %1755 = vmatprep.subr.mxu0 0.0
      %1756 = vmatpush2.msra.mxu0 0.0
      %1757 = vmatprep.subr.mxu0 0.0
      %1758 = vmatpush2.msra.mxu0 0.0
      %1759 = vmatprep.subr.mxu0 0.0
      %1760 = vmatpush2.msra.mxu0 0.0
      %1761 = vmatprep.subr.mxu0 0.0
      %1762 = vmatpush2.msra.mxu0 0.0
      %1763 = vmatprep.subr.mxu0 0.0
      %1764 = vmatpush2.msra.mxu0 0.0
      %1765 = vmatprep.subr.mxu0 0.0
      %1766 = vmatpush2.msra.mxu0 0.0
      %1767 = vmatprep.subr.mxu0 0.0
      %1768 = vmatpush2.msra.mxu0 0.0
      %1769 = vmatprep.subr.mxu0 0.0
      %1770 = vmatpush2.msra.mxu0 0.0
      %1771 = vmatprep.mubr.f32.mxu0 0.0
      %1772 = vmatmul.mubr.f32.gmra.mxu0 %v1634
      %v1773 = vpop.f32.mrf.mxu0
      %v1774 = vadd.f32 0.0, %v1773
      %v1775 = vpop.f32.mrf.mxu0
      %1776 = vdwg.mxu0
      %s1777 = scalar_lea.vmem %s2, 8
      %v1778 = vld [vmem:[%s1777] sm:$0xff]
      %vm1779 = vcmask 64512
      %v1781 = vsel %vm1779, %v1778, 0
      %1783 = vmatprep.subr.mxu0 0.0
      %1784 = vmatpush1.msra.mxu0 0.0
      %1785 = vmatprep.subr.mxu0 0.0
      %1786 = vmatpush1.msra.mxu0 0.0
      %1787 = vmatprep.subr.mxu0 0.0
      %1788 = vmatpush1.msra.mxu0 0.0
      %1789 = vmatprep.subr.mxu0 0.0
      %1790 = vmatpush1.msra.mxu0 0.0
      %1791 = vmatprep.subr.mxu0 0.0
      %1792 = vmatpush1.msra.mxu0 0.0
      %1793 = vmatprep.subr.mxu0 0.0
      %1794 = vmatpush1.msra.mxu0 0.0
      %1795 = vmatprep.subr.mxu0 0.0
      %1796 = vmatpush1.msra.mxu0 0.0
      %1797 = vmatprep.subr.mxu0 0.0
      %1798 = vmatpush1.msra.mxu0 0.0
      %1799 = vmatprep.subr.mxu0 0.0
      %1800 = vmatpush1.msra.mxu0 0.0
      %1801 = vmatprep.subr.mxu0 0.0
      %1802 = vmatpush1.msra.mxu0 0.0
      %1803 = vmatprep.subr.mxu0 0.0
      %1804 = vmatpush1.msra.mxu0 0.0
      %1805 = vmatprep.subr.mxu0 0.0
      %1806 = vmatpush1.msra.mxu0 0.0
      %1807 = vmatprep.subr.mxu0 0.0
      %1808 = vmatpush1.msra.mxu0 0.0
      %1809 = vmatprep.subr.mxu0 0.0
      %1810 = vmatpush1.msra.mxu0 0.0
      %1811 = vmatprep.subr.mxu0 0.0
      %1812 = vmatpush1.msra.mxu0 0.0
      %1813 = vmatprep.subr.mxu0 0.0
      %1814 = vmatpush1.msra.mxu0 %v1774
      %1815 = vmatprep.subr.mxu0 0.0
      %1816 = vmatpush2.msra.mxu0 0.0
      %1817 = vmatprep.subr.mxu0 0.0
      %1818 = vmatpush2.msra.mxu0 0.0
      %1819 = vmatprep.subr.mxu0 0.0
      %1820 = vmatpush2.msra.mxu0 0.0
      %1821 = vmatprep.subr.mxu0 0.0
      %1822 = vmatpush2.msra.mxu0 0.0
      %1823 = vmatprep.subr.mxu0 0.0
      %1824 = vmatpush2.msra.mxu0 0.0
      %1825 = vmatprep.subr.mxu0 0.0
      %1826 = vmatpush2.msra.mxu0 0.0
      %1827 = vmatprep.subr.mxu0 0.0
      %1828 = vmatpush2.msra.mxu0 0.0
      %1829 = vmatprep.subr.mxu0 0.0
      %1830 = vmatpush2.msra.mxu0 0.0
      %1831 = vmatprep.subr.mxu0 0.0
      %1832 = vmatpush2.msra.mxu0 0.0
      %1833 = vmatprep.subr.mxu0 0.0
      %1834 = vmatpush2.msra.mxu0 0.0
      %1835 = vmatprep.subr.mxu0 0.0
      %1836 = vmatpush2.msra.mxu0 0.0
      %1837 = vmatprep.subr.mxu0 0.0
      %1838 = vmatpush2.msra.mxu0 0.0
      %1839 = vmatprep.subr.mxu0 0.0
      %1840 = vmatpush2.msra.mxu0 0.0
      %1841 = vmatprep.subr.mxu0 0.0
      %1842 = vmatpush2.msra.mxu0 0.0
      %1843 = vmatprep.subr.mxu0 0.0
      %1844 = vmatpush2.msra.mxu0 0.0
      %1845 = vmatprep.subr.mxu0 0.0
      %1846 = vmatpush2.msra.mxu0 0.0
      %1847 = vmatprep.mubr.f32.mxu0 0.0
      %1848 = vmatmul.mubr.f32.gmra.mxu0 %v1781
      %v1849 = vpop.f32.mrf.mxu0
      %v1850 = vadd.f32 0.0, %v1849
      %v1851 = vpop.f32.mrf.mxu0
      %1852 = vdwg.mxu0
      %v1854 = vsel %vm1779, %v1706, 0
      %1856 = vmatprep.subr.mxu0 0.0
      %1857 = vmatpush1.msra.mxu0 0.0
      %1858 = vmatprep.subr.mxu0 0.0
      %1859 = vmatpush1.msra.mxu0 0.0
      %1860 = vmatprep.subr.mxu0 0.0
      %1861 = vmatpush1.msra.mxu0 0.0
      %1862 = vmatprep.subr.mxu0 0.0
      %1863 = vmatpush1.msra.mxu0 0.0
      %1864 = vmatprep.subr.mxu0 0.0
      %1865 = vmatpush1.msra.mxu0 0.0
      %1866 = vmatprep.subr.mxu0 0.0
      %1867 = vmatpush1.msra.mxu0 0.0
      %1868 = vmatprep.subr.mxu0 0.0
      %1869 = vmatpush1.msra.mxu0 0.0
      %1870 = vmatprep.subr.mxu0 0.0
      %1871 = vmatpush1.msra.mxu0 0.0
      %1872 = vmatprep.subr.mxu0 0.0
      %1873 = vmatpush1.msra.mxu0 0.0
      %1874 = vmatprep.subr.mxu0 0.0
      %1875 = vmatpush1.msra.mxu0 0.0
      %1876 = vmatprep.subr.mxu0 0.0
      %1877 = vmatpush1.msra.mxu0 0.0
      %1878 = vmatprep.subr.mxu0 0.0
      %1879 = vmatpush1.msra.mxu0 0.0
      %1880 = vmatprep.subr.mxu0 0.0
      %1881 = vmatpush1.msra.mxu0 0.0
      %1882 = vmatprep.subr.mxu0 0.0
      %1883 = vmatpush1.msra.mxu0 0.0
      %1884 = vmatprep.subr.mxu0 0.0
      %1885 = vmatpush1.msra.mxu0 0.0
      %1886 = vmatprep.subr.mxu0 0.0
      %1887 = vmatpush1.msra.mxu0 %v1703
      %1888 = vmatprep.subr.mxu0 0.0
      %1889 = vmatpush2.msra.mxu0 0.0
      %1890 = vmatprep.subr.mxu0 0.0
      %1891 = vmatpush2.msra.mxu0 0.0
      %1892 = vmatprep.subr.mxu0 0.0
      %1893 = vmatpush2.msra.mxu0 0.0
      %1894 = vmatprep.subr.mxu0 0.0
      %1895 = vmatpush2.msra.mxu0 0.0
      %1896 = vmatprep.subr.mxu0 0.0
      %1897 = vmatpush2.msra.mxu0 0.0
      %1898 = vmatprep.subr.mxu0 0.0
      %1899 = vmatpush2.msra.mxu0 0.0
      %1900 = vmatprep.subr.mxu0 0.0
      %1901 = vmatpush2.msra.mxu0 0.0
      %1902 = vmatprep.subr.mxu0 0.0
      %1903 = vmatpush2.msra.mxu0 0.0
      %1904 = vmatprep.subr.mxu0 0.0
      %1905 = vmatpush2.msra.mxu0 0.0
      %1906 = vmatprep.subr.mxu0 0.0
      %1907 = vmatpush2.msra.mxu0 0.0
      %1908 = vmatprep.subr.mxu0 0.0
      %1909 = vmatpush2.msra.mxu0 0.0
      %1910 = vmatprep.subr.mxu0 0.0
      %1911 = vmatpush2.msra.mxu0 0.0
      %1912 = vmatprep.subr.mxu0 0.0
      %1913 = vmatpush2.msra.mxu0 0.0
      %1914 = vmatprep.subr.mxu0 0.0
      %1915 = vmatpush2.msra.mxu0 0.0
      %1916 = vmatprep.subr.mxu0 0.0
      %1917 = vmatpush2.msra.mxu0 0.0
      %1918 = vmatprep.subr.mxu0 0.0
      %1919 = vmatpush2.msra.mxu0 0.0
      %1920 = vmatprep.mubr.f32.mxu0 0.0
      %1921 = vmatmul.mubr.f32.gmra.mxu0 %v1854
      %v1922 = vpop.f32.mrf.mxu0
      %v1923 = vadd.f32 %v1850, %v1922
      %v1924 = vpop.f32.mrf.mxu0
      %1925 = vdwg.mxu0
      %1926 = vmatprep.subr.mxu0 0.0
      %1927 = vmatpush1.msra.mxu0 0.0
      %1928 = vmatprep.subr.mxu0 0.0
      %1929 = vmatpush1.msra.mxu0 0.0
      %1930 = vmatprep.subr.mxu0 0.0
      %1931 = vmatpush1.msra.mxu0 0.0
      %1932 = vmatprep.subr.mxu0 0.0
      %1933 = vmatpush1.msra.mxu0 0.0
      %1934 = vmatprep.subr.mxu0 0.0
      %1935 = vmatpush1.msra.mxu0 0.0
      %1936 = vmatprep.subr.mxu0 0.0
      %1937 = vmatpush1.msra.mxu0 0.0
      %1938 = vmatprep.subr.mxu0 0.0
      %1939 = vmatpush1.msra.mxu0 0.0
      %1940 = vmatprep.subr.mxu0 0.0
      %1941 = vmatpush1.msra.mxu0 0.0
      %1942 = vmatprep.subr.mxu0 0.0
      %1943 = vmatpush1.msra.mxu0 %v520
      %1944 = vmatprep.subr.mxu0 0.0
      %1945 = vmatpush1.msra.mxu0 %v519
      %1946 = vmatprep.subr.mxu0 0.0
      %1947 = vmatpush1.msra.mxu0 %v518
      %1948 = vmatprep.subr.mxu0 0.0
      %1949 = vmatpush1.msra.mxu0 %v517
      %1950 = vmatprep.subr.mxu0 0.0
      %1951 = vmatpush1.msra.mxu0 %v516
      %1952 = vmatprep.subr.mxu0 0.0
      %1953 = vmatpush1.msra.mxu0 %v515
      %1954 = vmatprep.subr.mxu0 0.0
      %1955 = vmatpush1.msra.mxu0 %v514
      %1956 = vmatprep.subr.mxu0 0.0
      %1957 = vmatpush1.msra.mxu0 %v513
      %1958 = vmatprep.subr.mxu0 0.0
      %1959 = vmatpush2.msra.mxu0 0.0
      %1960 = vmatprep.subr.mxu0 0.0
      %1961 = vmatpush2.msra.mxu0 0.0
      %1962 = vmatprep.subr.mxu0 0.0
      %1963 = vmatpush2.msra.mxu0 0.0
      %1964 = vmatprep.subr.mxu0 0.0
      %1965 = vmatpush2.msra.mxu0 0.0
      %1966 = vmatprep.subr.mxu0 0.0
      %1967 = vmatpush2.msra.mxu0 0.0
      %1968 = vmatprep.subr.mxu0 0.0
      %1969 = vmatpush2.msra.mxu0 0.0
      %1970 = vmatprep.subr.mxu0 0.0
      %1971 = vmatpush2.msra.mxu0 0.0
      %1972 = vmatprep.subr.mxu0 0.0
      %1973 = vmatpush2.msra.mxu0 0.0
      %1974 = vmatprep.subr.mxu0 0.0
      %1975 = vmatpush2.msra.mxu0 0.0
      %1976 = vmatprep.subr.mxu0 0.0
      %1977 = vmatpush2.msra.mxu0 0.0
      %1978 = vmatprep.subr.mxu0 0.0
      %1979 = vmatpush2.msra.mxu0 0.0
      %1980 = vmatprep.subr.mxu0 0.0
      %1981 = vmatpush2.msra.mxu0 0.0
      %1982 = vmatprep.subr.mxu0 0.0
      %1983 = vmatpush2.msra.mxu0 0.0
      %1984 = vmatprep.subr.mxu0 0.0
      %1985 = vmatpush2.msra.mxu0 0.0
      %1986 = vmatprep.subr.mxu0 0.0
      %1987 = vmatpush2.msra.mxu0 0.0
      %1988 = vmatprep.subr.mxu0 0.0
      %1989 = vmatpush2.msra.mxu0 0.0
      %1990 = vmatprep.mubr.f32.mxu0 0.0
      %1991 = vmatmul.mubr.f32.gmra.mxu0 %v1634
      %v1992 = vpop.f32.mrf.mxu0
      %v1993 = vadd.f32 0.0, %v1992
      %v1994 = vpop.f32.mrf.mxu0
      %1995 = vdwg.mxu0
      %s1996 = scalar_lea.vmem %s2, 16
      %v1997 = vld [vmem:[%s1996] sm:$0xff]
      %v1999 = vsel %vm1779, %v1997, 0
      %2001 = vmatprep.subr.mxu0 0.0
      %2002 = vmatpush1.msra.mxu0 0.0
      %2003 = vmatprep.subr.mxu0 0.0
      %2004 = vmatpush1.msra.mxu0 0.0
      %2005 = vmatprep.subr.mxu0 0.0
      %2006 = vmatpush1.msra.mxu0 0.0
      %2007 = vmatprep.subr.mxu0 0.0
      %2008 = vmatpush1.msra.mxu0 0.0
      %2009 = vmatprep.subr.mxu0 0.0
      %2010 = vmatpush1.msra.mxu0 0.0
      %2011 = vmatprep.subr.mxu0 0.0
      %2012 = vmatpush1.msra.mxu0 0.0
      %2013 = vmatprep.subr.mxu0 0.0
      %2014 = vmatpush1.msra.mxu0 0.0
      %2015 = vmatprep.subr.mxu0 0.0
      %2016 = vmatpush1.msra.mxu0 0.0
      %2017 = vmatprep.subr.mxu0 0.0
      %2018 = vmatpush1.msra.mxu0 0.0
      %2019 = vmatprep.subr.mxu0 0.0
      %2020 = vmatpush1.msra.mxu0 0.0
      %2021 = vmatprep.subr.mxu0 0.0
      %2022 = vmatpush1.msra.mxu0 0.0
      %2023 = vmatprep.subr.mxu0 0.0
      %2024 = vmatpush1.msra.mxu0 0.0
      %2025 = vmatprep.subr.mxu0 0.0
      %2026 = vmatpush1.msra.mxu0 0.0
      %2027 = vmatprep.subr.mxu0 0.0
      %2028 = vmatpush1.msra.mxu0 0.0
      %2029 = vmatprep.subr.mxu0 0.0
      %2030 = vmatpush1.msra.mxu0 0.0
      %2031 = vmatprep.subr.mxu0 0.0
      %2032 = vmatpush1.msra.mxu0 %v1993
      %2033 = vmatprep.subr.mxu0 0.0
      %2034 = vmatpush2.msra.mxu0 0.0
      %2035 = vmatprep.subr.mxu0 0.0
      %2036 = vmatpush2.msra.mxu0 0.0
      %2037 = vmatprep.subr.mxu0 0.0
      %2038 = vmatpush2.msra.mxu0 0.0
      %2039 = vmatprep.subr.mxu0 0.0
      %2040 = vmatpush2.msra.mxu0 0.0
      %2041 = vmatprep.subr.mxu0 0.0
      %2042 = vmatpush2.msra.mxu0 0.0
      %2043 = vmatprep.subr.mxu0 0.0
      %2044 = vmatpush2.msra.mxu0 0.0
      %2045 = vmatprep.subr.mxu0 0.0
      %2046 = vmatpush2.msra.mxu0 0.0
      %2047 = vmatprep.subr.mxu0 0.0
      %2048 = vmatpush2.msra.mxu0 0.0
      %2049 = vmatprep.subr.mxu0 0.0
      %2050 = vmatpush2.msra.mxu0 0.0
      %2051 = vmatprep.subr.mxu0 0.0
      %2052 = vmatpush2.msra.mxu0 0.0
      %2053 = vmatprep.subr.mxu0 0.0
      %2054 = vmatpush2.msra.mxu0 0.0
      %2055 = vmatprep.subr.mxu0 0.0
      %2056 = vmatpush2.msra.mxu0 0.0
      %2057 = vmatprep.subr.mxu0 0.0
      %2058 = vmatpush2.msra.mxu0 0.0
      %2059 = vmatprep.subr.mxu0 0.0
      %2060 = vmatpush2.msra.mxu0 0.0
      %2061 = vmatprep.subr.mxu0 0.0
      %2062 = vmatpush2.msra.mxu0 0.0
      %2063 = vmatprep.subr.mxu0 0.0
      %2064 = vmatpush2.msra.mxu0 0.0
      %2065 = vmatprep.mubr.f32.mxu0 0.0
      %2066 = vmatmul.mubr.f32.gmra.mxu0 %v1999
      %v2067 = vpop.f32.mrf.mxu0
      %v2068 = vadd.f32 0.0, %v2067
      %v2069 = vpop.f32.mrf.mxu0
      %2070 = vdwg.mxu0
      %v2071 = vadd.f32 %v1923, %v2068
      %2072 = vmatprep.subr.mxu0 0.0
      %2073 = vmatpush1.msra.mxu0 0.0
      %2074 = vmatprep.subr.mxu0 0.0
      %2075 = vmatpush1.msra.mxu0 0.0
      %2076 = vmatprep.subr.mxu0 0.0
      %2077 = vmatpush1.msra.mxu0 0.0
      %2078 = vmatprep.subr.mxu0 0.0
      %2079 = vmatpush1.msra.mxu0 0.0
      %2080 = vmatprep.subr.mxu0 0.0
      %2081 = vmatpush1.msra.mxu0 0.0
      %2082 = vmatprep.subr.mxu0 0.0
      %2083 = vmatpush1.msra.mxu0 0.0
      %2084 = vmatprep.subr.mxu0 0.0
      %2085 = vmatpush1.msra.mxu0 0.0
      %2086 = vmatprep.subr.mxu0 0.0
      %2087 = vmatpush1.msra.mxu0 0.0
      %2088 = vmatprep.subr.mxu0 0.0
      %2089 = vmatpush1.msra.mxu0 %v678
      %2090 = vmatprep.subr.mxu0 0.0
      %2091 = vmatpush1.msra.mxu0 %v677
      %2092 = vmatprep.subr.mxu0 0.0
      %2093 = vmatpush1.msra.mxu0 %v676
      %2094 = vmatprep.subr.mxu0 0.0
      %2095 = vmatpush1.msra.mxu0 %v675
      %2096 = vmatprep.subr.mxu0 0.0
      %2097 = vmatpush1.msra.mxu0 %v674
      %2098 = vmatprep.subr.mxu0 0.0
      %2099 = vmatpush1.msra.mxu0 %v673
      %2100 = vmatprep.subr.mxu0 0.0
      %2101 = vmatpush1.msra.mxu0 %v672
      %2102 = vmatprep.subr.mxu0 0.0
      %2103 = vmatpush1.msra.mxu0 %v671
      %2104 = vmatprep.subr.mxu0 0.0
      %2105 = vmatpush2.msra.mxu0 0.0
      %2106 = vmatprep.subr.mxu0 0.0
      %2107 = vmatpush2.msra.mxu0 0.0
      %2108 = vmatprep.subr.mxu0 0.0
      %2109 = vmatpush2.msra.mxu0 0.0
      %2110 = vmatprep.subr.mxu0 0.0
      %2111 = vmatpush2.msra.mxu0 0.0
      %2112 = vmatprep.subr.mxu0 0.0
      %2113 = vmatpush2.msra.mxu0 0.0
      %2114 = vmatprep.subr.mxu0 0.0
      %2115 = vmatpush2.msra.mxu0 0.0
      %2116 = vmatprep.subr.mxu0 0.0
      %2117 = vmatpush2.msra.mxu0 0.0
      %2118 = vmatprep.subr.mxu0 0.0
      %2119 = vmatpush2.msra.mxu0 0.0
      %2120 = vmatprep.subr.mxu0 0.0
      %2121 = vmatpush2.msra.mxu0 0.0
      %2122 = vmatprep.subr.mxu0 0.0
      %2123 = vmatpush2.msra.mxu0 0.0
      %2124 = vmatprep.subr.mxu0 0.0
      %2125 = vmatpush2.msra.mxu0 0.0
      %2126 = vmatprep.subr.mxu0 0.0
      %2127 = vmatpush2.msra.mxu0 0.0
      %2128 = vmatprep.subr.mxu0 0.0
      %2129 = vmatpush2.msra.mxu0 0.0
      %2130 = vmatprep.subr.mxu0 0.0
      %2131 = vmatpush2.msra.mxu0 0.0
      %2132 = vmatprep.subr.mxu0 0.0
      %2133 = vmatpush2.msra.mxu0 0.0
      %2134 = vmatprep.subr.mxu0 0.0
      %2135 = vmatpush2.msra.mxu0 0.0
      %2136 = vmatprep.mubr.f32.mxu0 0.0
      %2137 = vmatmul.mubr.f32.gmra.mxu0 %v1634
      %v2138 = vpop.f32.mrf.mxu0
      %v2139 = vadd.f32 0.0, %v2138
      %v2140 = vpop.f32.mrf.mxu0
      %2141 = vdwg.mxu0
      %s2142 = scalar_lea.vmem %s2, 24
      %v2143 = vld [vmem:[%s2142] sm:$0xff]
      %v2145 = vsel %vm1779, %v2143, 0
      %2147 = vmatprep.subr.mxu0 0.0
      %2148 = vmatpush1.msra.mxu0 0.0
      %2149 = vmatprep.subr.mxu0 0.0
      %2150 = vmatpush1.msra.mxu0 0.0
      %2151 = vmatprep.subr.mxu0 0.0
      %2152 = vmatpush1.msra.mxu0 0.0
      %2153 = vmatprep.subr.mxu0 0.0
      %2154 = vmatpush1.msra.mxu0 0.0
      %2155 = vmatprep.subr.mxu0 0.0
      %2156 = vmatpush1.msra.mxu0 0.0
      %2157 = vmatprep.subr.mxu0 0.0
      %2158 = vmatpush1.msra.mxu0 0.0
      %2159 = vmatprep.subr.mxu0 0.0
      %2160 = vmatpush1.msra.mxu0 0.0
      %2161 = vmatprep.subr.mxu0 0.0
      %2162 = vmatpush1.msra.mxu0 0.0
      %2163 = vmatprep.subr.mxu0 0.0
      %2164 = vmatpush1.msra.mxu0 0.0
      %2165 = vmatprep.subr.mxu0 0.0
      %2166 = vmatpush1.msra.mxu0 0.0
      %2167 = vmatprep.subr.mxu0 0.0
      %2168 = vmatpush1.msra.mxu0 0.0
      %2169 = vmatprep.subr.mxu0 0.0
      %2170 = vmatpush1.msra.mxu0 0.0
      %2171 = vmatprep.subr.mxu0 0.0
      %2172 = vmatpush1.msra.mxu0 0.0
      %2173 = vmatprep.subr.mxu0 0.0
      %2174 = vmatpush1.msra.mxu0 0.0
      %2175 = vmatprep.subr.mxu0 0.0
      %2176 = vmatpush1.msra.mxu0 0.0
      %2177 = vmatprep.subr.mxu0 0.0
      %2178 = vmatpush1.msra.mxu0 %v2139
      %2179 = vmatprep.subr.mxu0 0.0
      %2180 = vmatpush2.msra.mxu0 0.0
      %2181 = vmatprep.subr.mxu0 0.0
      %2182 = vmatpush2.msra.mxu0 0.0
      %2183 = vmatprep.subr.mxu0 0.0
      %2184 = vmatpush2.msra.mxu0 0.0
      %2185 = vmatprep.subr.mxu0 0.0
      %2186 = vmatpush2.msra.mxu0 0.0
      %2187 = vmatprep.subr.mxu0 0.0
      %2188 = vmatpush2.msra.mxu0 0.0
      %2189 = vmatprep.subr.mxu0 0.0
      %2190 = vmatpush2.msra.mxu0 0.0
      %2191 = vmatprep.subr.mxu0 0.0
      %2192 = vmatpush2.msra.mxu0 0.0
      %2193 = vmatprep.subr.mxu0 0.0
      %2194 = vmatpush2.msra.mxu0 0.0
      %2195 = vmatprep.subr.mxu0 0.0
      %2196 = vmatpush2.msra.mxu0 0.0
      %2197 = vmatprep.subr.mxu0 0.0
      %2198 = vmatpush2.msra.mxu0 0.0
      %2199 = vmatprep.subr.mxu0 0.0
      %2200 = vmatpush2.msra.mxu0 0.0
      %2201 = vmatprep.subr.mxu0 0.0
      %2202 = vmatpush2.msra.mxu0 0.0
      %2203 = vmatprep.subr.mxu0 0.0
      %2204 = vmatpush2.msra.mxu0 0.0
      %2205 = vmatprep.subr.mxu0 0.0
      %2206 = vmatpush2.msra.mxu0 0.0
      %2207 = vmatprep.subr.mxu0 0.0
      %2208 = vmatpush2.msra.mxu0 0.0
      %2209 = vmatprep.subr.mxu0 0.0
      %2210 = vmatpush2.msra.mxu0 0.0
      %2211 = vmatprep.mubr.f32.mxu0 0.0
      %2212 = vmatmul.mubr.f32.gmra.mxu0 %v2145
      %v2213 = vpop.f32.mrf.mxu0
      %v2214 = vadd.f32 0.0, %v2213
      %v2215 = vpop.f32.mrf.mxu0
      %2216 = vdwg.mxu0
      %v2217 = vadd.f32 %v2071, %v2214
      %2218 = vmatprep.subr.mxu0 0.0
      %2219 = vmatpush1.msra.mxu0 0.0
      %2220 = vmatprep.subr.mxu0 0.0
      %2221 = vmatpush1.msra.mxu0 0.0
      %2222 = vmatprep.subr.mxu0 0.0
      %2223 = vmatpush1.msra.mxu0 0.0
      %2224 = vmatprep.subr.mxu0 0.0
      %2225 = vmatpush1.msra.mxu0 0.0
      %2226 = vmatprep.subr.mxu0 0.0
      %2227 = vmatpush1.msra.mxu0 0.0
      %2228 = vmatprep.subr.mxu0 0.0
      %2229 = vmatpush1.msra.mxu0 0.0
      %2230 = vmatprep.subr.mxu0 0.0
      %2231 = vmatpush1.msra.mxu0 0.0
      %2232 = vmatprep.subr.mxu0 0.0
      %2233 = vmatpush1.msra.mxu0 0.0
      %2234 = vmatprep.subr.mxu0 0.0
      %2235 = vmatpush1.msra.mxu0 %v836
      %2236 = vmatprep.subr.mxu0 0.0
      %2237 = vmatpush1.msra.mxu0 %v835
      %2238 = vmatprep.subr.mxu0 0.0
      %2239 = vmatpush1.msra.mxu0 %v834
      %2240 = vmatprep.subr.mxu0 0.0
      %2241 = vmatpush1.msra.mxu0 %v833
      %2242 = vmatprep.subr.mxu0 0.0
      %2243 = vmatpush1.msra.mxu0 %v832
      %2244 = vmatprep.subr.mxu0 0.0
      %2245 = vmatpush1.msra.mxu0 %v831
      %2246 = vmatprep.subr.mxu0 0.0
      %2247 = vmatpush1.msra.mxu0 %v830
      %2248 = vmatprep.subr.mxu0 0.0
      %2249 = vmatpush1.msra.mxu0 %v829
      %2250 = vmatprep.subr.mxu0 0.0
      %2251 = vmatpush2.msra.mxu0 0.0
      %2252 = vmatprep.subr.mxu0 0.0
      %2253 = vmatpush2.msra.mxu0 0.0
      %2254 = vmatprep.subr.mxu0 0.0
      %2255 = vmatpush2.msra.mxu0 0.0
      %2256 = vmatprep.subr.mxu0 0.0
      %2257 = vmatpush2.msra.mxu0 0.0
      %2258 = vmatprep.subr.mxu0 0.0
      %2259 = vmatpush2.msra.mxu0 0.0
      %2260 = vmatprep.subr.mxu0 0.0
      %2261 = vmatpush2.msra.mxu0 0.0
      %2262 = vmatprep.subr.mxu0 0.0
      %2263 = vmatpush2.msra.mxu0 0.0
      %2264 = vmatprep.subr.mxu0 0.0
      %2265 = vmatpush2.msra.mxu0 0.0
      %2266 = vmatprep.subr.mxu0 0.0
      %2267 = vmatpush2.msra.mxu0 0.0
      %2268 = vmatprep.subr.mxu0 0.0
      %2269 = vmatpush2.msra.mxu0 0.0
      %2270 = vmatprep.subr.mxu0 0.0
      %2271 = vmatpush2.msra.mxu0 0.0
      %2272 = vmatprep.subr.mxu0 0.0
      %2273 = vmatpush2.msra.mxu0 0.0
      %2274 = vmatprep.subr.mxu0 0.0
      %2275 = vmatpush2.msra.mxu0 0.0
      %2276 = vmatprep.subr.mxu0 0.0
      %2277 = vmatpush2.msra.mxu0 0.0
      %2278 = vmatprep.subr.mxu0 0.0
      %2279 = vmatpush2.msra.mxu0 0.0
      %2280 = vmatprep.subr.mxu0 0.0
      %2281 = vmatpush2.msra.mxu0 0.0
      %2282 = vmatprep.mubr.f32.mxu0 0.0
      %2283 = vmatmul.mubr.f32.gmra.mxu0 %v1634
      %v2284 = vpop.f32.mrf.mxu0
      %v2285 = vadd.f32 0.0, %v2284
      %v2286 = vpop.f32.mrf.mxu0
      %2287 = vdwg.mxu0
      %s2288 = scalar_lea.vmem %s2, 32
      %v2289 = vld [vmem:[%s2288] sm:$0xff]
      %v2291 = vsel %vm1779, %v2289, 0
      %2293 = vmatprep.subr.mxu0 0.0
      %2294 = vmatpush1.msra.mxu0 0.0
      %2295 = vmatprep.subr.mxu0 0.0
      %2296 = vmatpush1.msra.mxu0 0.0
      %2297 = vmatprep.subr.mxu0 0.0
      %2298 = vmatpush1.msra.mxu0 0.0
      %2299 = vmatprep.subr.mxu0 0.0
      %2300 = vmatpush1.msra.mxu0 0.0
      %2301 = vmatprep.subr.mxu0 0.0
      %2302 = vmatpush1.msra.mxu0 0.0
      %2303 = vmatprep.subr.mxu0 0.0
      %2304 = vmatpush1.msra.mxu0 0.0
      %2305 = vmatprep.subr.mxu0 0.0
      %2306 = vmatpush1.msra.mxu0 0.0
      %2307 = vmatprep.subr.mxu0 0.0
      %2308 = vmatpush1.msra.mxu0 0.0
      %2309 = vmatprep.subr.mxu0 0.0
      %2310 = vmatpush1.msra.mxu0 0.0
      %2311 = vmatprep.subr.mxu0 0.0
      %2312 = vmatpush1.msra.mxu0 0.0
      %2313 = vmatprep.subr.mxu0 0.0
      %2314 = vmatpush1.msra.mxu0 0.0
      %2315 = vmatprep.subr.mxu0 0.0
      %2316 = vmatpush1.msra.mxu0 0.0
      %2317 = vmatprep.subr.mxu0 0.0
      %2318 = vmatpush1.msra.mxu0 0.0
      %2319 = vmatprep.subr.mxu0 0.0
      %2320 = vmatpush1.msra.mxu0 0.0
      %2321 = vmatprep.subr.mxu0 0.0
      %2322 = vmatpush1.msra.mxu0 0.0
      %2323 = vmatprep.subr.mxu0 0.0
      %2324 = vmatpush1.msra.mxu0 %v2285
      %2325 = vmatprep.subr.mxu0 0.0
      %2326 = vmatpush2.msra.mxu0 0.0
      %2327 = vmatprep.subr.mxu0 0.0
      %2328 = vmatpush2.msra.mxu0 0.0
      %2329 = vmatprep.subr.mxu0 0.0
      %2330 = vmatpush2.msra.mxu0 0.0
      %2331 = vmatprep.subr.mxu0 0.0
      %2332 = vmatpush2.msra.mxu0 0.0
      %2333 = vmatprep.subr.mxu0 0.0
      %2334 = vmatpush2.msra.mxu0 0.0
      %2335 = vmatprep.subr.mxu0 0.0
      %2336 = vmatpush2.msra.mxu0 0.0
      %2337 = vmatprep.subr.mxu0 0.0
      %2338 = vmatpush2.msra.mxu0 0.0
      %2339 = vmatprep.subr.mxu0 0.0
      %2340 = vmatpush2.msra.mxu0 0.0
      %2341 = vmatprep.subr.mxu0 0.0
      %2342 = vmatpush2.msra.mxu0 0.0
      %2343 = vmatprep.subr.mxu0 0.0
      %2344 = vmatpush2.msra.mxu0 0.0
      %2345 = vmatprep.subr.mxu0 0.0
      %2346 = vmatpush2.msra.mxu0 0.0
      %2347 = vmatprep.subr.mxu0 0.0
      %2348 = vmatpush2.msra.mxu0 0.0
      %2349 = vmatprep.subr.mxu0 0.0
      %2350 = vmatpush2.msra.mxu0 0.0
      %2351 = vmatprep.subr.mxu0 0.0
      %2352 = vmatpush2.msra.mxu0 0.0
      %2353 = vmatprep.subr.mxu0 0.0
      %2354 = vmatpush2.msra.mxu0 0.0
      %2355 = vmatprep.subr.mxu0 0.0
      %2356 = vmatpush2.msra.mxu0 0.0
      %2357 = vmatprep.mubr.f32.mxu0 0.0
      %2358 = vmatmul.mubr.f32.gmra.mxu0 %v2291
      %v2359 = vpop.f32.mrf.mxu0
      %v2360 = vadd.f32 0.0, %v2359
      %v2361 = vpop.f32.mrf.mxu0
      %2362 = vdwg.mxu0
      %v2363 = vadd.f32 %v2217, %v2360
      %2364 = vmatprep.subr.mxu0 0.0
      %2365 = vmatpush1.msra.mxu0 0.0
      %2366 = vmatprep.subr.mxu0 0.0
      %2367 = vmatpush1.msra.mxu0 0.0
      %2368 = vmatprep.subr.mxu0 0.0
      %2369 = vmatpush1.msra.mxu0 0.0
      %2370 = vmatprep.subr.mxu0 0.0
      %2371 = vmatpush1.msra.mxu0 0.0
      %2372 = vmatprep.subr.mxu0 0.0
      %2373 = vmatpush1.msra.mxu0 0.0
      %2374 = vmatprep.subr.mxu0 0.0
      %2375 = vmatpush1.msra.mxu0 0.0
      %2376 = vmatprep.subr.mxu0 0.0
      %2377 = vmatpush1.msra.mxu0 0.0
      %2378 = vmatprep.subr.mxu0 0.0
      %2379 = vmatpush1.msra.mxu0 0.0
      %2380 = vmatprep.subr.mxu0 0.0
      %2381 = vmatpush1.msra.mxu0 %v994
      %2382 = vmatprep.subr.mxu0 0.0
      %2383 = vmatpush1.msra.mxu0 %v993
      %2384 = vmatprep.subr.mxu0 0.0
      %2385 = vmatpush1.msra.mxu0 %v992
      %2386 = vmatprep.subr.mxu0 0.0
      %2387 = vmatpush1.msra.mxu0 %v991
      %2388 = vmatprep.subr.mxu0 0.0
      %2389 = vmatpush1.msra.mxu0 %v990
      %2390 = vmatprep.subr.mxu0 0.0
      %2391 = vmatpush1.msra.mxu0 %v989
      %2392 = vmatprep.subr.mxu0 0.0
      %2393 = vmatpush1.msra.mxu0 %v988
      %2394 = vmatprep.subr.mxu0 0.0
      %2395 = vmatpush1.msra.mxu0 %v987
      %2396 = vmatprep.subr.mxu0 0.0
      %2397 = vmatpush2.msra.mxu0 0.0
      %2398 = vmatprep.subr.mxu0 0.0
      %2399 = vmatpush2.msra.mxu0 0.0
      %2400 = vmatprep.subr.mxu0 0.0
      %2401 = vmatpush2.msra.mxu0 0.0
      %2402 = vmatprep.subr.mxu0 0.0
      %2403 = vmatpush2.msra.mxu0 0.0
      %2404 = vmatprep.subr.mxu0 0.0
      %2405 = vmatpush2.msra.mxu0 0.0
      %2406 = vmatprep.subr.mxu0 0.0
      %2407 = vmatpush2.msra.mxu0 0.0
      %2408 = vmatprep.subr.mxu0 0.0
      %2409 = vmatpush2.msra.mxu0 0.0
      %2410 = vmatprep.subr.mxu0 0.0
      %2411 = vmatpush2.msra.mxu0 0.0
      %2412 = vmatprep.subr.mxu0 0.0
      %2413 = vmatpush2.msra.mxu0 0.0
      %2414 = vmatprep.subr.mxu0 0.0
      %2415 = vmatpush2.msra.mxu0 0.0
      %2416 = vmatprep.subr.mxu0 0.0
      %2417 = vmatpush2.msra.mxu0 0.0
      %2418 = vmatprep.subr.mxu0 0.0
      %2419 = vmatpush2.msra.mxu0 0.0
      %2420 = vmatprep.subr.mxu0 0.0
      %2421 = vmatpush2.msra.mxu0 0.0
      %2422 = vmatprep.subr.mxu0 0.0
      %2423 = vmatpush2.msra.mxu0 0.0
      %2424 = vmatprep.subr.mxu0 0.0
      %2425 = vmatpush2.msra.mxu0 0.0
      %2426 = vmatprep.subr.mxu0 0.0
      %2427 = vmatpush2.msra.mxu0 0.0
      %2428 = vmatprep.mubr.f32.mxu0 0.0
      %2429 = vmatmul.mubr.f32.gmra.mxu0 %v1634
      %v2430 = vpop.f32.mrf.mxu0
      %v2431 = vadd.f32 0.0, %v2430
      %v2432 = vpop.f32.mrf.mxu0
      %2433 = vdwg.mxu0
      %s2434 = scalar_lea.vmem %s2, 40
      %v2435 = vld [vmem:[%s2434] sm:$0xff]
      %v2437 = vsel %vm1779, %v2435, 0
      %2439 = vmatprep.subr.mxu0 0.0
      %2440 = vmatpush1.msra.mxu0 0.0
      %2441 = vmatprep.subr.mxu0 0.0
      %2442 = vmatpush1.msra.mxu0 0.0
      %2443 = vmatprep.subr.mxu0 0.0
      %2444 = vmatpush1.msra.mxu0 0.0
      %2445 = vmatprep.subr.mxu0 0.0
      %2446 = vmatpush1.msra.mxu0 0.0
      %2447 = vmatprep.subr.mxu0 0.0
      %2448 = vmatpush1.msra.mxu0 0.0
      %2449 = vmatprep.subr.mxu0 0.0
      %2450 = vmatpush1.msra.mxu0 0.0
      %2451 = vmatprep.subr.mxu0 0.0
      %2452 = vmatpush1.msra.mxu0 0.0
      %2453 = vmatprep.subr.mxu0 0.0
      %2454 = vmatpush1.msra.mxu0 0.0
      %2455 = vmatprep.subr.mxu0 0.0
      %2456 = vmatpush1.msra.mxu0 0.0
      %2457 = vmatprep.subr.mxu0 0.0
      %2458 = vmatpush1.msra.mxu0 0.0
      %2459 = vmatprep.subr.mxu0 0.0
      %2460 = vmatpush1.msra.mxu0 0.0
      %2461 = vmatprep.subr.mxu0 0.0
      %2462 = vmatpush1.msra.mxu0 0.0
      %2463 = vmatprep.subr.mxu0 0.0
      %2464 = vmatpush1.msra.mxu0 0.0
      %2465 = vmatprep.subr.mxu0 0.0
      %2466 = vmatpush1.msra.mxu0 0.0
      %2467 = vmatprep.subr.mxu0 0.0
      %2468 = vmatpush1.msra.mxu0 0.0
      %2469 = vmatprep.subr.mxu0 0.0
      %2470 = vmatpush1.msra.mxu0 %v2431
      %2471 = vmatprep.subr.mxu0 0.0
      %2472 = vmatpush2.msra.mxu0 0.0
      %2473 = vmatprep.subr.mxu0 0.0
      %2474 = vmatpush2.msra.mxu0 0.0
      %2475 = vmatprep.subr.mxu0 0.0
      %2476 = vmatpush2.msra.mxu0 0.0
      %2477 = vmatprep.subr.mxu0 0.0
      %2478 = vmatpush2.msra.mxu0 0.0
      %2479 = vmatprep.subr.mxu0 0.0
      %2480 = vmatpush2.msra.mxu0 0.0
      %2481 = vmatprep.subr.mxu0 0.0
      %2482 = vmatpush2.msra.mxu0 0.0
      %2483 = vmatprep.subr.mxu0 0.0
      %2484 = vmatpush2.msra.mxu0 0.0
      %2485 = vmatprep.subr.mxu0 0.0
      %2486 = vmatpush2.msra.mxu0 0.0
      %2487 = vmatprep.subr.mxu0 0.0
      %2488 = vmatpush2.msra.mxu0 0.0
      %2489 = vmatprep.subr.mxu0 0.0
      %2490 = vmatpush2.msra.mxu0 0.0
      %2491 = vmatprep.subr.mxu0 0.0
      %2492 = vmatpush2.msra.mxu0 0.0
      %2493 = vmatprep.subr.mxu0 0.0
      %2494 = vmatpush2.msra.mxu0 0.0
      %2495 = vmatprep.subr.mxu0 0.0
      %2496 = vmatpush2.msra.mxu0 0.0
      %2497 = vmatprep.subr.mxu0 0.0
      %2498 = vmatpush2.msra.mxu0 0.0
      %2499 = vmatprep.subr.mxu0 0.0
      %2500 = vmatpush2.msra.mxu0 0.0
      %2501 = vmatprep.subr.mxu0 0.0
      %2502 = vmatpush2.msra.mxu0 0.0
      %2503 = vmatprep.mubr.f32.mxu0 0.0
      %2504 = vmatmul.mubr.f32.gmra.mxu0 %v2437
      %v2505 = vpop.f32.mrf.mxu0
      %v2506 = vadd.f32 0.0, %v2505
      %v2507 = vpop.f32.mrf.mxu0
      %2508 = vdwg.mxu0
      %v2509 = vadd.f32 %v2363, %v2506
      %2510 = vmatprep.subr.mxu0 0.0
      %2511 = vmatpush1.msra.mxu0 0.0
      %2512 = vmatprep.subr.mxu0 0.0
      %2513 = vmatpush1.msra.mxu0 0.0
      %2514 = vmatprep.subr.mxu0 0.0
      %2515 = vmatpush1.msra.mxu0 0.0
      %2516 = vmatprep.subr.mxu0 0.0
      %2517 = vmatpush1.msra.mxu0 0.0
      %2518 = vmatprep.subr.mxu0 0.0
      %2519 = vmatpush1.msra.mxu0 0.0
      %2520 = vmatprep.subr.mxu0 0.0
      %2521 = vmatpush1.msra.mxu0 0.0
      %2522 = vmatprep.subr.mxu0 0.0
      %2523 = vmatpush1.msra.mxu0 0.0
      %2524 = vmatprep.subr.mxu0 0.0
      %2525 = vmatpush1.msra.mxu0 0.0
      %2526 = vmatprep.subr.mxu0 0.0
      %2527 = vmatpush1.msra.mxu0 %v1152
      %2528 = vmatprep.subr.mxu0 0.0
      %2529 = vmatpush1.msra.mxu0 %v1151
      %2530 = vmatprep.subr.mxu0 0.0
      %2531 = vmatpush1.msra.mxu0 %v1150
      %2532 = vmatprep.subr.mxu0 0.0
      %2533 = vmatpush1.msra.mxu0 %v1149
      %2534 = vmatprep.subr.mxu0 0.0
      %2535 = vmatpush1.msra.mxu0 %v1148
      %2536 = vmatprep.subr.mxu0 0.0
      %2537 = vmatpush1.msra.mxu0 %v1147
      %2538 = vmatprep.subr.mxu0 0.0
      %2539 = vmatpush1.msra.mxu0 %v1146
      %2540 = vmatprep.subr.mxu0 0.0
      %2541 = vmatpush1.msra.mxu0 %v1145
      %2542 = vmatprep.subr.mxu0 0.0
      %2543 = vmatpush2.msra.mxu0 0.0
      %2544 = vmatprep.subr.mxu0 0.0
      %2545 = vmatpush2.msra.mxu0 0.0
      %2546 = vmatprep.subr.mxu0 0.0
      %2547 = vmatpush2.msra.mxu0 0.0
      %2548 = vmatprep.subr.mxu0 0.0
      %2549 = vmatpush2.msra.mxu0 0.0
      %2550 = vmatprep.subr.mxu0 0.0
      %2551 = vmatpush2.msra.mxu0 0.0
      %2552 = vmatprep.subr.mxu0 0.0
      %2553 = vmatpush2.msra.mxu0 0.0
      %2554 = vmatprep.subr.mxu0 0.0
      %2555 = vmatpush2.msra.mxu0 0.0
      %2556 = vmatprep.subr.mxu0 0.0
      %2557 = vmatpush2.msra.mxu0 0.0
      %2558 = vmatprep.subr.mxu0 0.0
      %2559 = vmatpush2.msra.mxu0 0.0
      %2560 = vmatprep.subr.mxu0 0.0
      %2561 = vmatpush2.msra.mxu0 0.0
      %2562 = vmatprep.subr.mxu0 0.0
      %2563 = vmatpush2.msra.mxu0 0.0
      %2564 = vmatprep.subr.mxu0 0.0
      %2565 = vmatpush2.msra.mxu0 0.0
      %2566 = vmatprep.subr.mxu0 0.0
      %2567 = vmatpush2.msra.mxu0 0.0
      %2568 = vmatprep.subr.mxu0 0.0
      %2569 = vmatpush2.msra.mxu0 0.0
      %2570 = vmatprep.subr.mxu0 0.0
      %2571 = vmatpush2.msra.mxu0 0.0
      %2572 = vmatprep.subr.mxu0 0.0
      %2573 = vmatpush2.msra.mxu0 0.0
      %2574 = vmatprep.mubr.f32.mxu0 0.0
      %2575 = vmatmul.mubr.f32.gmra.mxu0 %v1634
      %v2576 = vpop.f32.mrf.mxu0
      %v2577 = vadd.f32 0.0, %v2576
      %v2578 = vpop.f32.mrf.mxu0
      %2579 = vdwg.mxu0
      %s2580 = scalar_lea.vmem %s2, 48
      %v2581 = vld [vmem:[%s2580] sm:$0xff]
      %v2583 = vsel %vm1779, %v2581, 0
      %2585 = vmatprep.subr.mxu0 0.0
      %2586 = vmatpush1.msra.mxu0 0.0
      %2587 = vmatprep.subr.mxu0 0.0
      %2588 = vmatpush1.msra.mxu0 0.0
      %2589 = vmatprep.subr.mxu0 0.0
      %2590 = vmatpush1.msra.mxu0 0.0
      %2591 = vmatprep.subr.mxu0 0.0
      %2592 = vmatpush1.msra.mxu0 0.0
      %2593 = vmatprep.subr.mxu0 0.0
      %2594 = vmatpush1.msra.mxu0 0.0
      %2595 = vmatprep.subr.mxu0 0.0
      %2596 = vmatpush1.msra.mxu0 0.0
      %2597 = vmatprep.subr.mxu0 0.0
      %2598 = vmatpush1.msra.mxu0 0.0
      %2599 = vmatprep.subr.mxu0 0.0
      %2600 = vmatpush1.msra.mxu0 0.0
      %2601 = vmatprep.subr.mxu0 0.0
      %2602 = vmatpush1.msra.mxu0 0.0
      %2603 = vmatprep.subr.mxu0 0.0
      %2604 = vmatpush1.msra.mxu0 0.0
      %2605 = vmatprep.subr.mxu0 0.0
      %2606 = vmatpush1.msra.mxu0 0.0
      %2607 = vmatprep.subr.mxu0 0.0
      %2608 = vmatpush1.msra.mxu0 0.0
      %2609 = vmatprep.subr.mxu0 0.0
      %2610 = vmatpush1.msra.mxu0 0.0
      %2611 = vmatprep.subr.mxu0 0.0
      %2612 = vmatpush1.msra.mxu0 0.0
      %2613 = vmatprep.subr.mxu0 0.0
      %2614 = vmatpush1.msra.mxu0 0.0
      %2615 = vmatprep.subr.mxu0 0.0
      %2616 = vmatpush1.msra.mxu0 %v2577
      %2617 = vmatprep.subr.mxu0 0.0
      %2618 = vmatpush2.msra.mxu0 0.0
      %2619 = vmatprep.subr.mxu0 0.0
      %2620 = vmatpush2.msra.mxu0 0.0
      %2621 = vmatprep.subr.mxu0 0.0
      %2622 = vmatpush2.msra.mxu0 0.0
      %2623 = vmatprep.subr.mxu0 0.0
      %2624 = vmatpush2.msra.mxu0 0.0
      %2625 = vmatprep.subr.mxu0 0.0
      %2626 = vmatpush2.msra.mxu0 0.0
      %2627 = vmatprep.subr.mxu0 0.0
      %2628 = vmatpush2.msra.mxu0 0.0
      %2629 = vmatprep.subr.mxu0 0.0
      %2630 = vmatpush2.msra.mxu0 0.0
      %2631 = vmatprep.subr.mxu0 0.0
      %2632 = vmatpush2.msra.mxu0 0.0
      %2633 = vmatprep.subr.mxu0 0.0
      %2634 = vmatpush2.msra.mxu0 0.0
      %2635 = vmatprep.subr.mxu0 0.0
      %2636 = vmatpush2.msra.mxu0 0.0
      %2637 = vmatprep.subr.mxu0 0.0
      %2638 = vmatpush2.msra.mxu0 0.0
      %2639 = vmatprep.subr.mxu0 0.0
      %2640 = vmatpush2.msra.mxu0 0.0
      %2641 = vmatprep.subr.mxu0 0.0
      %2642 = vmatpush2.msra.mxu0 0.0
      %2643 = vmatprep.subr.mxu0 0.0
      %2644 = vmatpush2.msra.mxu0 0.0
      %2645 = vmatprep.subr.mxu0 0.0
      %2646 = vmatpush2.msra.mxu0 0.0
      %2647 = vmatprep.subr.mxu0 0.0
      %2648 = vmatpush2.msra.mxu0 0.0
      %2649 = vmatprep.mubr.f32.mxu0 0.0
      %2650 = vmatmul.mubr.f32.gmra.mxu0 %v2583
      %v2651 = vpop.f32.mrf.mxu0
      %v2652 = vadd.f32 0.0, %v2651
      %v2653 = vpop.f32.mrf.mxu0
      %2654 = vdwg.mxu0
      %v2655 = vadd.f32 %v2509, %v2652
      %2656 = vmatprep.subr.mxu0 0.0
      %2657 = vmatpush1.msra.mxu0 0.0
      %2658 = vmatprep.subr.mxu0 0.0
      %2659 = vmatpush1.msra.mxu0 0.0
      %2660 = vmatprep.subr.mxu0 0.0
      %2661 = vmatpush1.msra.mxu0 0.0
      %2662 = vmatprep.subr.mxu0 0.0
      %2663 = vmatpush1.msra.mxu0 0.0
      %2664 = vmatprep.subr.mxu0 0.0
      %2665 = vmatpush1.msra.mxu0 0.0
      %2666 = vmatprep.subr.mxu0 0.0
      %2667 = vmatpush1.msra.mxu0 0.0
      %2668 = vmatprep.subr.mxu0 0.0
      %2669 = vmatpush1.msra.mxu0 0.0
      %2670 = vmatprep.subr.mxu0 0.0
      %2671 = vmatpush1.msra.mxu0 0.0
      %2672 = vmatprep.subr.mxu0 0.0
      %2673 = vmatpush1.msra.mxu0 %v1310
      %2674 = vmatprep.subr.mxu0 0.0
      %2675 = vmatpush1.msra.mxu0 %v1309
      %2676 = vmatprep.subr.mxu0 0.0
      %2677 = vmatpush1.msra.mxu0 %v1308
      %2678 = vmatprep.subr.mxu0 0.0
      %2679 = vmatpush1.msra.mxu0 %v1307
      %2680 = vmatprep.subr.mxu0 0.0
      %2681 = vmatpush1.msra.mxu0 %v1306
      %2682 = vmatprep.subr.mxu0 0.0
      %2683 = vmatpush1.msra.mxu0 %v1305
      %2684 = vmatprep.subr.mxu0 0.0
      %2685 = vmatpush1.msra.mxu0 %v1304
      %2686 = vmatprep.subr.mxu0 0.0
      %2687 = vmatpush1.msra.mxu0 %v1303
      %2688 = vmatprep.subr.mxu0 0.0
      %2689 = vmatpush2.msra.mxu0 0.0
      %2690 = vmatprep.subr.mxu0 0.0
      %2691 = vmatpush2.msra.mxu0 0.0
      %2692 = vmatprep.subr.mxu0 0.0
      %2693 = vmatpush2.msra.mxu0 0.0
      %2694 = vmatprep.subr.mxu0 0.0
      %2695 = vmatpush2.msra.mxu0 0.0
      %2696 = vmatprep.subr.mxu0 0.0
      %2697 = vmatpush2.msra.mxu0 0.0
      %2698 = vmatprep.subr.mxu0 0.0
      %2699 = vmatpush2.msra.mxu0 0.0
      %2700 = vmatprep.subr.mxu0 0.0
      %2701 = vmatpush2.msra.mxu0 0.0
      %2702 = vmatprep.subr.mxu0 0.0
      %2703 = vmatpush2.msra.mxu0 0.0
      %2704 = vmatprep.subr.mxu0 0.0
      %2705 = vmatpush2.msra.mxu0 0.0
      %2706 = vmatprep.subr.mxu0 0.0
      %2707 = vmatpush2.msra.mxu0 0.0
      %2708 = vmatprep.subr.mxu0 0.0
      %2709 = vmatpush2.msra.mxu0 0.0
      %2710 = vmatprep.subr.mxu0 0.0
      %2711 = vmatpush2.msra.mxu0 0.0
      %2712 = vmatprep.subr.mxu0 0.0
      %2713 = vmatpush2.msra.mxu0 0.0
      %2714 = vmatprep.subr.mxu0 0.0
      %2715 = vmatpush2.msra.mxu0 0.0
      %2716 = vmatprep.subr.mxu0 0.0
      %2717 = vmatpush2.msra.mxu0 0.0
      %2718 = vmatprep.subr.mxu0 0.0
      %2719 = vmatpush2.msra.mxu0 0.0
      %2720 = vmatprep.mubr.f32.mxu0 0.0
      %2721 = vmatmul.mubr.f32.gmra.mxu0 %v1634
      %v2722 = vpop.f32.mrf.mxu0
      %v2723 = vadd.f32 0.0, %v2722
      %v2724 = vpop.f32.mrf.mxu0
      %2725 = vdwg.mxu0
      %s2726 = scalar_lea.vmem %s2, 56
      %v2727 = vld [vmem:[%s2726] sm:$0xff]
      %v2729 = vsel %vm1779, %v2727, 0
      %2731 = vmatprep.subr.mxu0 0.0
      %2732 = vmatpush1.msra.mxu0 0.0
      %2733 = vmatprep.subr.mxu0 0.0
      %2734 = vmatpush1.msra.mxu0 0.0
      %2735 = vmatprep.subr.mxu0 0.0
      %2736 = vmatpush1.msra.mxu0 0.0
      %2737 = vmatprep.subr.mxu0 0.0
      %2738 = vmatpush1.msra.mxu0 0.0
      %2739 = vmatprep.subr.mxu0 0.0
      %2740 = vmatpush1.msra.mxu0 0.0
      %2741 = vmatprep.subr.mxu0 0.0
      %2742 = vmatpush1.msra.mxu0 0.0
      %2743 = vmatprep.subr.mxu0 0.0
      %2744 = vmatpush1.msra.mxu0 0.0
      %2745 = vmatprep.subr.mxu0 0.0
      %2746 = vmatpush1.msra.mxu0 0.0
      %2747 = vmatprep.subr.mxu0 0.0
      %2748 = vmatpush1.msra.mxu0 0.0
      %2749 = vmatprep.subr.mxu0 0.0
      %2750 = vmatpush1.msra.mxu0 0.0
      %2751 = vmatprep.subr.mxu0 0.0
      %2752 = vmatpush1.msra.mxu0 0.0
      %2753 = vmatprep.subr.mxu0 0.0
      %2754 = vmatpush1.msra.mxu0 0.0
      %2755 = vmatprep.subr.mxu0 0.0
      %2756 = vmatpush1.msra.mxu0 0.0
      %2757 = vmatprep.subr.mxu0 0.0
      %2758 = vmatpush1.msra.mxu0 0.0
      %2759 = vmatprep.subr.mxu0 0.0
      %2760 = vmatpush1.msra.mxu0 0.0
      %2761 = vmatprep.subr.mxu0 0.0
      %2762 = vmatpush1.msra.mxu0 %v2723
      %2763 = vmatprep.subr.mxu0 0.0
      %2764 = vmatpush2.msra.mxu0 0.0
      %2765 = vmatprep.subr.mxu0 0.0
      %2766 = vmatpush2.msra.mxu0 0.0
      %2767 = vmatprep.subr.mxu0 0.0
      %2768 = vmatpush2.msra.mxu0 0.0
      %2769 = vmatprep.subr.mxu0 0.0
      %2770 = vmatpush2.msra.mxu0 0.0
      %2771 = vmatprep.subr.mxu0 0.0
      %2772 = vmatpush2.msra.mxu0 0.0
      %2773 = vmatprep.subr.mxu0 0.0
      %2774 = vmatpush2.msra.mxu0 0.0
      %2775 = vmatprep.subr.mxu0 0.0
      %2776 = vmatpush2.msra.mxu0 0.0
      %2777 = vmatprep.subr.mxu0 0.0
      %2778 = vmatpush2.msra.mxu0 0.0
      %2779 = vmatprep.subr.mxu0 0.0
      %2780 = vmatpush2.msra.mxu0 0.0
      %2781 = vmatprep.subr.mxu0 0.0
      %2782 = vmatpush2.msra.mxu0 0.0
      %2783 = vmatprep.subr.mxu0 0.0
      %2784 = vmatpush2.msra.mxu0 0.0
      %2785 = vmatprep.subr.mxu0 0.0
      %2786 = vmatpush2.msra.mxu0 0.0
      %2787 = vmatprep.subr.mxu0 0.0
      %2788 = vmatpush2.msra.mxu0 0.0
      %2789 = vmatprep.subr.mxu0 0.0
      %2790 = vmatpush2.msra.mxu0 0.0
      %2791 = vmatprep.subr.mxu0 0.0
      %2792 = vmatpush2.msra.mxu0 0.0
      %2793 = vmatprep.subr.mxu0 0.0
      %2794 = vmatpush2.msra.mxu0 0.0
      %2795 = vmatprep.mubr.f32.mxu0 0.0
      %2796 = vmatmul.mubr.f32.gmra.mxu0 %v2729
      %v2797 = vpop.f32.mrf.mxu0
      %v2798 = vadd.f32 0.0, %v2797
      %v2799 = vpop.f32.mrf.mxu0
      %2800 = vdwg.mxu0
      %v2801 = vadd.f32 %v2655, %v2798
      %2802 = vmatprep.subr.mxu0 0.0
      %2803 = vmatpush1.msra.mxu0 0.0
      %2804 = vmatprep.subr.mxu0 0.0
      %2805 = vmatpush1.msra.mxu0 0.0
      %2806 = vmatprep.subr.mxu0 0.0
      %2807 = vmatpush1.msra.mxu0 0.0
      %2808 = vmatprep.subr.mxu0 0.0
      %2809 = vmatpush1.msra.mxu0 0.0
      %2810 = vmatprep.subr.mxu0 0.0
      %2811 = vmatpush1.msra.mxu0 0.0
      %2812 = vmatprep.subr.mxu0 0.0
      %2813 = vmatpush1.msra.mxu0 0.0
      %2814 = vmatprep.subr.mxu0 0.0
      %2815 = vmatpush1.msra.mxu0 0.0
      %2816 = vmatprep.subr.mxu0 0.0
      %2817 = vmatpush1.msra.mxu0 0.0
      %2818 = vmatprep.subr.mxu0 0.0
      %2819 = vmatpush1.msra.mxu0 %v1468
      %2820 = vmatprep.subr.mxu0 0.0
      %2821 = vmatpush1.msra.mxu0 %v1467
      %2822 = vmatprep.subr.mxu0 0.0
      %2823 = vmatpush1.msra.mxu0 %v1466
      %2824 = vmatprep.subr.mxu0 0.0
      %2825 = vmatpush1.msra.mxu0 %v1465
      %2826 = vmatprep.subr.mxu0 0.0
      %2827 = vmatpush1.msra.mxu0 %v1464
      %2828 = vmatprep.subr.mxu0 0.0
      %2829 = vmatpush1.msra.mxu0 %v1463
      %2830 = vmatprep.subr.mxu0 0.0
      %2831 = vmatpush1.msra.mxu0 %v1462
      %2832 = vmatprep.subr.mxu0 0.0
      %2833 = vmatpush1.msra.mxu0 %v1461
      %2834 = vmatprep.subr.mxu0 0.0
      %2835 = vmatpush2.msra.mxu0 0.0
      %2836 = vmatprep.subr.mxu0 0.0
      %2837 = vmatpush2.msra.mxu0 0.0
      %2838 = vmatprep.subr.mxu0 0.0
      %2839 = vmatpush2.msra.mxu0 0.0
      %2840 = vmatprep.subr.mxu0 0.0
      %2841 = vmatpush2.msra.mxu0 0.0
      %2842 = vmatprep.subr.mxu0 0.0
      %2843 = vmatpush2.msra.mxu0 0.0
      %2844 = vmatprep.subr.mxu0 0.0
      %2845 = vmatpush2.msra.mxu0 0.0
      %2846 = vmatprep.subr.mxu0 0.0
      %2847 = vmatpush2.msra.mxu0 0.0
      %2848 = vmatprep.subr.mxu0 0.0
      %2849 = vmatpush2.msra.mxu0 0.0
      %2850 = vmatprep.subr.mxu0 0.0
      %2851 = vmatpush2.msra.mxu0 0.0
      %2852 = vmatprep.subr.mxu0 0.0
      %2853 = vmatpush2.msra.mxu0 0.0
      %2854 = vmatprep.subr.mxu0 0.0
      %2855 = vmatpush2.msra.mxu0 0.0
      %2856 = vmatprep.subr.mxu0 0.0
      %2857 = vmatpush2.msra.mxu0 0.0
      %2858 = vmatprep.subr.mxu0 0.0
      %2859 = vmatpush2.msra.mxu0 0.0
      %2860 = vmatprep.subr.mxu0 0.0
      %2861 = vmatpush2.msra.mxu0 0.0
      %2862 = vmatprep.subr.mxu0 0.0
      %2863 = vmatpush2.msra.mxu0 0.0
      %2864 = vmatprep.subr.mxu0 0.0
      %2865 = vmatpush2.msra.mxu0 0.0
      %2866 = vmatprep.mubr.f32.mxu0 0.0
      %2867 = vmatmul.mubr.f32.gmra.mxu0 %v1634
      %v2868 = vpop.f32.mrf.mxu0
      %v2869 = vadd.f32 0.0, %v2868
      %v2870 = vpop.f32.mrf.mxu0
      %2871 = vdwg.mxu0
      %s2872 = scalar_lea.vmem %s2, 64
      %v2873 = vld [vmem:[%s2872] sm:$0xff]
      %v2875 = vsel %vm1779, %v2873, 0
      %2877 = vmatprep.subr.mxu0 0.0
      %2878 = vmatpush1.msra.mxu0 0.0
      %2879 = vmatprep.subr.mxu0 0.0
      %2880 = vmatpush1.msra.mxu0 0.0
      %2881 = vmatprep.subr.mxu0 0.0
      %2882 = vmatpush1.msra.mxu0 0.0
      %2883 = vmatprep.subr.mxu0 0.0
      %2884 = vmatpush1.msra.mxu0 0.0
      %2885 = vmatprep.subr.mxu0 0.0
      %2886 = vmatpush1.msra.mxu0 0.0
      %2887 = vmatprep.subr.mxu0 0.0
      %2888 = vmatpush1.msra.mxu0 0.0
      %2889 = vmatprep.subr.mxu0 0.0
      %2890 = vmatpush1.msra.mxu0 0.0
      %2891 = vmatprep.subr.mxu0 0.0
      %2892 = vmatpush1.msra.mxu0 0.0
      %2893 = vmatprep.subr.mxu0 0.0
      %2894 = vmatpush1.msra.mxu0 0.0
      %2895 = vmatprep.subr.mxu0 0.0
      %2896 = vmatpush1.msra.mxu0 0.0
      %2897 = vmatprep.subr.mxu0 0.0
      %2898 = vmatpush1.msra.mxu0 0.0
      %2899 = vmatprep.subr.mxu0 0.0
      %2900 = vmatpush1.msra.mxu0 0.0
      %2901 = vmatprep.subr.mxu0 0.0
      %2902 = vmatpush1.msra.mxu0 0.0
      %2903 = vmatprep.subr.mxu0 0.0
      %2904 = vmatpush1.msra.mxu0 0.0
      %2905 = vmatprep.subr.mxu0 0.0
      %2906 = vmatpush1.msra.mxu0 0.0
      %2907 = vmatprep.subr.mxu0 0.0
      %2908 = vmatpush1.msra.mxu0 %v2869
      %2909 = vmatprep.subr.mxu0 0.0
      %2910 = vmatpush2.msra.mxu0 0.0
      %2911 = vmatprep.subr.mxu0 0.0
      %2912 = vmatpush2.msra.mxu0 0.0
      %2913 = vmatprep.subr.mxu0 0.0
      %2914 = vmatpush2.msra.mxu0 0.0
      %2915 = vmatprep.subr.mxu0 0.0
      %2916 = vmatpush2.msra.mxu0 0.0
      %2917 = vmatprep.subr.mxu0 0.0
      %2918 = vmatpush2.msra.mxu0 0.0
      %2919 = vmatprep.subr.mxu0 0.0
      %2920 = vmatpush2.msra.mxu0 0.0
      %2921 = vmatprep.subr.mxu0 0.0
      %2922 = vmatpush2.msra.mxu0 0.0
      %2923 = vmatprep.subr.mxu0 0.0
      %2924 = vmatpush2.msra.mxu0 0.0
      %2925 = vmatprep.subr.mxu0 0.0
      %2926 = vmatpush2.msra.mxu0 0.0
      %2927 = vmatprep.subr.mxu0 0.0
      %2928 = vmatpush2.msra.mxu0 0.0
      %2929 = vmatprep.subr.mxu0 0.0
      %2930 = vmatpush2.msra.mxu0 0.0
      %2931 = vmatprep.subr.mxu0 0.0
      %2932 = vmatpush2.msra.mxu0 0.0
      %2933 = vmatprep.subr.mxu0 0.0
      %2934 = vmatpush2.msra.mxu0 0.0
      %2935 = vmatprep.subr.mxu0 0.0
      %2936 = vmatpush2.msra.mxu0 0.0
      %2937 = vmatprep.subr.mxu0 0.0
      %2938 = vmatpush2.msra.mxu0 0.0
      %2939 = vmatprep.subr.mxu0 0.0
      %2940 = vmatpush2.msra.mxu0 0.0
      %2941 = vmatprep.mubr.f32.mxu0 0.0
      %2942 = vmatmul.mubr.f32.gmra.mxu0 %v2875
      %v2943 = vpop.f32.mrf.mxu0
      %v2944 = vadd.f32 0.0, %v2943
      %v2945 = vpop.f32.mrf.mxu0
      %2946 = vdwg.mxu0
      %v2947 = vadd.f32 %v2801, %v2944
      %v2948 = vsel %vm202, %v2947, 0.0
      %2949 = vadd.xlane.f32.xlu0 %v2948
      %v2950 = vpop.xlane.xlu0 %2949
      %v2951 = vmul.f32 %v2950, %v1621
      %v2952 = vsub.f32 %v2947, %v2951
      %v2953 = vmul.f32 %v2952, %v2952
      %v2954 = vsel %vm202, %v2953, 0.0
      %2955 = vadd.xlane.f32.xlu0 %v2954
      %v2956 = vpop.xlane.xlu0 %2955
      %v2957 = vmul.f32 %v2956, %v1621
      %v2958 = vadd.f32 %v2957, 1e-05
      %v2959 = vrsqrt.pop %v2958
      %v2960 = vmul.f32 %v2952, %v2959
      %v2961 = vmax.f32 %v2960, 0.0
      %2962 = vst.msk [vmem:[%s192] sm:$0xff] %vm202, %v2961
      %p2963 = scmp.lt.s32.totalorder %s15, 1
      %s2964 = scalar_select %p2963, %s15, 1
      %s2965 = smul.addr %s2964, 8
      %s2966 = scalar_lea.vmem %s4, %s2965
      // Predicated region
      $region37: #{down_forward.1} parent=35 // pred_check
        %p2967 = pneg %p122
      $region38: #{down_forward.1} parent=35 // pred_check_branch
        %2969 = sbr.rel (%p2967) target = $region40
      $region39: #{down_forward.1} parent=35 // pred_region
        _
      $region40: #{down_forward.1} parent=35 // pred_fallthru
        _
    $region36: #{down_forward.1} parent=5 // pred_fallthru
      _
    %p2970 = scmp.le.s32.totalorder 2, %s10
    // Predicated region
    $region41: #{down_forward.1} parent=5 // pred_check
      %p2971 = pneg %p2970
    $region42: #{down_forward.1} parent=5 // pred_check_branch
      %2973 = sbr.rel (%p2971) target = $region44
    $region43: #{down_forward.1} parent=5 // pred_region
      %s2974 = ssub.s32 %s10, 2
      // Predicated region
      $region45: #{down_forward.1} parent=43 // pred_check
        %p2975 = pneg %p128
      $region46: #{down_forward.1} parent=43 // pred_check_branch
        %2977 = sbr.rel (%p2975) target = $region48
      $region47: #{down_forward.1} parent=43 // pred_region
        %p2978 = scmp.lt.s32.totalorder %s16, 1
        %s2979 = scalar_select %p2978, %s16, 1
        %s2980 = smul.addr %s2979, 8
        %s2981 = scalar_lea.vmem %s4, %s2980
      $region48: #{down_forward.1} parent=43 // pred_fallthru
        _
    $region44: #{down_forward.1} parent=5 // pred_fallthru
      _
  $region6: #{down_forward.1} parent=0 // loop_footer
    %s14 = sadd.s32 1, %s10
  $region7: #{down_forward.1} parent=0 // loop_footer_branch
    %9 = sbr.rel target = $region3
  $region8: #{down_forward.1} parent=0 // loop_exit
    _

</llo_original>
